<compile_context>
chip_gen: v5e
topology: v5e:2x2
jax: 0.10.0
libtpu: 0.0.40
codegen_flags: <defaults>
</compile_context>

<pallas_src>
import math
import functools

import numpy as np
import jax
import jax.numpy as jnp
from jax.experimental import pallas as pl
from jax.experimental.pallas import tpu as pltpu


def _pos_embed_kernel(mask_ref, l_ref, u_ref, d_ref, inv_ref, phase_ref,
                      out_ref, *, normalize, scale):
    """One batch element: mask (H, W) int8 -> out (2F, H*W) float32."""
    H, W = mask_ref.shape
    F_ = inv_ref.shape[0]

    # not_mask (mask: 1 = padded, 0 = valid)
    nm = 1.0 - mask_ref[...].astype(jnp.float32)                           # (H, W)

    # Cumulative sums as triangular matmuls on the MXU.  Inputs are 0/1 and
    # partial sums are small integers -> exact.
    y_embed = jnp.dot(l_ref[...], nm, preferred_element_type=jnp.float32)  # (H, W)
    x_embed = jnp.dot(nm, u_ref[...], preferred_element_type=jnp.float32)  # (H, W)

    if normalize:
        eps = 1e-6
        # One exact reciprocal per row/col, then broadcast multiplies.
        y_embed = y_embed * ((1.0 / (y_embed[H - 1:H, :] + eps)) * scale)
        x_embed = x_embed * ((1.0 / (x_embed[:, W - 1:W] + eps)) * scale)

    # Relayout (H, W) -> (1, H*W) in row-major order using exact data movement
    # only: replicate the W columns H times along lanes, select lane block h
    # for row h with the 0/1 mask D (d_ref[h, n] == 1 iff n // W == h), and
    # reduce over rows.
    d = d_ref[...]                                                         # (H, N)
    y_flat = jnp.sum(d * jnp.concatenate([y_embed] * H, axis=1),
                     axis=0, keepdims=True)                                # (1, N)
    x_flat = jnp.sum(d * jnp.concatenate([x_embed] * H, axis=1),
                     axis=0, keepdims=True)                                # (1, N)

    # args[c, n] = embed_flat[n] / dim_t[c]  (+ pi/2 on odd channels so that a
    # single sin() yields the interleaved sin/cos pattern; valid because
    # dim_t[2k] == dim_t[2k+1]).
    inv = inv_ref[...]                                                     # (F, 1)
    ph = phase_ref[...]                                                    # (F, 1)
    out_ref[0:F_, :] = jnp.sin(inv * y_flat + ph)                          # y half
    out_ref[F_:2 * F_, :] = jnp.sin(inv * x_flat + ph)                     # x half


def position_embedding_sine(mask, *, num_pos_feats=64, temperature=10000,
                            normalize=False, scale=None):
    """mask: (B, H, W) bool. Returns (B, 2*num_pos_feats, H, W) float32 (NCHW)."""
    if scale is not None and normalize is False:
        raise ValueError("normalize should be True if scale is passed")
    if scale is None:
        scale = 2 * math.pi
    if num_pos_feats % 2 != 0:
        raise ValueError("num_pos_feats must be even")

    B, H, W = mask.shape
    F_ = num_pos_feats
    C = 2 * F_
    N = H * W

    # ---- trace-time constants (hoisted out of the kernel body) ----
    L = np.tril(np.ones((H, H), np.float32))            # cumsum over H (rows)
    U = np.triu(np.ones((W, W), np.float32))            # cumsum over W (cols)
    n_idx = np.arange(N)
    D = (n_idx[None, :] // W == np.arange(H)[:, None]).astype(np.float32)   # (H, N)
    ch = np.arange(F_)
    dim_t = np.power(float(temperature),
                     2.0 * np.floor(ch / 2).astype(np.float64) / float(F_))
    inv_dim_t = (1.0 / dim_t).astype(np.float32).reshape(F_, 1)             # (F, 1)
    phase = ((ch % 2).astype(np.float64) * (np.pi / 2)).astype(
        np.float32).reshape(F_, 1)                                          # (F, 1)

    mask_i8 = mask.astype(jnp.int8)

    kernel = functools.partial(_pos_embed_kernel,
                               normalize=normalize, scale=float(scale))

    cost = pl.CostEstimate(
        flops=int(B * (2 * H * H * W + 2 * H * W * W + 8 * F_ * N + 6 * H * N)),
        transcendentals=int(B * 2 * F_ * N),
        bytes_accessed=int(B * (H * W + 4 * C * N)
                           + 4 * (H * H + W * W + H * N + 2 * F_)),
    )

    vmem_bytes = 4 * (2 * C * N                         # double-buffered output
                      + H * H + W * W + H * N + 4 * F_  # resident constants
                      + 6 * H * N + 6 * F_ * N)         # kernel temporaries
    vmem_limit = int(min(max(2 * vmem_bytes, 32 * 1024 * 1024),
                         64 * 1024 * 1024))

    out_flat = pl.pallas_call(
        kernel,
        out_shape=jax.ShapeDtypeStruct((B, C, N), jnp.float32),
        grid_spec=pltpu.PrefetchScalarGridSpec(
            num_scalar_prefetch=0,
            grid=(B,),
            in_specs=[
                pl.BlockSpec((None, H, W), lambda b: (b, 0, 0)),   # mask
                pl.BlockSpec((H, H), lambda b: (0, 0)),            # L
                pl.BlockSpec((W, W), lambda b: (0, 0)),            # U
                pl.BlockSpec((H, N), lambda b: (0, 0)),            # D
                pl.BlockSpec((F_, 1), lambda b: (0, 0)),           # 1/dim_t
                pl.BlockSpec((F_, 1), lambda b: (0, 0)),           # phase
            ],
            out_specs=pl.BlockSpec((None, C, N), lambda b: (b, 0, 0)),
        ),
        compiler_params=pltpu.CompilerParams(
            dimension_semantics=("parallel",),
            vmem_limit_bytes=vmem_limit),
        cost_estimate=cost,
    )(mask_i8, jnp.asarray(L), jnp.asarray(U), jnp.asarray(D),
      jnp.asarray(inv_dim_t), jnp.asarray(phase))

    # (B, 2F, H*W) -> (B, 2F, H, W): row-major compatible, no data movement.
    return out_flat.reshape(B, C, H, W)


def _reference(mask, *, num_pos_feats=64, temperature=10000,
               normalize=False, scale=None):
    """Pure-JAX transcription of the PyTorch forward (for correctness check)."""
    if scale is None:
        scale = 2 * math.pi
    not_mask = jnp.logical_not(mask)
    y_embed = jnp.cumsum(not_mask.astype(jnp.float32), axis=1)
    x_embed = jnp.cumsum(not_mask.astype(jnp.float32), axis=2)
    if normalize:
        eps = 1e-6
        y_embed = y_embed / (y_embed[:, -1:, :] + eps) * scale
        x_embed = x_embed / (x_embed[:, :, -1:] + eps) * scale
    dim_t = jnp.arange(num_pos_feats, dtype=jnp.float32)
    dim_t = temperature ** (2 * jnp.floor(dim_t / 2) / num_pos_feats)
    pos_x = x_embed[:, :, :, None] / dim_t
    pos_y = y_embed[:, :, :, None] / dim_t
    B, H, W = mask.shape
    pos_x = jnp.stack((jnp.sin(pos_x[..., 0::2]), jnp.cos(pos_x[..., 1::2])),
                      axis=4).reshape(B, H, W, -1)
    pos_y = jnp.stack((jnp.sin(pos_y[..., 0::2]), jnp.cos(pos_y[..., 1::2])),
                      axis=4).reshape(B, H, W, -1)
    pos = jnp.concatenate((pos_y, pos_x), axis=3)
    return jnp.transpose(pos, (0, 3, 1, 2))


if __name__ == "__main__":
    key = jax.random.PRNGKey(0)
    B, H, W = 2, 16, 16
    num_pos_feats = 64  # -> 128 output channels, matches module default

    # boolean padding mask, like the PyTorch module expects
    mask = jax.random.bernoulli(key, p=0.3, shape=(B, H, W))

    out = position_embedding_sine(mask, num_pos_feats=num_pos_feats)
    out = jax.block_until_ready(out)

    ref = _reference(mask, num_pos_feats=num_pos_feats)
    assert out.shape == (B, 2 * num_pos_feats, H, W), out.shape
    assert out.dtype == jnp.float32
    max_err = float(jnp.max(jnp.abs(out - ref)))
    assert jnp.allclose(out, ref, atol=1e-4, rtol=1e-4), max_err

    print("KERNEL_OK")
</pallas_src>

<mosaic_0001>
module attributes {stable_mosaic.version = 11 : i64} {
  func.func @_pos_embed_kernel(%arg0: i32, %arg1: memref<1x16x16xi8, #tpu.memory_space<vmem>>, %arg2: memref<16x16xf32, #tpu.memory_space<vmem>>, %arg3: memref<16x16xf32, #tpu.memory_space<vmem>>, %arg4: memref<16x256xf32, #tpu.memory_space<vmem>>, %arg5: memref<64x1xf32, #tpu.memory_space<vmem>>, %arg6: memref<64x1xf32, #tpu.memory_space<vmem>>, %arg7: memref<1x128x256xf32, #tpu.memory_space<vmem>>) attributes {dimension_semantics = [#tpu.dimension_semantics<parallel>], iteration_bounds = array<i64: 2>, scalar_prefetch = 0 : i64, scratch_operands = 0 : i64, tpu.core_type = #tpu.core_type<tc>, window_params = [{transform_indices = @transform_0, window_bounds = array<i64: 1, 16, 16>}, {pipeline_mode = #tpu.pipeline_mode<synchronous>, transform_indices = @transform_1, window_bounds = array<i64: 16, 16>}, {pipeline_mode = #tpu.pipeline_mode<synchronous>, transform_indices = @transform_2, window_bounds = array<i64: 16, 16>}, {pipeline_mode = #tpu.pipeline_mode<synchronous>, transform_indices = @transform_3, window_bounds = array<i64: 16, 256>}, {pipeline_mode = #tpu.pipeline_mode<synchronous>, transform_indices = @transform_4, window_bounds = array<i64: 64, 1>}, {pipeline_mode = #tpu.pipeline_mode<synchronous>, transform_indices = @transform_5, window_bounds = array<i64: 64, 1>}, {transform_indices = @transform_6, window_bounds = array<i64: 1, 128, 256>}]} {
    %c0 = arith.constant 0 : index
    %c0_0 = arith.constant 0 : index
    %c0_1 = arith.constant 0 : index
    %0 = vector.load %arg1[%c0, %c0_0, %c0_1] : memref<1x16x16xi8, #tpu.memory_space<vmem>>, vector<1x16x16xi8>
    %1 = vector.shape_cast %0 : vector<1x16x16xi8> to vector<16x16xi8>
    %2 = arith.sitofp %1 : vector<16x16xi8> to vector<16x16xf32>
    %cst = arith.constant 1.000000e+00 : f32
    %3 = vector.broadcast %cst : f32 to vector<16x16xf32>
    %4 = arith.subf %3, %2 : vector<16x16xf32>
    %c0_2 = arith.constant 0 : index
    %c0_3 = arith.constant 0 : index
    %5 = vector.load %arg2[%c0_2, %c0_3] : memref<16x16xf32, #tpu.memory_space<vmem>>, vector<16x16xf32>
    %cst_4 = arith.constant dense<0.000000e+00> : vector<16x16xf32>
    %6 = tpu.matmul %5, %4, %cst_4 {dimension_numbers = #tpu.dot_dimension_numbers<[1], [0], [0], [1], [0, 0, 1, 1], [], []>} : vector<16x16xf32>, vector<16x16xf32>, vector<16x16xf32> -> vector<16x16xf32>
    %c0_5 = arith.constant 0 : index
    %c0_6 = arith.constant 0 : index
    %7 = vector.load %arg3[%c0_5, %c0_6] : memref<16x16xf32, #tpu.memory_space<vmem>>, vector<16x16xf32>
    %cst_7 = arith.constant dense<0.000000e+00> : vector<16x16xf32>
    %8 = tpu.matmul %4, %7, %cst_7 {dimension_numbers = #tpu.dot_dimension_numbers<[1], [0], [0], [1], [0, 0, 1, 1], [], []>} : vector<16x16xf32>, vector<16x16xf32>, vector<16x16xf32> -> vector<16x16xf32>
    %c0_8 = arith.constant 0 : index
    %c0_9 = arith.constant 0 : index
    %9 = vector.load %arg4[%c0_8, %c0_9] : memref<16x256xf32, #tpu.memory_space<vmem>>, vector<16x256xf32>
    %10 = tpu.concatenate %6, %6, %6, %6, %6, %6, %6, %6, %6, %6, %6, %6, %6, %6, %6, %6 in 1 : vector<16x16xf32>, vector<16x16xf32>, vector<16x16xf32>, vector<16x16xf32>, vector<16x16xf32>, vector<16x16xf32>, vector<16x16xf32>, vector<16x16xf32>, vector<16x16xf32>, vector<16x16xf32>, vector<16x16xf32>, vector<16x16xf32>, vector<16x16xf32>, vector<16x16xf32>, vector<16x16xf32>, vector<16x16xf32> -> vector<16x256xf32>
    %11 = arith.mulf %9, %10 : vector<16x256xf32>
    %cst_10 = arith.constant dense<0.000000e+00> : vector<256xf32>
    %12 = vector.multi_reduction <add>, %11, %cst_10 [0] : vector<16x256xf32> to vector<256xf32>
    %13 = vector.shape_cast %12 : vector<256xf32> to vector<1x256xf32>
    %14 = tpu.concatenate %8, %8, %8, %8, %8, %8, %8, %8, %8, %8, %8, %8, %8, %8, %8, %8 in 1 : vector<16x16xf32>, vector<16x16xf32>, vector<16x16xf32>, vector<16x16xf32>, vector<16x16xf32>, vector<16x16xf32>, vector<16x16xf32>, vector<16x16xf32>, vector<16x16xf32>, vector<16x16xf32>, vector<16x16xf32>, vector<16x16xf32>, vector<16x16xf32>, vector<16x16xf32>, vector<16x16xf32>, vector<16x16xf32> -> vector<16x256xf32>
    %15 = arith.mulf %9, %14 : vector<16x256xf32>
    %cst_11 = arith.constant dense<0.000000e+00> : vector<256xf32>
    %16 = vector.multi_reduction <add>, %15, %cst_11 [0] : vector<16x256xf32> to vector<256xf32>
    %17 = vector.shape_cast %16 : vector<256xf32> to vector<1x256xf32>
    %c0_12 = arith.constant 0 : index
    %c0_13 = arith.constant 0 : index
    %18 = vector.load %arg5[%c0_12, %c0_13] : memref<64x1xf32, #tpu.memory_space<vmem>>, vector<64x1xf32>
    %c0_14 = arith.constant 0 : index
    %c0_15 = arith.constant 0 : index
    %19 = vector.load %arg6[%c0_14, %c0_15] : memref<64x1xf32, #tpu.memory_space<vmem>>, vector<64x1xf32>
    %20 = vector.broadcast %18 : vector<64x1xf32> to vector<64x256xf32>
    %21 = vector.broadcast %13 : vector<1x256xf32> to vector<64x256xf32>
    %22 = arith.mulf %20, %21 : vector<64x256xf32>
    %23 = vector.broadcast %19 : vector<64x1xf32> to vector<64x256xf32>
    %24 = arith.addf %22, %23 : vector<64x256xf32>
    %25 = math.sin %24 : vector<64x256xf32>
    %c0_16 = arith.constant 0 : index
    %c0_17 = arith.constant 0 : index
    %c0_18 = arith.constant 0 : index
    %26 = vector.load %arg7[%c0_16, %c0_17, %c0_18] : memref<1x128x256xf32, #tpu.memory_space<vmem>>, vector<1x64x256xf32>
    %27 = vector.shape_cast %26 : vector<1x64x256xf32> to vector<64x256xf32>
    %28 = vector.shape_cast %25 : vector<64x256xf32> to vector<1x64x256xf32>
    tpu.vector_store %arg7[%c0_16, %c0_17, %c0_18], %28 {strides = array<i32>} : memref<1x128x256xf32, #tpu.memory_space<vmem>>, vector<1x64x256xf32>,
    %29 = vector.broadcast %18 : vector<64x1xf32> to vector<64x256xf32>
    %30 = vector.broadcast %17 : vector<1x256xf32> to vector<64x256xf32>
    %31 = arith.mulf %29, %30 : vector<64x256xf32>
    %32 = vector.broadcast %19 : vector<64x1xf32> to vector<64x256xf32>
    %33 = arith.addf %31, %32 : vector<64x256xf32>
    %34 = math.sin %33 : vector<64x256xf32>
    %c0_19 = arith.constant 0 : index
    %c64 = arith.constant 64 : index
    %c0_20 = arith.constant 0 : index
    %35 = vector.load %arg7[%c0_19, %c64, %c0_20] : memref<1x128x256xf32, #tpu.memory_space<vmem>>, vector<1x64x256xf32>
    %36 = vector.shape_cast %35 : vector<1x64x256xf32> to vector<64x256xf32>
    %37 = vector.shape_cast %34 : vector<64x256xf32> to vector<1x64x256xf32>
    tpu.vector_store %arg7[%c0_19, %c64, %c0_20], %37 {strides = array<i32>} : memref<1x128x256xf32, #tpu.memory_space<vmem>>, vector<1x64x256xf32>,
    return
  }
  func.func @transform_0(%arg0: i32) -> (i32, i32, i32) {
    %c0_i32 = arith.constant 0 : i32
    %c0_i32_0 = arith.constant 0 : i32
    %c0_i32_1 = arith.constant 0 : i32
    return %arg0, %c0_i32, %c0_i32_0 : i32, i32, i32
  }
  func.func @transform_1(%arg0: i32) -> (i32, i32) {
    %c0_i32 = arith.constant 0 : i32
    %c0_i32_0 = arith.constant 0 : i32
    %c0_i32_1 = arith.constant 0 : i32
    return %c0_i32, %c0_i32_0 : i32, i32
  }
  func.func @transform_2(%arg0: i32) -> (i32, i32) {
    %c0_i32 = arith.constant 0 : i32
    %c0_i32_0 = arith.constant 0 : i32
    %c0_i32_1 = arith.constant 0 : i32
    return %c0_i32, %c0_i32_0 : i32, i32
  }
  func.func @transform_3(%arg0: i32) -> (i32, i32) {
    %c0_i32 = arith.constant 0 : i32
    %c0_i32_0 = arith.constant 0 : i32
    %c0_i32_1 = arith.constant 0 : i32
    return %c0_i32, %c0_i32_0 : i32, i32
  }
  func.func @transform_4(%arg0: i32) -> (i32, i32) {
    %c0_i32 = arith.constant 0 : i32
    %c0_i32_0 = arith.constant 0 : i32
    %c0_i32_1 = arith.constant 0 : i32
    return %c0_i32, %c0_i32_0 : i32, i32
  }
  func.func @transform_5(%arg0: i32) -> (i32, i32) {
    %c0_i32 = arith.constant 0 : i32
    %c0_i32_0 = arith.constant 0 : i32
    %c0_i32_1 = arith.constant 0 : i32
    return %c0_i32, %c0_i32_0 : i32, i32
  }
  func.func @transform_6(%arg0: i32) -> (i32, i32, i32) {
    %c0_i32 = arith.constant 0 : i32
    %c0_i32_0 = arith.constant 0 : i32
    %c0_i32_1 = arith.constant 0 : i32
    return %arg0, %c0_i32, %c0_i32_0 : i32, i32, i32
  }
}

</mosaic_0001>

<llo_original>
// kernel: tpu_custom_call.1
$region0: #{tpu_custom_call.1}
  #allocation0 [shape = 'u32[]', space=smem, size = 0x4, offset = 0x4, fixed_abs, tag = 'smem constant byte address 0x4 - core index']
  #allocation1 [shape = 'u32[72,128]{1,0:T(1,128)}', space=vmem, size = 0x9000, scoped, tag = 'internal scratch']
  %s0 = inlined_call_operand.vmem [shape: s8[2,16,16], index: 0, kind: input, shape index: {}]
  %s1 = inlined_call_operand.vmem [shape: f32[16,16], index: 1, kind: input, shape index: {}]
  %s2 = inlined_call_operand.vmem [shape: f32[16,16], index: 2, kind: input, shape index: {}]
  %s3 = inlined_call_operand.vmem [shape: f32[16,256], index: 3, kind: input, shape index: {}]
  %s4 = inlined_call_operand.vmem [shape: f32[64,1], index: 4, kind: input, shape index: {}]
  %s5 = inlined_call_operand.vmem [shape: f32[64,1], index: 5, kind: input, shape index: {}]
  %s6 = inlined_call_operand.hbm [shape: f32[2,128,256], index: 6, kind: output, shape index: {}]
  %s7 = sld [smem:[#allocation0]]
  $region57: #{tpu_custom_call.1} parent=0
    _
  %s9 = ssub.s32 1, %s7
  %s10 = scalar_select 0, %s9, %s7
  $region1: #{tpu_custom_call.1} parent=0
    #allocation2 [shape = 'u8[262144]{0}', space=vmem, size = 0x40000, scoped, tag = 'output window, operand 0']
    #allocation3 [shape = 's32[2]{0}', space=sflag, size = 0x8, scoped, tag = 'scoped memory for tpu_custom_call.1']
    %11 = vsyncpa [#allocation3], 0
    %s12 = scalar_lea.sflag [#allocation3], 1
    %13 = vsyncpa %s12, 0
    loop: start=0, step=1, limit=4
    $region2: #{tpu_custom_call.1} parent=1 // loop_pre_header
      _
    $region3: #{tpu_custom_call.1} parent=1 // loop_header
      %s15 = sphi 0, %s19
      %p16 = scmp.ge.s32.totalorder %s15, 4
      %s25 = sphi 0, %s27
      %s28 = sphi 0, %s25
      %s29 = sphi 0, %s28
      %s45 = sphi 0, %s29
      %s49 = sphi 0, %s49
      %s51 = sphi 0, %s49
      %s52 = sphi 0, %s51
      %s66 = sphi 0, %s52
      %s70 = sphi 0, %s70
      %s72 = sphi 0, %s70
      %s73 = sphi 0, %s72
      %s87 = sphi 0, %s73
      %s91 = sphi 0, %s91
      %s93 = sphi 0, %s91
      %s94 = sphi 0, %s93
      %s108 = sphi 0, %s94
      %s112 = sphi 0, %s112
      %s114 = sphi 0, %s112
      %s115 = sphi 0, %s114
      %s129 = sphi 0, %s115
      %s133 = sphi 0, %s133
      %s135 = sphi 0, %s133
      %s136 = sphi 0, %s135
      %s150 = sphi 0, %s136
      %s156 = sphi 0, %s158
      %s159 = sphi 0, %s156
      %s160 = sphi 0, %s159
      %s176 = sphi 0, %s160
    $region4: #{tpu_custom_call.1} parent=1 // loop_header_branch
      %18 = sbr.rel (%p16) target = $region8
    $region5: #{tpu_custom_call.1} parent=1 // loop_body
      %s20 = ssub.s32 %s15, 1
      %s21 = ssub.s32 %s15, 2
      %s22 = sadd.s32 %s15, 1
      %s23 = ssub.s32 %s15, %s22
      %p24 = scmp.eq.s32.totalorder %s23, 0
      %s26 = sadd.s32 %s25, 1
      %s27 = scalar_select %p24, %s25, %s26
      %p30 = pneg %p24
      %p31 = scmp.eq.s32.totalorder %s15, 1
      %p32 = por %p30, %p31
      %p33 = scmp.ne.s32.totalorder %s25, %s28
      %p34 = scmp.eq.s32.totalorder %s15, 0
      %p35 = por %p33, %p34
      %p36 = scmp.ne.s32.totalorder %s25, %s28
      %p37 = scmp.eq.s32.totalorder %s20, 1
      %p38 = por %p36, %p37
      %p39 = scmp.ne.s32.totalorder %s28, %s29
      %p40 = scmp.eq.s32.totalorder %s20, 0
      %p41 = por %p39, %p40
      %p42 = scmp.ne.s32.totalorder %s28, %s29
      %p43 = scmp.eq.s32.totalorder %s21, 1
      %p44 = por %p42, %p43
      %p46 = scmp.ne.s32.totalorder %s29, %s45
      %p47 = scmp.eq.s32.totalorder %s21, 0
      %p48 = por %p46, %p47
      %s50 = sadd.s32 %s49, 1
      %p53 = scmp.eq.s32.totalorder %s15, 1
      %p54 = scmp.ne.s32.totalorder %s49, %s51
      %p55 = scmp.eq.s32.totalorder %s15, 0
      %p56 = por %p54, %p55
      %p57 = scmp.ne.s32.totalorder %s49, %s51
      %p58 = scmp.eq.s32.totalorder %s20, 1
      %p59 = por %p57, %p58
      %p60 = scmp.ne.s32.totalorder %s51, %s52
      %p61 = scmp.eq.s32.totalorder %s20, 0
      %p62 = por %p60, %p61
      %p63 = scmp.ne.s32.totalorder %s51, %s52
      %p64 = scmp.eq.s32.totalorder %s21, 1
      %p65 = por %p63, %p64
      %p67 = scmp.ne.s32.totalorder %s52, %s66
      %p68 = scmp.eq.s32.totalorder %s21, 0
      %p69 = por %p67, %p68
      %s71 = sadd.s32 %s70, 1
      %p74 = scmp.eq.s32.totalorder %s15, 1
      %p75 = scmp.ne.s32.totalorder %s70, %s72
      %p76 = scmp.eq.s32.totalorder %s15, 0
      %p77 = por %p75, %p76
      %p78 = scmp.ne.s32.totalorder %s70, %s72
      %p79 = scmp.eq.s32.totalorder %s20, 1
      %p80 = por %p78, %p79
      %p81 = scmp.ne.s32.totalorder %s72, %s73
      %p82 = scmp.eq.s32.totalorder %s20, 0
      %p83 = por %p81, %p82
      %p84 = scmp.ne.s32.totalorder %s72, %s73
      %p85 = scmp.eq.s32.totalorder %s21, 1
      %p86 = por %p84, %p85
      %p88 = scmp.ne.s32.totalorder %s73, %s87
      %p89 = scmp.eq.s32.totalorder %s21, 0
      %p90 = por %p88, %p89
      %s92 = sadd.s32 %s91, 1
      %p95 = scmp.eq.s32.totalorder %s15, 1
      %p96 = scmp.ne.s32.totalorder %s91, %s93
      %p97 = scmp.eq.s32.totalorder %s15, 0
      %p98 = por %p96, %p97
      %p99 = scmp.ne.s32.totalorder %s91, %s93
      %p100 = scmp.eq.s32.totalorder %s20, 1
      %p101 = por %p99, %p100
      %p102 = scmp.ne.s32.totalorder %s93, %s94
      %p103 = scmp.eq.s32.totalorder %s20, 0
      %p104 = por %p102, %p103
      %p105 = scmp.ne.s32.totalorder %s93, %s94
      %p106 = scmp.eq.s32.totalorder %s21, 1
      %p107 = por %p105, %p106
      %p109 = scmp.ne.s32.totalorder %s94, %s108
      %p110 = scmp.eq.s32.totalorder %s21, 0
      %p111 = por %p109, %p110
      %s113 = sadd.s32 %s112, 1
      %p116 = scmp.eq.s32.totalorder %s15, 1
      %p117 = scmp.ne.s32.totalorder %s112, %s114
      %p118 = scmp.eq.s32.totalorder %s15, 0
      %p119 = por %p117, %p118
      %p120 = scmp.ne.s32.totalorder %s112, %s114
      %p121 = scmp.eq.s32.totalorder %s20, 1
      %p122 = por %p120, %p121
      %p123 = scmp.ne.s32.totalorder %s114, %s115
      %p124 = scmp.eq.s32.totalorder %s20, 0
      %p125 = por %p123, %p124
      %p126 = scmp.ne.s32.totalorder %s114, %s115
      %p127 = scmp.eq.s32.totalorder %s21, 1
      %p128 = por %p126, %p127
      %p130 = scmp.ne.s32.totalorder %s115, %s129
      %p131 = scmp.eq.s32.totalorder %s21, 0
      %p132 = por %p130, %p131
      %s134 = sadd.s32 %s133, 1
      %p137 = scmp.eq.s32.totalorder %s15, 1
      %p138 = scmp.ne.s32.totalorder %s133, %s135
      %p139 = scmp.eq.s32.totalorder %s15, 0
      %p140 = por %p138, %p139
      %p141 = scmp.ne.s32.totalorder %s133, %s135
      %p142 = scmp.eq.s32.totalorder %s20, 1
      %p143 = por %p141, %p142
      %p144 = scmp.ne.s32.totalorder %s135, %s136
      %p145 = scmp.eq.s32.totalorder %s20, 0
      %p146 = por %p144, %p145
      %p147 = scmp.ne.s32.totalorder %s135, %s136
      %p148 = scmp.eq.s32.totalorder %s21, 1
      %p149 = por %p147, %p148
      %p151 = scmp.ne.s32.totalorder %s136, %s150
      %p152 = scmp.eq.s32.totalorder %s21, 0
      %p153 = por %p151, %p152
      %s154 = ssub.s32 %s15, %s22
      %p155 = scmp.eq.s32.totalorder %s154, 0
      %s157 = sadd.s32 %s156, 1
      %s158 = scalar_select %p155, %s156, %s157
      %p161 = pneg %p155
      %p162 = scmp.eq.s32.totalorder %s15, 1
      %p163 = por %p161, %p162
      %p164 = scmp.ne.s32.totalorder %s156, %s159
      %p165 = scmp.eq.s32.totalorder %s15, 0
      %p166 = por %p164, %p165
      %p167 = scmp.ne.s32.totalorder %s156, %s159
      %p168 = scmp.eq.s32.totalorder %s20, 1
      %p169 = por %p167, %p168
      %p170 = scmp.ne.s32.totalorder %s159, %s160
      %p171 = scmp.eq.s32.totalorder %s20, 0
      %p172 = por %p170, %p171
      %p173 = scmp.ne.s32.totalorder %s159, %s160
      %p174 = scmp.eq.s32.totalorder %s21, 1
      %p175 = por %p173, %p174
      %p177 = scmp.ne.s32.totalorder %s160, %s176
      %p178 = scmp.eq.s32.totalorder %s21, 0
      %p179 = por %p177, %p178
      %p180 = scmp.le.s32.totalorder 1, %s15
      %p181 = scmp.lt.s32.totalorder %s15, 3
      %p182 = pnand %p180, %p181
      %p183 = pneg %p182
      // Predicated region
      $region9: #{tpu_custom_call.1} parent=5 // pred_check
        _
      $region10: #{tpu_custom_call.1} parent=5 // pred_check_branch
        %185 = sbr.rel (%p182) target = $region12
      $region11: #{tpu_custom_call.1} parent=5 // pred_region
        %s186 = ssub.s32 %s15, 1
        // Predicated region
        $region13: #{tpu_custom_call.1} parent=11 // pred_check
          %p187 = pneg %p62
        $region14: #{tpu_custom_call.1} parent=11 // pred_check_branch
          %189 = sbr.rel (%p187) target = $region16
        $region15: #{tpu_custom_call.1} parent=11 // pred_region
          _
        $region16: #{tpu_custom_call.1} parent=11 // pred_fallthru
          _
        // Predicated region
        $region17: #{tpu_custom_call.1} parent=11 // pred_check
          %p190 = pneg %p83
        $region18: #{tpu_custom_call.1} parent=11 // pred_check_branch
          %192 = sbr.rel (%p190) target = $region20
        $region19: #{tpu_custom_call.1} parent=11 // pred_region
          _
        $region20: #{tpu_custom_call.1} parent=11 // pred_fallthru
          _
        // Predicated region
        $region21: #{tpu_custom_call.1} parent=11 // pred_check
          %p193 = pneg %p104
        $region22: #{tpu_custom_call.1} parent=11 // pred_check_branch
          %195 = sbr.rel (%p193) target = $region24
        $region23: #{tpu_custom_call.1} parent=11 // pred_region
          _
        $region24: #{tpu_custom_call.1} parent=11 // pred_fallthru
          _
        // Predicated region
        $region25: #{tpu_custom_call.1} parent=11 // pred_check
          %p196 = pneg %p125
        $region26: #{tpu_custom_call.1} parent=11 // pred_check_branch
          %198 = sbr.rel (%p196) target = $region28
        $region27: #{tpu_custom_call.1} parent=11 // pred_region
          _
        $region28: #{tpu_custom_call.1} parent=11 // pred_fallthru
          _
        // Predicated region
        $region29: #{tpu_custom_call.1} parent=11 // pred_check
          %p199 = pneg %p146
        $region30: #{tpu_custom_call.1} parent=11 // pred_check_branch
          %201 = sbr.rel (%p199) target = $region32
        $region31: #{tpu_custom_call.1} parent=11 // pred_region
          _
        $region32: #{tpu_custom_call.1} parent=11 // pred_fallthru
          _
      $region12: #{tpu_custom_call.1} parent=5 // pred_fallthru
        _
      %p202 = scmp.lt.s32.totalorder %s15, 2
      // Predicated region
      $region33: #{tpu_custom_call.1} parent=5 // pred_check
        %p203 = pneg %p202
      $region34: #{tpu_custom_call.1} parent=5 // pred_check_branch
        %205 = sbr.rel (%p203) target = $region36
      $region35: #{tpu_custom_call.1} parent=5 // pred_region
        // Predicated region
        $region37: #{tpu_custom_call.1} parent=35 // pred_check
          %p206 = pneg %p35
        $region38: #{tpu_custom_call.1} parent=35 // pred_check_branch
          %208 = sbr.rel (%p206) target = $region40
        $region39: #{tpu_custom_call.1} parent=35 // pred_region
          %p209 = scmp.lt.s32.totalorder %s15, 1
          %s210 = scalar_select %p209, %s15, 1
          %s211 = smul.addr %s210, 2
          %s212 = smul.addr %s211, 2
          %s213 = scalar_lea.vmem %s0, %s212
        $region40: #{tpu_custom_call.1} parent=35 // pred_fallthru
          _
      $region36: #{tpu_custom_call.1} parent=5 // pred_fallthru
        _
      %p214 = scmp.le.s32.totalorder 1, %s15
      %p215 = scmp.lt.s32.totalorder %s15, 3
      %p216 = pnand %p214, %p215
      %p217 = pneg %p216
      // Predicated region
      $region41: #{tpu_custom_call.1} parent=5 // pred_check
        _
      $region42: #{tpu_custom_call.1} parent=5 // pred_check_branch
        %219 = sbr.rel (%p216) target = $region44
      $region43: #{tpu_custom_call.1} parent=5 // pred_region
        %s220 = ssub.s32 %s15, 1
        %p221 = scmp.lt.s32.totalorder %s20, 1
        %s222 = scalar_select %p221, %s20, 1
        %s223 = smul.addr %s222, 2
        %s224 = smul.addr %s223, 2
        %s225 = scalar_lea.vmem %s0, %s224
        %p226 = pneg %p41
        %p227 = pneg %p38
        %p228 = pneg %p62
        %p229 = pneg %p59
        %p230 = pneg %p83
        %p231 = pneg %p80
        %p232 = pneg %p104
        %p233 = pneg %p101
        %p234 = pneg %p125
        %p235 = pneg %p122
        %p236 = pneg %p146
        %p237 = pneg %p143
        %p238 = pneg %p172
        %p239 = pneg %p169
        %s240 = sand.u32 %s159, 1
        %s241 = scalar_lea.sflag [#allocation3], %s240
        %s242 = sand.u32 %s159, 1
        %s243 = smul.addr %s242, 256
        %s244 = scalar_lea.vmem [#allocation2], %s243
        %p245 = scmp.lt.s32.totalorder %s20, 1
        %s246 = scalar_select %p245, %s20, 1
        %s247 = smul.addr %s246, 2
        %s248 = smul.addr %s247, 2
        %s249 = scalar_lea.vmem %s0, %s248
        %v250 = vld [vmem:[%s249] sm:$0x3]
        %v251 = vld [vmem:[%s249 + $0x2] sm:$0x3]
        %v252 = vunpack.c.0.s8 %v250
        %v253 = vunpack.c.0.s8 %v251
        %v254 = vcvt.s32.f32 %v252
        %v255 = vcvt.s32.f32 %v253
        %v256 = vsub.f32 1.0, %v254
        %v257 = vsub.f32 1.0, %v255
        %v258 = vld [vmem:[%s1] sm:$0xff]
        %v259 = vld [vmem:[%s1 + $0x8] sm:$0xff]
        %vm260 = vcmask 130048
        %v262 = vsel %vm260, %v258, 0
        %v265 = vsel %vm260, %v259, 0
        %267 = vmatpush.msra.mxu0 0.0
        %268 = vmatpush.msra.mxu0 0.0
        %269 = vmatpush.msra.mxu0 0.0
        %270 = vmatpush.msra.mxu0 0.0
        %271 = vmatpush.msra.mxu0 0.0
        %272 = vmatpush.msra.mxu0 0.0
        %273 = vmatpush.msra.mxu0 0.0
        %274 = vmatpush.msra.mxu0 0.0
        %275 = vmatpush.msra.mxu0 0.0
        %276 = vmatpush.msra.mxu0 0.0
        %277 = vmatpush.msra.mxu0 0.0
        %278 = vmatpush.msra.mxu0 0.0
        %279 = vmatpush.msra.mxu0 0.0
        %280 = vmatpush.msra.mxu0 0.0
        %281 = vmatpush.msra.mxu0 %v257
        %282 = vmatpush.msra.mxu0 %v256
        %283 = vmatmul.f32.gmra.mxu0 %v262
        %v284 = vpop.f32.mrf.mxu0
        %v285 = vadd.f32 0.0, %v284
        %286 = vmatmul.f32.gmra.mxu0 %v265
        %v287 = vpop.f32.mrf.mxu0
        %v288 = vadd.f32 0.0, %v287
        %289 = vdwg.mxu0
        %v290 = vld [vmem:[%s2] sm:$0xff]
        %v291 = vld [vmem:[%s2 + $0x8] sm:$0xff]
        %v293 = vsel %vm260, %v256, 0
        %v296 = vsel %vm260, %v257, 0
        %298 = vmatpush.msra.mxu0 0.0
        %299 = vmatpush.msra.mxu0 0.0
        %300 = vmatpush.msra.mxu0 0.0
        %301 = vmatpush.msra.mxu0 0.0
        %302 = vmatpush.msra.mxu0 0.0
        %303 = vmatpush.msra.mxu0 0.0
        %304 = vmatpush.msra.mxu0 0.0
        %305 = vmatpush.msra.mxu0 0.0
        %306 = vmatpush.msra.mxu0 0.0
        %307 = vmatpush.msra.mxu0 0.0
        %308 = vmatpush.msra.mxu0 0.0
        %309 = vmatpush.msra.mxu0 0.0
        %310 = vmatpush.msra.mxu0 0.0
        %311 = vmatpush.msra.mxu0 0.0
        %312 = vmatpush.msra.mxu0 %v291
        %313 = vmatpush.msra.mxu0 %v290
        %314 = vmatmul.f32.gmra.mxu0 %v293
        %v315 = vpop.f32.mrf.mxu0
        %v316 = vadd.f32 0.0, %v315
        %317 = vmatmul.f32.gmra.mxu0 %v296
        %v318 = vpop.f32.mrf.mxu0
        %v319 = vadd.f32 0.0, %v318
        %320 = vdwg.mxu0
        %v321 = vld [vmem:[%s3] sm:$0xff]
        %v322 = vld [vmem:[%s3 + $0x8] sm:$0xff]
        %v323 = vld [vmem:[%s3 + $0x10] sm:$0xff]
        %v324 = vld [vmem:[%s3 + $0x18] sm:$0xff]
        %327 = vrot.lane.b32.xlu0 %v285, 16
        %v328 = vpop.permute.xlu0 %327
        %329 = vrot.lane.b32.xlu0 %v288, 16
        %v330 = vpop.permute.xlu0 %329
        %333 = vrot.lane.b32.xlu0 %v285, 32
        %v334 = vpop.permute.xlu0 %333
        %335 = vrot.lane.b32.xlu0 %v288, 32
        %v336 = vpop.permute.xlu0 %335
        %339 = vrot.lane.b32.xlu0 %v285, 48
        %v340 = vpop.permute.xlu0 %339
        %341 = vrot.lane.b32.xlu0 %v288, 48
        %v342 = vpop.permute.xlu0 %341
        %345 = vrot.lane.b32.xlu0 %v285, 64
        %v346 = vpop.permute.xlu0 %345
        %347 = vrot.lane.b32.xlu0 %v288, 64
        %v348 = vpop.permute.xlu0 %347
        %351 = vrot.lane.b32.xlu0 %v285, 80
        %v352 = vpop.permute.xlu0 %351
        %353 = vrot.lane.b32.xlu0 %v288, 80
        %v354 = vpop.permute.xlu0 %353
        %357 = vrot.lane.b32.xlu0 %v285, 96
        %v358 = vpop.permute.xlu0 %357
        %359 = vrot.lane.b32.xlu0 %v288, 96
        %v360 = vpop.permute.xlu0 %359
        %363 = vrot.lane.b32.xlu0 %v285, 112
        %v364 = vpop.permute.xlu0 %363
        %365 = vrot.lane.b32.xlu0 %v288, 112
        %v366 = vpop.permute.xlu0 %365
        %v369 = vsel %vm260, %v285, %v328
        %v370 = vsel %vm260, %v288, %v330
        %vm371 = vcmask 261120
        %v372 = vsel %vm371, %v369, %v334
        %v373 = vsel %vm371, %v370, %v336
        %vm374 = vcmask 392192
        %v375 = vsel %vm374, %v372, %v340
        %v376 = vsel %vm374, %v373, %v342
        %vm377 = vcmask 523264
        %v378 = vsel %vm377, %v375, %v346
        %v379 = vsel %vm377, %v376, %v348
        %vm380 = vcmask 654336
        %v381 = vsel %vm380, %v378, %v352
        %v382 = vsel %vm380, %v379, %v354
        %vm383 = vcmask 785408
        %v384 = vsel %vm383, %v381, %v358
        %v385 = vsel %vm383, %v382, %v360
        %vm386 = vcmask 916480
        %v387 = vsel %vm386, %v384, %v364
        %v388 = vsel %vm386, %v385, %v366
        %v389 = vmul.f32 %v321, %v387
        %v390 = vmul.f32 %v322, %v387
        %v391 = vmul.f32 %v323, %v388
        %v392 = vmul.f32 %v324, %v388
        %v393 = vadd.f32 %v389, %v391
        %v394 = vrot.slane %v393, 4
        %v395 = vadd.f32 %v393, %v394
        %v396 = vrot.slane %v395, 2
        %v397 = vadd.f32 %v395, %v396
        %v398 = vrot.slane %v397, 1
        %v399 = vadd.f32 %v397, %v398
        %v400 = vadd.f32 %v390, %v392
        %v401 = vrot.slane %v400, 4
        %v402 = vadd.f32 %v400, %v401
        %v403 = vrot.slane %v402, 2
        %v404 = vadd.f32 %v402, %v403
        %v405 = vrot.slane %v404, 1
        %v406 = vadd.f32 %v404, %v405
        %409 = vrot.lane.b32.xlu0 %v316, 16
        %v410 = vpop.permute.xlu0 %409
        %411 = vrot.lane.b32.xlu0 %v319, 16
        %v412 = vpop.permute.xlu0 %411
        %415 = vrot.lane.b32.xlu0 %v316, 32
        %v416 = vpop.permute.xlu0 %415
        %417 = vrot.lane.b32.xlu0 %v319, 32
        %v418 = vpop.permute.xlu0 %417
        %421 = vrot.lane.b32.xlu0 %v316, 48
        %v422 = vpop.permute.xlu0 %421
        %423 = vrot.lane.b32.xlu0 %v319, 48
        %v424 = vpop.permute.xlu0 %423
        %427 = vrot.lane.b32.xlu0 %v316, 64
        %v428 = vpop.permute.xlu0 %427
        %429 = vrot.lane.b32.xlu0 %v319, 64
        %v430 = vpop.permute.xlu0 %429
        %433 = vrot.lane.b32.xlu0 %v316, 80
        %v434 = vpop.permute.xlu0 %433
        %435 = vrot.lane.b32.xlu0 %v319, 80
        %v436 = vpop.permute.xlu0 %435
        %439 = vrot.lane.b32.xlu0 %v316, 96
        %v440 = vpop.permute.xlu0 %439
        %441 = vrot.lane.b32.xlu0 %v319, 96
        %v442 = vpop.permute.xlu0 %441
        %445 = vrot.lane.b32.xlu0 %v316, 112
        %v446 = vpop.permute.xlu0 %445
        %447 = vrot.lane.b32.xlu0 %v319, 112
        %v448 = vpop.permute.xlu0 %447
        %v451 = vsel %vm260, %v316, %v410
        %v452 = vsel %vm260, %v319, %v412
        %v453 = vsel %vm371, %v451, %v416
        %v454 = vsel %vm371, %v452, %v418
        %v455 = vsel %vm374, %v453, %v422
        %v456 = vsel %vm374, %v454, %v424
        %v457 = vsel %vm377, %v455, %v428
        %v458 = vsel %vm377, %v456, %v430
        %v459 = vsel %vm380, %v457, %v434
        %v460 = vsel %vm380, %v458, %v436
        %v461 = vsel %vm383, %v459, %v440
        %v462 = vsel %vm383, %v460, %v442
        %v463 = vsel %vm386, %v461, %v446
        %v464 = vsel %vm386, %v462, %v448
        %v465 = vmul.f32 %v321, %v463
        %v466 = vmul.f32 %v322, %v463
        %v467 = vmul.f32 %v323, %v464
        %v468 = vmul.f32 %v324, %v464
        %v469 = vadd.f32 %v465, %v467
        %v470 = vrot.slane %v469, 4
        %v471 = vadd.f32 %v469, %v470
        %v472 = vrot.slane %v471, 2
        %v473 = vadd.f32 %v471, %v472
        %v474 = vrot.slane %v473, 1
        %v475 = vadd.f32 %v473, %v474
        %v476 = vadd.f32 %v466, %v468
        %v477 = vrot.slane %v476, 4
        %v478 = vadd.f32 %v476, %v477
        %v479 = vrot.slane %v478, 2
        %v480 = vadd.f32 %v478, %v479
        %v481 = vrot.slane %v480, 1
        %v482 = vadd.f32 %v480, %v481
        %v483 = vld [vmem:[%s4] sm:$0xff]
        %v484 = vld [vmem:[%s4 + $0x8] sm:$0xff]
        %v485 = vld [vmem:[%s4 + $0x10] sm:$0xff]
        %v486 = vld [vmem:[%s4 + $0x18] sm:$0xff]
        %v487 = vld [vmem:[%s4 + $0x20] sm:$0xff]
        %v488 = vld [vmem:[%s4 + $0x28] sm:$0xff]
        %v489 = vld [vmem:[%s4 + $0x30] sm:$0xff]
        %v490 = vld [vmem:[%s4 + $0x38] sm:$0xff]
        %v491 = vld [vmem:[%s5] sm:$0xff]
        %v492 = vld [vmem:[%s5 + $0x8] sm:$0xff]
        %v493 = vld [vmem:[%s5 + $0x10] sm:$0xff]
        %v494 = vld [vmem:[%s5 + $0x18] sm:$0xff]
        %v495 = vld [vmem:[%s5 + $0x20] sm:$0xff]
        %v496 = vld [vmem:[%s5 + $0x28] sm:$0xff]
        %v497 = vld [vmem:[%s5 + $0x30] sm:$0xff]
        %v498 = vld [vmem:[%s5 + $0x38] sm:$0xff]
        %500 = vset.pattern.permute.xlu0 0
        %501 = vperm.xlu0 %500, %v483
        %v502 = vpop.permute.xlu0 %501
        %505 = vset.pattern.permute.xlu0 0
        %506 = vperm.xlu0 %505, %v484
        %v507 = vpop.permute.xlu0 %506
        %510 = vset.pattern.permute.xlu0 0
        %511 = vperm.xlu0 %510, %v485
        %v512 = vpop.permute.xlu0 %511
        %515 = vset.pattern.permute.xlu0 0
        %516 = vperm.xlu0 %515, %v486
        %v517 = vpop.permute.xlu0 %516
        %520 = vset.pattern.permute.xlu0 0
        %521 = vperm.xlu0 %520, %v487
        %v522 = vpop.permute.xlu0 %521
        %525 = vset.pattern.permute.xlu0 0
        %526 = vperm.xlu0 %525, %v488
        %v527 = vpop.permute.xlu0 %526
        %530 = vset.pattern.permute.xlu0 0
        %531 = vperm.xlu0 %530, %v489
        %v532 = vpop.permute.xlu0 %531
        %535 = vset.pattern.permute.xlu0 0
        %536 = vperm.xlu0 %535, %v490
        %v537 = vpop.permute.xlu0 %536
        %v539 = vmul.f32 %v502, %v399
        %v540 = vmul.f32 %v502, %v406
        %v541 = vmul.f32 %v507, %v399
        %v542 = vmul.f32 %v507, %v406
        %v543 = vmul.f32 %v512, %v399
        %v544 = vmul.f32 %v512, %v406
        %v545 = vmul.f32 %v517, %v399
        %v546 = vmul.f32 %v517, %v406
        %v547 = vmul.f32 %v522, %v399
        %v548 = vmul.f32 %v522, %v406
        %v549 = vmul.f32 %v527, %v399
        %v550 = vmul.f32 %v527, %v406
        %v551 = vmul.f32 %v532, %v399
        %v552 = vmul.f32 %v532, %v406
        %v553 = vmul.f32 %v537, %v399
        %v554 = vmul.f32 %v537, %v406
        %556 = vset.pattern.permute.xlu0 0
        %557 = vperm.xlu0 %556, %v491
        %v558 = vpop.permute.xlu0 %557
        %561 = vset.pattern.permute.xlu0 0
        %562 = vperm.xlu0 %561, %v492
        %v563 = vpop.permute.xlu0 %562
        %566 = vset.pattern.permute.xlu0 0
        %567 = vperm.xlu0 %566, %v493
        %v568 = vpop.permute.xlu0 %567
        %571 = vset.pattern.permute.xlu0 0
        %572 = vperm.xlu0 %571, %v494
        %v573 = vpop.permute.xlu0 %572
        %576 = vset.pattern.permute.xlu0 0
        %577 = vperm.xlu0 %576, %v495
        %v578 = vpop.permute.xlu0 %577
        %581 = vset.pattern.permute.xlu0 0
        %582 = vperm.xlu0 %581, %v496
        %v583 = vpop.permute.xlu0 %582
        %586 = vset.pattern.permute.xlu0 0
        %587 = vperm.xlu0 %586, %v497
        %v588 = vpop.permute.xlu0 %587
        %591 = vset.pattern.permute.xlu0 0
        %592 = vperm.xlu0 %591, %v498
        %v593 = vpop.permute.xlu0 %592
        %v595 = vadd.f32 %v539, %v558
        %v596 = vadd.f32 %v540, %v558
        %v597 = vadd.f32 %v541, %v563
        %v598 = vadd.f32 %v542, %v563
        %v599 = vadd.f32 %v543, %v568
        %v600 = vadd.f32 %v544, %v568
        %v601 = vadd.f32 %v545, %v573
        %v602 = vadd.f32 %v546, %v573
        %v603 = vadd.f32 %v547, %v578
        %v604 = vadd.f32 %v548, %v578
        %v605 = vadd.f32 %v549, %v583
        %v606 = vadd.f32 %v550, %v583
        %v607 = vadd.f32 %v551, %v588
        %v608 = vadd.f32 %v552, %v588
        %v609 = vadd.f32 %v553, %v593
        %v610 = vadd.f32 %v554, %v593
        %v611 = vand.u32 2147483647, %v595
        %vm612 = vcmp.le.f32.partialorder %v611, 0.7853982
        %vm613 = vcmp.lt.s32.totalorder %v595, 0
        %v614 = vand.u32 %v595, 2139095040
        %v615 = vshrl.u32 %v614, 23
        %v616 = vsub.s32 %v615, 127
        %v617 = vand.u32 2147483647, %v595
        %v618 = vand.u32 %v617, 8388607
        %v619 = vor.u32 %v618, 8388608
        %v620 = vsub.s32 0, %v619
        %v621 = vadd.s32 %v616, 1
        %vm622 = vcmp.gt.s32.totalorder %v621, 0
        %v623 = vsel %vm622, %v621, 0
        %v624 = vshrl.u32 %v623, 5
        %v625 = vand.u32 %v623, 31
        %v626 = vsub.s32 32, %v625
        %v627 = vshrl.u32 683565275, %v626
        %v628 = vshll.u32 683565275, %v625
        %v629 = vshrl.u32 2475754826, %v626
        %v630 = vor.u32 %v628, %v629
        %v631 = vshll.u32 2475754826, %v625
        %v632 = vshrl.u32 2131351028, %v626
        %v633 = vor.u32 %v631, %v632
        %v634 = vshll.u32 2131351028, %v625
        %v635 = vshrl.u32 2102212464, %v626
        %v636 = vor.u32 %v634, %v635
        %v637 = vshll.u32 2102212464, %v625
        %v638 = vshrl.u32 920167782, %v626
        %v639 = vor.u32 %v637, %v638
        %v640 = vshll.u32 920167782, %v625
        %v641 = vshrl.u32 1326507024, %v626
        %v642 = vor.u32 %v640, %v641
        %vm643 = vcmp.lt.s32.totalorder %v624, 1
        %vm644 = vcmp.lt.s32.totalorder %v624, 2
        %vm645 = vcmp.lt.s32.totalorder %v624, 3
        %vm646 = vcmp.lt.s32.totalorder %v624, 4
        %v647 = vsel %vm643, %v627, %v630
        %v648 = vsel %vm646, %v636, 2102212464
        %v649 = vsel %vm645, %v633, %v648
        %v650 = vsel %vm644, %v647, %v649
        %v651 = vsel %vm643, %v630, %v633
        %v652 = vsel %vm646, %v639, 920167782
        %v653 = vsel %vm645, %v636, %v652
        %v654 = vsel %vm644, %v651, %v653
        %v655 = vsel %vm643, %v633, %v636
        %v656 = vsel %vm646, %v642, 1326507024
        %v657 = vsel %vm645, %v639, %v656
        %v658 = vsel %vm644, %v655, %v657
        %v659 = vshll.u32 %v619, 8
        %v660 = vand.u32 %v659, 65535
        %v661 = vshrl.u32 %v659, 16
        %v662 = vand.u32 %v658, 65535
        %v663 = vshrl.u32 %v658, 16
        %v664 = vmul.u32 %v660, %v662
        %v665 = vmul.u32 %v660, %v663
        %v666 = vmul.u32 %v661, %v662
        %v667 = vmul.u32 %v661, %v663
        %v668 = vshll.u32 %v665, 16
        %v669 = vshrl.u32 %v665, 16
        %v670 = vshll.u32 %v666, 16
        %v671 = vshrl.u32 %v666, 16
        %vm672 = vc.u32 %v664, %v668
        %v673 = vsel %vm672, 1, 0
        %v674 = vadd.s32 %v664, %v668
        %v675 = vadd.s32 %v667, %v673
        %vm676 = vc.u32 %v674, %v670
        %v677 = vsel %vm676, 1, 0
        %v678 = vadd.s32 %v674, %v670
        %v679 = vadd.s32 %v675, %v677
        %v680 = vadd.s32 %v679, %v669
        %v681 = vadd.s32 %v680, %v671
        %v682 = vand.u32 %v659, 65535
        %v683 = vshrl.u32 %v659, 16
        %v684 = vand.u32 %v654, 65535
        %v685 = vshrl.u32 %v654, 16
        %v686 = vmul.u32 %v682, %v684
        %v687 = vmul.u32 %v682, %v685
        %v688 = vmul.u32 %v683, %v684
        %v689 = vmul.u32 %v683, %v685
        %v690 = vshll.u32 %v687, 16
        %v691 = vshrl.u32 %v687, 16
        %v692 = vshll.u32 %v688, 16
        %v693 = vshrl.u32 %v688, 16
        %vm694 = vc.u32 %v686, %v690
        %v695 = vsel %vm694, 1, 0
        %v696 = vadd.s32 %v686, %v690
        %v697 = vadd.s32 %v689, %v695
        %vm698 = vc.u32 %v696, %v692
        %v699 = vsel %vm698, 1, 0
        %v700 = vadd.s32 %v696, %v692
        %v701 = vadd.s32 %v697, %v699
        %v702 = vadd.s32 %v701, %v691
        %v703 = vadd.s32 %v702, %v693
        %v704 = vmul.u32 %v659, %v650
        %v705 = vadd.s32 %v681, %v700
        %vm706 = vc.u32 %v681, %v700
        %v707 = vadd.s32 %v703, 1
        %v708 = vsel %vm706, %v707, %v703
        %v709 = vadd.s32 %v704, %v708
        %v710 = vadd.s32 %v709, 536870912
        %v711 = vshrl.u32 %v710, 30
        %v712 = vshll.u32 %v711, 30
        %v713 = vsub.s32 %v709, %v712
        %vm714 = vcmp.lt.s32.totalorder %v713, 0
        %v715 = vsub.s32 0, %v713
        %v716 = vsel %vm714, %v715, %v713
        %v717 = vclz %v716
        %v718 = vsub.s32 %v717, 2
        %vm719 = vcmp.gt.s32.totalorder 0, %v718
        %v720 = vsel %vm719, 0, %v718
        %v721 = vsub.s32 32, %v720
        %v722 = vshll.u32 %v713, %v720
        %v723 = vshrl.u32 %v705, %v721
        %v724 = vor.u32 %v722, %v723
        %v725 = vsub.s32 4294967266, %v720
        %v726 = vadd.s32 %v725, 127
        %v727 = vshll.u32 %v726, 23
        %v728 = vor.u32 4788187, %v727
        %v729 = vand.u32 2147483647, %v728
        %v731 = vcvt.s32.f32 %v724
        %v732 = vmul.f32 %v731, %v729
        %v733 = vxor.u32 %v732, 2147483648
        %v734 = vsel %vm613, %v733, %v732
        %v735 = vsub.s32 4, %v711
        %v736 = vsel %vm613, %v735, %v711
        %v737 = vsel %vm612, %v595, %v734
        %v738 = vsel %vm612, 0, %v736
        %v739 = vmul.f32 %v737, %v737
        %v740 = vmul.f32 %v739, -0.001358992
        %v741 = vadd.f32 %v740, 0.041655596
        %v742 = vmul.f32 %v739, %v741
        %v743 = vadd.f32 %v742, -0.4999988
        %v744 = vmul.f32 %v739, %v743
        %v745 = vadd.f32 1.0, %v744
        %v746 = vmul.f32 %v737, %v737
        %v747 = vmul.f32 %v746, -0.00019511016
        %v748 = vadd.f32 %v747, 0.008332121
        %v749 = vmul.f32 %v746, %v748
        %v750 = vadd.f32 %v749, -0.16666654
        %v751 = vmul.f32 %v746, %v750
        %v752 = vadd.f32 %v751, 1.0
        %v753 = vmul.f32 %v752, %v737
        %vm754 = vweird.f32 %v595
        %v755 = vadd.s32 %v738, 3
        %v756 = vand.u32 %v755, 3
        %vm757 = vcmp.lt.s32.totalorder %v756, 2
        %vm758 = vcmp.eq.s32.totalorder %v756, 0
        %v759 = vxor.u32 %v753, 2147483648
        %v760 = vsel %vm758, %v745, %v759
        %vm761 = vcmp.eq.s32.totalorder %v756, 2
        %v762 = vxor.u32 %v745, 2147483648
        %v763 = vsel %vm761, %v762, %v753
        %v764 = vsel %vm757, %v760, %v763
        %v765 = vsel %vm754, nan, %v764
        %v766 = vand.u32 2147483647, %v596
        %vm767 = vcmp.le.f32.partialorder %v766, 0.7853982
        %vm768 = vcmp.lt.s32.totalorder %v596, 0
        %v769 = vand.u32 %v596, 2139095040
        %v770 = vshrl.u32 %v769, 23
        %v771 = vsub.s32 %v770, 127
        %v772 = vand.u32 2147483647, %v596
        %v773 = vand.u32 %v772, 8388607
        %v774 = vor.u32 %v773, 8388608
        %v775 = vsub.s32 0, %v774
        %v776 = vadd.s32 %v771, 1
        %vm777 = vcmp.gt.s32.totalorder %v776, 0
        %v778 = vsel %vm777, %v776, 0
        %v779 = vshrl.u32 %v778, 5
        %v780 = vand.u32 %v778, 31
        %v781 = vsub.s32 32, %v780
        %v782 = vshrl.u32 683565275, %v781
        %v783 = vshll.u32 683565275, %v780
        %v784 = vshrl.u32 2475754826, %v781
        %v785 = vor.u32 %v783, %v784
        %v786 = vshll.u32 2475754826, %v780
        %v787 = vshrl.u32 2131351028, %v781
        %v788 = vor.u32 %v786, %v787
        %v789 = vshll.u32 2131351028, %v780
        %v790 = vshrl.u32 2102212464, %v781
        %v791 = vor.u32 %v789, %v790
        %v792 = vshll.u32 2102212464, %v780
        %v793 = vshrl.u32 920167782, %v781
        %v794 = vor.u32 %v792, %v793
        %v795 = vshll.u32 920167782, %v780
        %v796 = vshrl.u32 1326507024, %v781
        %v797 = vor.u32 %v795, %v796
        %vm798 = vcmp.lt.s32.totalorder %v779, 1
        %vm799 = vcmp.lt.s32.totalorder %v779, 2
        %vm800 = vcmp.lt.s32.totalorder %v779, 3
        %vm801 = vcmp.lt.s32.totalorder %v779, 4
        %v802 = vsel %vm798, %v782, %v785
        %v803 = vsel %vm801, %v791, 2102212464
        %v804 = vsel %vm800, %v788, %v803
        %v805 = vsel %vm799, %v802, %v804
        %v806 = vsel %vm798, %v785, %v788
        %v807 = vsel %vm801, %v794, 920167782
        %v808 = vsel %vm800, %v791, %v807
        %v809 = vsel %vm799, %v806, %v808
        %v810 = vsel %vm798, %v788, %v791
        %v811 = vsel %vm801, %v797, 1326507024
        %v812 = vsel %vm800, %v794, %v811
        %v813 = vsel %vm799, %v810, %v812
        %v814 = vshll.u32 %v774, 8
        %v815 = vand.u32 %v814, 65535
        %v816 = vshrl.u32 %v814, 16
        %v817 = vand.u32 %v813, 65535
        %v818 = vshrl.u32 %v813, 16
        %v819 = vmul.u32 %v815, %v817
        %v820 = vmul.u32 %v815, %v818
        %v821 = vmul.u32 %v816, %v817
        %v822 = vmul.u32 %v816, %v818
        %v823 = vshll.u32 %v820, 16
        %v824 = vshrl.u32 %v820, 16
        %v825 = vshll.u32 %v821, 16
        %v826 = vshrl.u32 %v821, 16
        %vm827 = vc.u32 %v819, %v823
        %v828 = vsel %vm827, 1, 0
        %v829 = vadd.s32 %v819, %v823
        %v830 = vadd.s32 %v822, %v828
        %vm831 = vc.u32 %v829, %v825
        %v832 = vsel %vm831, 1, 0
        %v833 = vadd.s32 %v829, %v825
        %v834 = vadd.s32 %v830, %v832
        %v835 = vadd.s32 %v834, %v824
        %v836 = vadd.s32 %v835, %v826
        %v837 = vand.u32 %v814, 65535
        %v838 = vshrl.u32 %v814, 16
        %v839 = vand.u32 %v809, 65535
        %v840 = vshrl.u32 %v809, 16
        %v841 = vmul.u32 %v837, %v839
        %v842 = vmul.u32 %v837, %v840
        %v843 = vmul.u32 %v838, %v839
        %v844 = vmul.u32 %v838, %v840
        %v845 = vshll.u32 %v842, 16
        %v846 = vshrl.u32 %v842, 16
        %v847 = vshll.u32 %v843, 16
        %v848 = vshrl.u32 %v843, 16
        %vm849 = vc.u32 %v841, %v845
        %v850 = vsel %vm849, 1, 0
        %v851 = vadd.s32 %v841, %v845
        %v852 = vadd.s32 %v844, %v850
        %vm853 = vc.u32 %v851, %v847
        %v854 = vsel %vm853, 1, 0
        %v855 = vadd.s32 %v851, %v847
        %v856 = vadd.s32 %v852, %v854
        %v857 = vadd.s32 %v856, %v846
        %v858 = vadd.s32 %v857, %v848
        %v859 = vmul.u32 %v814, %v805
        %v860 = vadd.s32 %v836, %v855
        %vm861 = vc.u32 %v836, %v855
        %v862 = vadd.s32 %v858, 1
        %v863 = vsel %vm861, %v862, %v858
        %v864 = vadd.s32 %v859, %v863
        %v865 = vadd.s32 %v864, 536870912
        %v866 = vshrl.u32 %v865, 30
        %v867 = vshll.u32 %v866, 30
        %v868 = vsub.s32 %v864, %v867
        %vm869 = vcmp.lt.s32.totalorder %v868, 0
        %v870 = vsub.s32 0, %v868
        %v871 = vsel %vm869, %v870, %v868
        %v872 = vclz %v871
        %v873 = vsub.s32 %v872, 2
        %vm874 = vcmp.gt.s32.totalorder 0, %v873
        %v875 = vsel %vm874, 0, %v873
        %v876 = vsub.s32 32, %v875
        %v877 = vshll.u32 %v868, %v875
        %v878 = vshrl.u32 %v860, %v876
        %v879 = vor.u32 %v877, %v878
        %v880 = vsub.s32 4294967266, %v875
        %v881 = vadd.s32 %v880, 127
        %v882 = vshll.u32 %v881, 23
        %v883 = vor.u32 4788187, %v882
        %v884 = vand.u32 2147483647, %v883
        %v886 = vcvt.s32.f32 %v879
        %v887 = vmul.f32 %v886, %v884
        %v888 = vxor.u32 %v887, 2147483648
        %v889 = vsel %vm768, %v888, %v887
        %v890 = vsub.s32 4, %v866
        %v891 = vsel %vm768, %v890, %v866
        %v892 = vsel %vm767, %v596, %v889
        %v893 = vsel %vm767, 0, %v891
        %v894 = vmul.f32 %v892, %v892
        %v895 = vmul.f32 %v894, -0.001358992
        %v896 = vadd.f32 %v895, 0.041655596
        %v897 = vmul.f32 %v894, %v896
        %v898 = vadd.f32 %v897, -0.4999988
        %v899 = vmul.f32 %v894, %v898
        %v900 = vadd.f32 1.0, %v899
        %v901 = vmul.f32 %v892, %v892
        %v902 = vmul.f32 %v901, -0.00019511016
        %v903 = vadd.f32 %v902, 0.008332121
        %v904 = vmul.f32 %v901, %v903
        %v905 = vadd.f32 %v904, -0.16666654
        %v906 = vmul.f32 %v901, %v905
        %v907 = vadd.f32 %v906, 1.0
        %v908 = vmul.f32 %v907, %v892
        %vm909 = vweird.f32 %v596
        %v910 = vadd.s32 %v893, 3
        %v911 = vand.u32 %v910, 3
        %vm912 = vcmp.lt.s32.totalorder %v911, 2
        %vm913 = vcmp.eq.s32.totalorder %v911, 0
        %v914 = vxor.u32 %v908, 2147483648
        %v915 = vsel %vm913, %v900, %v914
        %vm916 = vcmp.eq.s32.totalorder %v911, 2
        %v917 = vxor.u32 %v900, 2147483648
        %v918 = vsel %vm916, %v917, %v908
        %v919 = vsel %vm912, %v915, %v918
        %v920 = vsel %vm909, nan, %v919
        %v921 = vand.u32 2147483647, %v597
        %vm922 = vcmp.le.f32.partialorder %v921, 0.7853982
        %vm923 = vcmp.lt.s32.totalorder %v597, 0
        %v924 = vand.u32 %v597, 2139095040
        %v925 = vshrl.u32 %v924, 23
        %v926 = vsub.s32 %v925, 127
        %v927 = vand.u32 2147483647, %v597
        %v928 = vand.u32 %v927, 8388607
        %v929 = vor.u32 %v928, 8388608
        %v930 = vsub.s32 0, %v929
        %v931 = vadd.s32 %v926, 1
        %vm932 = vcmp.gt.s32.totalorder %v931, 0
        %v933 = vsel %vm932, %v931, 0
        %v934 = vshrl.u32 %v933, 5
        %v935 = vand.u32 %v933, 31
        %v936 = vsub.s32 32, %v935
        %v937 = vshrl.u32 683565275, %v936
        %v938 = vshll.u32 683565275, %v935
        %v939 = vshrl.u32 2475754826, %v936
        %v940 = vor.u32 %v938, %v939
        %v941 = vshll.u32 2475754826, %v935
        %v942 = vshrl.u32 2131351028, %v936
        %v943 = vor.u32 %v941, %v942
        %v944 = vshll.u32 2131351028, %v935
        %v945 = vshrl.u32 2102212464, %v936
        %v946 = vor.u32 %v944, %v945
        %v947 = vshll.u32 2102212464, %v935
        %v948 = vshrl.u32 920167782, %v936
        %v949 = vor.u32 %v947, %v948
        %v950 = vshll.u32 920167782, %v935
        %v951 = vshrl.u32 1326507024, %v936
        %v952 = vor.u32 %v950, %v951
        %vm953 = vcmp.lt.s32.totalorder %v934, 1
        %vm954 = vcmp.lt.s32.totalorder %v934, 2
        %vm955 = vcmp.lt.s32.totalorder %v934, 3
        %vm956 = vcmp.lt.s32.totalorder %v934, 4
        %v957 = vsel %vm953, %v937, %v940
        %v958 = vsel %vm956, %v946, 2102212464
        %v959 = vsel %vm955, %v943, %v958
        %v960 = vsel %vm954, %v957, %v959
        %v961 = vsel %vm953, %v940, %v943
        %v962 = vsel %vm956, %v949, 920167782
        %v963 = vsel %vm955, %v946, %v962
        %v964 = vsel %vm954, %v961, %v963
        %v965 = vsel %vm953, %v943, %v946
        %v966 = vsel %vm956, %v952, 1326507024
        %v967 = vsel %vm955, %v949, %v966
        %v968 = vsel %vm954, %v965, %v967
        %v969 = vshll.u32 %v929, 8
        %v970 = vand.u32 %v969, 65535
        %v971 = vshrl.u32 %v969, 16
        %v972 = vand.u32 %v968, 65535
        %v973 = vshrl.u32 %v968, 16
        %v974 = vmul.u32 %v970, %v972
        %v975 = vmul.u32 %v970, %v973
        %v976 = vmul.u32 %v971, %v972
        %v977 = vmul.u32 %v971, %v973
        %v978 = vshll.u32 %v975, 16
        %v979 = vshrl.u32 %v975, 16
        %v980 = vshll.u32 %v976, 16
        %v981 = vshrl.u32 %v976, 16
        %vm982 = vc.u32 %v974, %v978
        %v983 = vsel %vm982, 1, 0
        %v984 = vadd.s32 %v974, %v978
        %v985 = vadd.s32 %v977, %v983
        %vm986 = vc.u32 %v984, %v980
        %v987 = vsel %vm986, 1, 0
        %v988 = vadd.s32 %v984, %v980
        %v989 = vadd.s32 %v985, %v987
        %v990 = vadd.s32 %v989, %v979
        %v991 = vadd.s32 %v990, %v981
        %v992 = vand.u32 %v969, 65535
        %v993 = vshrl.u32 %v969, 16
        %v994 = vand.u32 %v964, 65535
        %v995 = vshrl.u32 %v964, 16
        %v996 = vmul.u32 %v992, %v994
        %v997 = vmul.u32 %v992, %v995
        %v998 = vmul.u32 %v993, %v994
        %v999 = vmul.u32 %v993, %v995
        %v1000 = vshll.u32 %v997, 16
        %v1001 = vshrl.u32 %v997, 16
        %v1002 = vshll.u32 %v998, 16
        %v1003 = vshrl.u32 %v998, 16
        %vm1004 = vc.u32 %v996, %v1000
        %v1005 = vsel %vm1004, 1, 0
        %v1006 = vadd.s32 %v996, %v1000
        %v1007 = vadd.s32 %v999, %v1005
        %vm1008 = vc.u32 %v1006, %v1002
        %v1009 = vsel %vm1008, 1, 0
        %v1010 = vadd.s32 %v1006, %v1002
        %v1011 = vadd.s32 %v1007, %v1009
        %v1012 = vadd.s32 %v1011, %v1001
        %v1013 = vadd.s32 %v1012, %v1003
        %v1014 = vmul.u32 %v969, %v960
        %v1015 = vadd.s32 %v991, %v1010
        %vm1016 = vc.u32 %v991, %v1010
        %v1017 = vadd.s32 %v1013, 1
        %v1018 = vsel %vm1016, %v1017, %v1013
        %v1019 = vadd.s32 %v1014, %v1018
        %v1020 = vadd.s32 %v1019, 536870912
        %v1021 = vshrl.u32 %v1020, 30
        %v1022 = vshll.u32 %v1021, 30
        %v1023 = vsub.s32 %v1019, %v1022
        %vm1024 = vcmp.lt.s32.totalorder %v1023, 0
        %v1025 = vsub.s32 0, %v1023
        %v1026 = vsel %vm1024, %v1025, %v1023
        %v1027 = vclz %v1026
        %v1028 = vsub.s32 %v1027, 2
        %vm1029 = vcmp.gt.s32.totalorder 0, %v1028
        %v1030 = vsel %vm1029, 0, %v1028
        %v1031 = vsub.s32 32, %v1030
        %v1032 = vshll.u32 %v1023, %v1030
        %v1033 = vshrl.u32 %v1015, %v1031
        %v1034 = vor.u32 %v1032, %v1033
        %v1035 = vsub.s32 4294967266, %v1030
        %v1036 = vadd.s32 %v1035, 127
        %v1037 = vshll.u32 %v1036, 23
        %v1038 = vor.u32 4788187, %v1037
        %v1039 = vand.u32 2147483647, %v1038
        %v1041 = vcvt.s32.f32 %v1034
        %v1042 = vmul.f32 %v1041, %v1039
        %v1043 = vxor.u32 %v1042, 2147483648
        %v1044 = vsel %vm923, %v1043, %v1042
        %v1045 = vsub.s32 4, %v1021
        %v1046 = vsel %vm923, %v1045, %v1021
        %v1047 = vsel %vm922, %v597, %v1044
        %v1048 = vsel %vm922, 0, %v1046
        %v1049 = vmul.f32 %v1047, %v1047
        %v1050 = vmul.f32 %v1049, -0.001358992
        %v1051 = vadd.f32 %v1050, 0.041655596
        %v1052 = vmul.f32 %v1049, %v1051
        %v1053 = vadd.f32 %v1052, -0.4999988
        %v1054 = vmul.f32 %v1049, %v1053
        %v1055 = vadd.f32 1.0, %v1054
        %v1056 = vmul.f32 %v1047, %v1047
        %v1057 = vmul.f32 %v1056, -0.00019511016
        %v1058 = vadd.f32 %v1057, 0.008332121
        %v1059 = vmul.f32 %v1056, %v1058
        %v1060 = vadd.f32 %v1059, -0.16666654
        %v1061 = vmul.f32 %v1056, %v1060
        %v1062 = vadd.f32 %v1061, 1.0
        %v1063 = vmul.f32 %v1062, %v1047
        %vm1064 = vweird.f32 %v597
        %v1065 = vadd.s32 %v1048, 3
        %v1066 = vand.u32 %v1065, 3
        %vm1067 = vcmp.lt.s32.totalorder %v1066, 2
        %vm1068 = vcmp.eq.s32.totalorder %v1066, 0
        %v1069 = vxor.u32 %v1063, 2147483648
        %v1070 = vsel %vm1068, %v1055, %v1069
        %vm1071 = vcmp.eq.s32.totalorder %v1066, 2
        %v1072 = vxor.u32 %v1055, 2147483648
        %v1073 = vsel %vm1071, %v1072, %v1063
        %v1074 = vsel %vm1067, %v1070, %v1073
        %v1075 = vsel %vm1064, nan, %v1074
        %v1076 = vand.u32 2147483647, %v598
        %vm1077 = vcmp.le.f32.partialorder %v1076, 0.7853982
        %vm1078 = vcmp.lt.s32.totalorder %v598, 0
        %v1079 = vand.u32 %v598, 2139095040
        %v1080 = vshrl.u32 %v1079, 23
        %v1081 = vsub.s32 %v1080, 127
        %v1082 = vand.u32 2147483647, %v598
        %v1083 = vand.u32 %v1082, 8388607
        %v1084 = vor.u32 %v1083, 8388608
        %v1085 = vsub.s32 0, %v1084
        %v1086 = vadd.s32 %v1081, 1
        %vm1087 = vcmp.gt.s32.totalorder %v1086, 0
        %v1088 = vsel %vm1087, %v1086, 0
        %v1089 = vshrl.u32 %v1088, 5
        %v1090 = vand.u32 %v1088, 31
        %v1091 = vsub.s32 32, %v1090
        %v1092 = vshrl.u32 683565275, %v1091
        %v1093 = vshll.u32 683565275, %v1090
        %v1094 = vshrl.u32 2475754826, %v1091
        %v1095 = vor.u32 %v1093, %v1094
        %v1096 = vshll.u32 2475754826, %v1090
        %v1097 = vshrl.u32 2131351028, %v1091
        %v1098 = vor.u32 %v1096, %v1097
        %v1099 = vshll.u32 2131351028, %v1090
        %v1100 = vshrl.u32 2102212464, %v1091
        %v1101 = vor.u32 %v1099, %v1100
        %v1102 = vshll.u32 2102212464, %v1090
        %v1103 = vshrl.u32 920167782, %v1091
        %v1104 = vor.u32 %v1102, %v1103
        %v1105 = vshll.u32 920167782, %v1090
        %v1106 = vshrl.u32 1326507024, %v1091
        %v1107 = vor.u32 %v1105, %v1106
        %vm1108 = vcmp.lt.s32.totalorder %v1089, 1
        %vm1109 = vcmp.lt.s32.totalorder %v1089, 2
        %vm1110 = vcmp.lt.s32.totalorder %v1089, 3
        %vm1111 = vcmp.lt.s32.totalorder %v1089, 4
        %v1112 = vsel %vm1108, %v1092, %v1095
        %v1113 = vsel %vm1111, %v1101, 2102212464
        %v1114 = vsel %vm1110, %v1098, %v1113
        %v1115 = vsel %vm1109, %v1112, %v1114
        %v1116 = vsel %vm1108, %v1095, %v1098
        %v1117 = vsel %vm1111, %v1104, 920167782
        %v1118 = vsel %vm1110, %v1101, %v1117
        %v1119 = vsel %vm1109, %v1116, %v1118
        %v1120 = vsel %vm1108, %v1098, %v1101
        %v1121 = vsel %vm1111, %v1107, 1326507024
        %v1122 = vsel %vm1110, %v1104, %v1121
        %v1123 = vsel %vm1109, %v1120, %v1122
        %v1124 = vshll.u32 %v1084, 8
        %v1125 = vand.u32 %v1124, 65535
        %v1126 = vshrl.u32 %v1124, 16
        %v1127 = vand.u32 %v1123, 65535
        %v1128 = vshrl.u32 %v1123, 16
        %v1129 = vmul.u32 %v1125, %v1127
        %v1130 = vmul.u32 %v1125, %v1128
        %v1131 = vmul.u32 %v1126, %v1127
        %v1132 = vmul.u32 %v1126, %v1128
        %v1133 = vshll.u32 %v1130, 16
        %v1134 = vshrl.u32 %v1130, 16
        %v1135 = vshll.u32 %v1131, 16
        %v1136 = vshrl.u32 %v1131, 16
        %vm1137 = vc.u32 %v1129, %v1133
        %v1138 = vsel %vm1137, 1, 0
        %v1139 = vadd.s32 %v1129, %v1133
        %v1140 = vadd.s32 %v1132, %v1138
        %vm1141 = vc.u32 %v1139, %v1135
        %v1142 = vsel %vm1141, 1, 0
        %v1143 = vadd.s32 %v1139, %v1135
        %v1144 = vadd.s32 %v1140, %v1142
        %v1145 = vadd.s32 %v1144, %v1134
        %v1146 = vadd.s32 %v1145, %v1136
        %v1147 = vand.u32 %v1124, 65535
        %v1148 = vshrl.u32 %v1124, 16
        %v1149 = vand.u32 %v1119, 65535
        %v1150 = vshrl.u32 %v1119, 16
        %v1151 = vmul.u32 %v1147, %v1149
        %v1152 = vmul.u32 %v1147, %v1150
        %v1153 = vmul.u32 %v1148, %v1149
        %v1154 = vmul.u32 %v1148, %v1150
        %v1155 = vshll.u32 %v1152, 16
        %v1156 = vshrl.u32 %v1152, 16
        %v1157 = vshll.u32 %v1153, 16
        %v1158 = vshrl.u32 %v1153, 16
        %vm1159 = vc.u32 %v1151, %v1155
        %v1160 = vsel %vm1159, 1, 0
        %v1161 = vadd.s32 %v1151, %v1155
        %v1162 = vadd.s32 %v1154, %v1160
        %vm1163 = vc.u32 %v1161, %v1157
        %v1164 = vsel %vm1163, 1, 0
        %v1165 = vadd.s32 %v1161, %v1157
        %v1166 = vadd.s32 %v1162, %v1164
        %v1167 = vadd.s32 %v1166, %v1156
        %v1168 = vadd.s32 %v1167, %v1158
        %v1169 = vmul.u32 %v1124, %v1115
        %v1170 = vadd.s32 %v1146, %v1165
        %vm1171 = vc.u32 %v1146, %v1165
        %v1172 = vadd.s32 %v1168, 1
        %v1173 = vsel %vm1171, %v1172, %v1168
        %v1174 = vadd.s32 %v1169, %v1173
        %v1175 = vadd.s32 %v1174, 536870912
        %v1176 = vshrl.u32 %v1175, 30
        %v1177 = vshll.u32 %v1176, 30
        %v1178 = vsub.s32 %v1174, %v1177
        %vm1179 = vcmp.lt.s32.totalorder %v1178, 0
        %v1180 = vsub.s32 0, %v1178
        %v1181 = vsel %vm1179, %v1180, %v1178
        %v1182 = vclz %v1181
        %v1183 = vsub.s32 %v1182, 2
        %vm1184 = vcmp.gt.s32.totalorder 0, %v1183
        %v1185 = vsel %vm1184, 0, %v1183
        %v1186 = vsub.s32 32, %v1185
        %v1187 = vshll.u32 %v1178, %v1185
        %v1188 = vshrl.u32 %v1170, %v1186
        %v1189 = vor.u32 %v1187, %v1188
        %v1190 = vsub.s32 4294967266, %v1185
        %v1191 = vadd.s32 %v1190, 127
        %v1192 = vshll.u32 %v1191, 23
        %v1193 = vor.u32 4788187, %v1192
        %v1194 = vand.u32 2147483647, %v1193
        %v1196 = vcvt.s32.f32 %v1189
        %v1197 = vmul.f32 %v1196, %v1194
        %v1198 = vxor.u32 %v1197, 2147483648
        %v1199 = vsel %vm1078, %v1198, %v1197
        %v1200 = vsub.s32 4, %v1176
        %v1201 = vsel %vm1078, %v1200, %v1176
        %v1202 = vsel %vm1077, %v598, %v1199
        %v1203 = vsel %vm1077, 0, %v1201
        %v1204 = vmul.f32 %v1202, %v1202
        %v1205 = vmul.f32 %v1204, -0.001358992
        %v1206 = vadd.f32 %v1205, 0.041655596
        %v1207 = vmul.f32 %v1204, %v1206
        %v1208 = vadd.f32 %v1207, -0.4999988
        %v1209 = vmul.f32 %v1204, %v1208
        %v1210 = vadd.f32 1.0, %v1209
        %v1211 = vmul.f32 %v1202, %v1202
        %v1212 = vmul.f32 %v1211, -0.00019511016
        %v1213 = vadd.f32 %v1212, 0.008332121
        %v1214 = vmul.f32 %v1211, %v1213
        %v1215 = vadd.f32 %v1214, -0.16666654
        %v1216 = vmul.f32 %v1211, %v1215
        %v1217 = vadd.f32 %v1216, 1.0
        %v1218 = vmul.f32 %v1217, %v1202
        %vm1219 = vweird.f32 %v598
        %v1220 = vadd.s32 %v1203, 3
        %v1221 = vand.u32 %v1220, 3
        %vm1222 = vcmp.lt.s32.totalorder %v1221, 2
        %vm1223 = vcmp.eq.s32.totalorder %v1221, 0
        %v1224 = vxor.u32 %v1218, 2147483648
        %v1225 = vsel %vm1223, %v1210, %v1224
        %vm1226 = vcmp.eq.s32.totalorder %v1221, 2
        %v1227 = vxor.u32 %v1210, 2147483648
        %v1228 = vsel %vm1226, %v1227, %v1218
        %v1229 = vsel %vm1222, %v1225, %v1228
        %v1230 = vsel %vm1219, nan, %v1229
        %v1231 = vand.u32 2147483647, %v599
        %vm1232 = vcmp.le.f32.partialorder %v1231, 0.7853982
        %vm1233 = vcmp.lt.s32.totalorder %v599, 0
        %v1234 = vand.u32 %v599, 2139095040
        %v1235 = vshrl.u32 %v1234, 23
        %v1236 = vsub.s32 %v1235, 127
        %v1237 = vand.u32 2147483647, %v599
        %v1238 = vand.u32 %v1237, 8388607
        %v1239 = vor.u32 %v1238, 8388608
        %v1240 = vsub.s32 0, %v1239
        %v1241 = vadd.s32 %v1236, 1
        %vm1242 = vcmp.gt.s32.totalorder %v1241, 0
        %v1243 = vsel %vm1242, %v1241, 0
        %v1244 = vshrl.u32 %v1243, 5
        %v1245 = vand.u32 %v1243, 31
        %v1246 = vsub.s32 32, %v1245
        %v1247 = vshrl.u32 683565275, %v1246
        %v1248 = vshll.u32 683565275, %v1245
        %v1249 = vshrl.u32 2475754826, %v1246
        %v1250 = vor.u32 %v1248, %v1249
        %v1251 = vshll.u32 2475754826, %v1245
        %v1252 = vshrl.u32 2131351028, %v1246
        %v1253 = vor.u32 %v1251, %v1252
        %v1254 = vshll.u32 2131351028, %v1245
        %v1255 = vshrl.u32 2102212464, %v1246
        %v1256 = vor.u32 %v1254, %v1255
        %v1257 = vshll.u32 2102212464, %v1245
        %v1258 = vshrl.u32 920167782, %v1246
        %v1259 = vor.u32 %v1257, %v1258
        %v1260 = vshll.u32 920167782, %v1245
        %v1261 = vshrl.u32 1326507024, %v1246
        %v1262 = vor.u32 %v1260, %v1261
        %vm1263 = vcmp.lt.s32.totalorder %v1244, 1
        %vm1264 = vcmp.lt.s32.totalorder %v1244, 2
        %vm1265 = vcmp.lt.s32.totalorder %v1244, 3
        %vm1266 = vcmp.lt.s32.totalorder %v1244, 4
        %v1267 = vsel %vm1263, %v1247, %v1250
        %v1268 = vsel %vm1266, %v1256, 2102212464
        %v1269 = vsel %vm1265, %v1253, %v1268
        %v1270 = vsel %vm1264, %v1267, %v1269
        %v1271 = vsel %vm1263, %v1250, %v1253
        %v1272 = vsel %vm1266, %v1259, 920167782
        %v1273 = vsel %vm1265, %v1256, %v1272
        %v1274 = vsel %vm1264, %v1271, %v1273
        %v1275 = vsel %vm1263, %v1253, %v1256
        %v1276 = vsel %vm1266, %v1262, 1326507024
        %v1277 = vsel %vm1265, %v1259, %v1276
        %v1278 = vsel %vm1264, %v1275, %v1277
        %v1279 = vshll.u32 %v1239, 8
        %v1280 = vand.u32 %v1279, 65535
        %v1281 = vshrl.u32 %v1279, 16
        %v1282 = vand.u32 %v1278, 65535
        %v1283 = vshrl.u32 %v1278, 16
        %v1284 = vmul.u32 %v1280, %v1282
        %v1285 = vmul.u32 %v1280, %v1283
        %v1286 = vmul.u32 %v1281, %v1282
        %v1287 = vmul.u32 %v1281, %v1283
        %v1288 = vshll.u32 %v1285, 16
        %v1289 = vshrl.u32 %v1285, 16
        %v1290 = vshll.u32 %v1286, 16
        %v1291 = vshrl.u32 %v1286, 16
        %vm1292 = vc.u32 %v1284, %v1288
        %v1293 = vsel %vm1292, 1, 0
        %v1294 = vadd.s32 %v1284, %v1288
        %v1295 = vadd.s32 %v1287, %v1293
        %vm1296 = vc.u32 %v1294, %v1290
        %v1297 = vsel %vm1296, 1, 0
        %v1298 = vadd.s32 %v1294, %v1290
        %v1299 = vadd.s32 %v1295, %v1297
        %v1300 = vadd.s32 %v1299, %v1289
        %v1301 = vadd.s32 %v1300, %v1291
        %v1302 = vand.u32 %v1279, 65535
        %v1303 = vshrl.u32 %v1279, 16
        %v1304 = vand.u32 %v1274, 65535
        %v1305 = vshrl.u32 %v1274, 16
        %v1306 = vmul.u32 %v1302, %v1304
        %v1307 = vmul.u32 %v1302, %v1305
        %v1308 = vmul.u32 %v1303, %v1304
        %v1309 = vmul.u32 %v1303, %v1305
        %v1310 = vshll.u32 %v1307, 16
        %v1311 = vshrl.u32 %v1307, 16
        %v1312 = vshll.u32 %v1308, 16
        %v1313 = vshrl.u32 %v1308, 16
        %vm1314 = vc.u32 %v1306, %v1310
        %v1315 = vsel %vm1314, 1, 0
        %v1316 = vadd.s32 %v1306, %v1310
        %v1317 = vadd.s32 %v1309, %v1315
        %vm1318 = vc.u32 %v1316, %v1312
        %v1319 = vsel %vm1318, 1, 0
        %v1320 = vadd.s32 %v1316, %v1312
        %v1321 = vadd.s32 %v1317, %v1319
        %v1322 = vadd.s32 %v1321, %v1311
        %v1323 = vadd.s32 %v1322, %v1313
        %v1324 = vmul.u32 %v1279, %v1270
        %v1325 = vadd.s32 %v1301, %v1320
        %vm1326 = vc.u32 %v1301, %v1320
        %v1327 = vadd.s32 %v1323, 1
        %v1328 = vsel %vm1326, %v1327, %v1323
        %v1329 = vadd.s32 %v1324, %v1328
        %v1330 = vadd.s32 %v1329, 536870912
        %v1331 = vshrl.u32 %v1330, 30
        %v1332 = vshll.u32 %v1331, 30
        %v1333 = vsub.s32 %v1329, %v1332
        %vm1334 = vcmp.lt.s32.totalorder %v1333, 0
        %v1335 = vsub.s32 0, %v1333
        %v1336 = vsel %vm1334, %v1335, %v1333
        %v1337 = vclz %v1336
        %v1338 = vsub.s32 %v1337, 2
        %vm1339 = vcmp.gt.s32.totalorder 0, %v1338
        %v1340 = vsel %vm1339, 0, %v1338
        %v1341 = vsub.s32 32, %v1340
        %v1342 = vshll.u32 %v1333, %v1340
        %v1343 = vshrl.u32 %v1325, %v1341
        %v1344 = vor.u32 %v1342, %v1343
        %v1345 = vsub.s32 4294967266, %v1340
        %v1346 = vadd.s32 %v1345, 127
        %v1347 = vshll.u32 %v1346, 23
        %v1348 = vor.u32 4788187, %v1347
        %v1349 = vand.u32 2147483647, %v1348
        %v1351 = vcvt.s32.f32 %v1344
        %v1352 = vmul.f32 %v1351, %v1349
        %v1353 = vxor.u32 %v1352, 2147483648
        %v1354 = vsel %vm1233, %v1353, %v1352
        %v1355 = vsub.s32 4, %v1331
        %v1356 = vsel %vm1233, %v1355, %v1331
        %v1357 = vsel %vm1232, %v599, %v1354
        %v1358 = vsel %vm1232, 0, %v1356
        %v1359 = vmul.f32 %v1357, %v1357
        %v1360 = vmul.f32 %v1359, -0.001358992
        %v1361 = vadd.f32 %v1360, 0.041655596
        %v1362 = vmul.f32 %v1359, %v1361
        %v1363 = vadd.f32 %v1362, -0.4999988
        %v1364 = vmul.f32 %v1359, %v1363
        %v1365 = vadd.f32 1.0, %v1364
        %v1366 = vmul.f32 %v1357, %v1357
        %v1367 = vmul.f32 %v1366, -0.00019511016
        %v1368 = vadd.f32 %v1367, 0.008332121
        %v1369 = vmul.f32 %v1366, %v1368
        %v1370 = vadd.f32 %v1369, -0.16666654
        %v1371 = vmul.f32 %v1366, %v1370
        %v1372 = vadd.f32 %v1371, 1.0
        %v1373 = vmul.f32 %v1372, %v1357
        %vm1374 = vweird.f32 %v599
        %v1375 = vadd.s32 %v1358, 3
        %v1376 = vand.u32 %v1375, 3
        %vm1377 = vcmp.lt.s32.totalorder %v1376, 2
        %vm1378 = vcmp.eq.s32.totalorder %v1376, 0
        %v1379 = vxor.u32 %v1373, 2147483648
        %v1380 = vsel %vm1378, %v1365, %v1379
        %vm1381 = vcmp.eq.s32.totalorder %v1376, 2
        %v1382 = vxor.u32 %v1365, 2147483648
        %v1383 = vsel %vm1381, %v1382, %v1373
        %v1384 = vsel %vm1377, %v1380, %v1383
        %v1385 = vsel %vm1374, nan, %v1384
        %v1386 = vand.u32 2147483647, %v600
        %vm1387 = vcmp.le.f32.partialorder %v1386, 0.7853982
        %vm1388 = vcmp.lt.s32.totalorder %v600, 0
        %v1389 = vand.u32 %v600, 2139095040
        %v1390 = vshrl.u32 %v1389, 23
        %v1391 = vsub.s32 %v1390, 127
        %v1392 = vand.u32 2147483647, %v600
        %v1393 = vand.u32 %v1392, 8388607
        %v1394 = vor.u32 %v1393, 8388608
        %v1395 = vsub.s32 0, %v1394
        %v1396 = vadd.s32 %v1391, 1
        %vm1397 = vcmp.gt.s32.totalorder %v1396, 0
        %v1398 = vsel %vm1397, %v1396, 0
        %v1399 = vshrl.u32 %v1398, 5
        %v1400 = vand.u32 %v1398, 31
        %v1401 = vsub.s32 32, %v1400
        %v1402 = vshrl.u32 683565275, %v1401
        %v1403 = vshll.u32 683565275, %v1400
        %v1404 = vshrl.u32 2475754826, %v1401
        %v1405 = vor.u32 %v1403, %v1404
        %v1406 = vshll.u32 2475754826, %v1400
        %v1407 = vshrl.u32 2131351028, %v1401
        %v1408 = vor.u32 %v1406, %v1407
        %v1409 = vshll.u32 2131351028, %v1400
        %v1410 = vshrl.u32 2102212464, %v1401
        %v1411 = vor.u32 %v1409, %v1410
        %v1412 = vshll.u32 2102212464, %v1400
        %v1413 = vshrl.u32 920167782, %v1401
        %v1414 = vor.u32 %v1412, %v1413
        %v1415 = vshll.u32 920167782, %v1400
        %v1416 = vshrl.u32 1326507024, %v1401
        %v1417 = vor.u32 %v1415, %v1416
        %vm1418 = vcmp.lt.s32.totalorder %v1399, 1
        %vm1419 = vcmp.lt.s32.totalorder %v1399, 2
        %vm1420 = vcmp.lt.s32.totalorder %v1399, 3
        %vm1421 = vcmp.lt.s32.totalorder %v1399, 4
        %v1422 = vsel %vm1418, %v1402, %v1405
        %v1423 = vsel %vm1421, %v1411, 2102212464
        %v1424 = vsel %vm1420, %v1408, %v1423
        %v1425 = vsel %vm1419, %v1422, %v1424
        %v1426 = vsel %vm1418, %v1405, %v1408
        %v1427 = vsel %vm1421, %v1414, 920167782
        %v1428 = vsel %vm1420, %v1411, %v1427
        %v1429 = vsel %vm1419, %v1426, %v1428
        %v1430 = vsel %vm1418, %v1408, %v1411
        %v1431 = vsel %vm1421, %v1417, 1326507024
        %v1432 = vsel %vm1420, %v1414, %v1431
        %v1433 = vsel %vm1419, %v1430, %v1432
        %v1434 = vshll.u32 %v1394, 8
        %v1435 = vand.u32 %v1434, 65535
        %v1436 = vshrl.u32 %v1434, 16
        %v1437 = vand.u32 %v1433, 65535
        %v1438 = vshrl.u32 %v1433, 16
        %v1439 = vmul.u32 %v1435, %v1437
        %v1440 = vmul.u32 %v1435, %v1438
        %v1441 = vmul.u32 %v1436, %v1437
        %v1442 = vmul.u32 %v1436, %v1438
        %v1443 = vshll.u32 %v1440, 16
        %v1444 = vshrl.u32 %v1440, 16
        %v1445 = vshll.u32 %v1441, 16
        %v1446 = vshrl.u32 %v1441, 16
        %vm1447 = vc.u32 %v1439, %v1443
        %v1448 = vsel %vm1447, 1, 0
        %v1449 = vadd.s32 %v1439, %v1443
        %v1450 = vadd.s32 %v1442, %v1448
        %vm1451 = vc.u32 %v1449, %v1445
        %v1452 = vsel %vm1451, 1, 0
        %v1453 = vadd.s32 %v1449, %v1445
        %v1454 = vadd.s32 %v1450, %v1452
        %v1455 = vadd.s32 %v1454, %v1444
        %v1456 = vadd.s32 %v1455, %v1446
        %v1457 = vand.u32 %v1434, 65535
        %v1458 = vshrl.u32 %v1434, 16
        %v1459 = vand.u32 %v1429, 65535
        %v1460 = vshrl.u32 %v1429, 16
        %v1461 = vmul.u32 %v1457, %v1459
        %v1462 = vmul.u32 %v1457, %v1460
        %v1463 = vmul.u32 %v1458, %v1459
        %v1464 = vmul.u32 %v1458, %v1460
        %v1465 = vshll.u32 %v1462, 16
        %v1466 = vshrl.u32 %v1462, 16
        %v1467 = vshll.u32 %v1463, 16
        %v1468 = vshrl.u32 %v1463, 16
        %vm1469 = vc.u32 %v1461, %v1465
        %v1470 = vsel %vm1469, 1, 0
        %v1471 = vadd.s32 %v1461, %v1465
        %v1472 = vadd.s32 %v1464, %v1470
        %vm1473 = vc.u32 %v1471, %v1467
        %v1474 = vsel %vm1473, 1, 0
        %v1475 = vadd.s32 %v1471, %v1467
        %v1476 = vadd.s32 %v1472, %v1474
        %v1477 = vadd.s32 %v1476, %v1466
        %v1478 = vadd.s32 %v1477, %v1468
        %v1479 = vmul.u32 %v1434, %v1425
        %v1480 = vadd.s32 %v1456, %v1475
        %vm1481 = vc.u32 %v1456, %v1475
        %v1482 = vadd.s32 %v1478, 1
        %v1483 = vsel %vm1481, %v1482, %v1478
        %v1484 = vadd.s32 %v1479, %v1483
        %v1485 = vadd.s32 %v1484, 536870912
        %v1486 = vshrl.u32 %v1485, 30
        %v1487 = vshll.u32 %v1486, 30
        %v1488 = vsub.s32 %v1484, %v1487
        %vm1489 = vcmp.lt.s32.totalorder %v1488, 0
        %v1490 = vsub.s32 0, %v1488
        %v1491 = vsel %vm1489, %v1490, %v1488
        %v1492 = vclz %v1491
        %v1493 = vsub.s32 %v1492, 2
        %vm1494 = vcmp.gt.s32.totalorder 0, %v1493
        %v1495 = vsel %vm1494, 0, %v1493
        %v1496 = vsub.s32 32, %v1495
        %v1497 = vshll.u32 %v1488, %v1495
        %v1498 = vshrl.u32 %v1480, %v1496
        %v1499 = vor.u32 %v1497, %v1498
        %v1500 = vsub.s32 4294967266, %v1495
        %v1501 = vadd.s32 %v1500, 127
        %v1502 = vshll.u32 %v1501, 23
        %v1503 = vor.u32 4788187, %v1502
        %v1504 = vand.u32 2147483647, %v1503
        %v1506 = vcvt.s32.f32 %v1499
        %v1507 = vmul.f32 %v1506, %v1504
        %v1508 = vxor.u32 %v1507, 2147483648
        %v1509 = vsel %vm1388, %v1508, %v1507
        %v1510 = vsub.s32 4, %v1486
        %v1511 = vsel %vm1388, %v1510, %v1486
        %v1512 = vsel %vm1387, %v600, %v1509
        %v1513 = vsel %vm1387, 0, %v1511
        %v1514 = vmul.f32 %v1512, %v1512
        %v1515 = vmul.f32 %v1514, -0.001358992
        %v1516 = vadd.f32 %v1515, 0.041655596
        %v1517 = vmul.f32 %v1514, %v1516
        %v1518 = vadd.f32 %v1517, -0.4999988
        %v1519 = vmul.f32 %v1514, %v1518
        %v1520 = vadd.f32 1.0, %v1519
        %v1521 = vmul.f32 %v1512, %v1512
        %v1522 = vmul.f32 %v1521, -0.00019511016
        %v1523 = vadd.f32 %v1522, 0.008332121
        %v1524 = vmul.f32 %v1521, %v1523
        %v1525 = vadd.f32 %v1524, -0.16666654
        %v1526 = vmul.f32 %v1521, %v1525
        %v1527 = vadd.f32 %v1526, 1.0
        %v1528 = vmul.f32 %v1527, %v1512
        %vm1529 = vweird.f32 %v600
        %v1530 = vadd.s32 %v1513, 3
        %v1531 = vand.u32 %v1530, 3
        %vm1532 = vcmp.lt.s32.totalorder %v1531, 2
        %vm1533 = vcmp.eq.s32.totalorder %v1531, 0
        %v1534 = vxor.u32 %v1528, 2147483648
        %v1535 = vsel %vm1533, %v1520, %v1534
        %vm1536 = vcmp.eq.s32.totalorder %v1531, 2
        %v1537 = vxor.u32 %v1520, 2147483648
        %v1538 = vsel %vm1536, %v1537, %v1528
        %v1539 = vsel %vm1532, %v1535, %v1538
        %v1540 = vsel %vm1529, nan, %v1539
        %v1541 = vand.u32 2147483647, %v601
        %vm1542 = vcmp.le.f32.partialorder %v1541, 0.7853982
        %vm1543 = vcmp.lt.s32.totalorder %v601, 0
        %v1544 = vand.u32 %v601, 2139095040
        %v1545 = vshrl.u32 %v1544, 23
        %v1546 = vsub.s32 %v1545, 127
        %v1547 = vand.u32 2147483647, %v601
        %v1548 = vand.u32 %v1547, 8388607
        %v1549 = vor.u32 %v1548, 8388608
        %v1550 = vsub.s32 0, %v1549
        %v1551 = vadd.s32 %v1546, 1
        %vm1552 = vcmp.gt.s32.totalorder %v1551, 0
        %v1553 = vsel %vm1552, %v1551, 0
        %v1554 = vshrl.u32 %v1553, 5
        %v1555 = vand.u32 %v1553, 31
        %v1556 = vsub.s32 32, %v1555
        %v1557 = vshrl.u32 683565275, %v1556
        %v1558 = vshll.u32 683565275, %v1555
        %v1559 = vshrl.u32 2475754826, %v1556
        %v1560 = vor.u32 %v1558, %v1559
        %v1561 = vshll.u32 2475754826, %v1555
        %v1562 = vshrl.u32 2131351028, %v1556
        %v1563 = vor.u32 %v1561, %v1562
        %v1564 = vshll.u32 2131351028, %v1555
        %v1565 = vshrl.u32 2102212464, %v1556
        %v1566 = vor.u32 %v1564, %v1565
        %v1567 = vshll.u32 2102212464, %v1555
        %v1568 = vshrl.u32 920167782, %v1556
        %v1569 = vor.u32 %v1567, %v1568
        %v1570 = vshll.u32 920167782, %v1555
        %v1571 = vshrl.u32 1326507024, %v1556
        %v1572 = vor.u32 %v1570, %v1571
        %vm1573 = vcmp.lt.s32.totalorder %v1554, 1
        %vm1574 = vcmp.lt.s32.totalorder %v1554, 2
        %vm1575 = vcmp.lt.s32.totalorder %v1554, 3
        %vm1576 = vcmp.lt.s32.totalorder %v1554, 4
        %v1577 = vsel %vm1573, %v1557, %v1560
        %v1578 = vsel %vm1576, %v1566, 2102212464
        %v1579 = vsel %vm1575, %v1563, %v1578
        %v1580 = vsel %vm1574, %v1577, %v1579
        %v1581 = vsel %vm1573, %v1560, %v1563
        %v1582 = vsel %vm1576, %v1569, 920167782
        %v1583 = vsel %vm1575, %v1566, %v1582
        %v1584 = vsel %vm1574, %v1581, %v1583
        %v1585 = vsel %vm1573, %v1563, %v1566
        %v1586 = vsel %vm1576, %v1572, 1326507024
        %v1587 = vsel %vm1575, %v1569, %v1586
        %v1588 = vsel %vm1574, %v1585, %v1587
        %v1589 = vshll.u32 %v1549, 8
        %v1590 = vand.u32 %v1589, 65535
        %v1591 = vshrl.u32 %v1589, 16
        %v1592 = vand.u32 %v1588, 65535
        %v1593 = vshrl.u32 %v1588, 16
        %v1594 = vmul.u32 %v1590, %v1592
        %v1595 = vmul.u32 %v1590, %v1593
        %v1596 = vmul.u32 %v1591, %v1592
        %v1597 = vmul.u32 %v1591, %v1593
        %v1598 = vshll.u32 %v1595, 16
        %v1599 = vshrl.u32 %v1595, 16
        %v1600 = vshll.u32 %v1596, 16
        %v1601 = vshrl.u32 %v1596, 16
        %vm1602 = vc.u32 %v1594, %v1598
        %v1603 = vsel %vm1602, 1, 0
        %v1604 = vadd.s32 %v1594, %v1598
        %v1605 = vadd.s32 %v1597, %v1603
        %vm1606 = vc.u32 %v1604, %v1600
        %v1607 = vsel %vm1606, 1, 0
        %v1608 = vadd.s32 %v1604, %v1600
        %v1609 = vadd.s32 %v1605, %v1607
        %v1610 = vadd.s32 %v1609, %v1599
        %v1611 = vadd.s32 %v1610, %v1601
        %v1612 = vand.u32 %v1589, 65535
        %v1613 = vshrl.u32 %v1589, 16
        %v1614 = vand.u32 %v1584, 65535
        %v1615 = vshrl.u32 %v1584, 16
        %v1616 = vmul.u32 %v1612, %v1614
        %v1617 = vmul.u32 %v1612, %v1615
        %v1618 = vmul.u32 %v1613, %v1614
        %v1619 = vmul.u32 %v1613, %v1615
        %v1620 = vshll.u32 %v1617, 16
        %v1621 = vshrl.u32 %v1617, 16
        %v1622 = vshll.u32 %v1618, 16
        %v1623 = vshrl.u32 %v1618, 16
        %vm1624 = vc.u32 %v1616, %v1620
        %v1625 = vsel %vm1624, 1, 0
        %v1626 = vadd.s32 %v1616, %v1620
        %v1627 = vadd.s32 %v1619, %v1625
        %vm1628 = vc.u32 %v1626, %v1622
        %v1629 = vsel %vm1628, 1, 0
        %v1630 = vadd.s32 %v1626, %v1622
        %v1631 = vadd.s32 %v1627, %v1629
        %v1632 = vadd.s32 %v1631, %v1621
        %v1633 = vadd.s32 %v1632, %v1623
        %v1634 = vmul.u32 %v1589, %v1580
        %v1635 = vadd.s32 %v1611, %v1630
        %vm1636 = vc.u32 %v1611, %v1630
        %v1637 = vadd.s32 %v1633, 1
        %v1638 = vsel %vm1636, %v1637, %v1633
        %v1639 = vadd.s32 %v1634, %v1638
        %v1640 = vadd.s32 %v1639, 536870912
        %v1641 = vshrl.u32 %v1640, 30
        %v1642 = vshll.u32 %v1641, 30
        %v1643 = vsub.s32 %v1639, %v1642
        %vm1644 = vcmp.lt.s32.totalorder %v1643, 0
        %v1645 = vsub.s32 0, %v1643
        %v1646 = vsel %vm1644, %v1645, %v1643
        %v1647 = vclz %v1646
        %v1648 = vsub.s32 %v1647, 2
        %vm1649 = vcmp.gt.s32.totalorder 0, %v1648
        %v1650 = vsel %vm1649, 0, %v1648
        %v1651 = vsub.s32 32, %v1650
        %v1652 = vshll.u32 %v1643, %v1650
        %v1653 = vshrl.u32 %v1635, %v1651
        %v1654 = vor.u32 %v1652, %v1653
        %v1655 = vsub.s32 4294967266, %v1650
        %v1656 = vadd.s32 %v1655, 127
        %v1657 = vshll.u32 %v1656, 23
        %v1658 = vor.u32 4788187, %v1657
        %v1659 = vand.u32 2147483647, %v1658
        %v1661 = vcvt.s32.f32 %v1654
        %v1662 = vmul.f32 %v1661, %v1659
        %v1663 = vxor.u32 %v1662, 2147483648
        %v1664 = vsel %vm1543, %v1663, %v1662
        %v1665 = vsub.s32 4, %v1641
        %v1666 = vsel %vm1543, %v1665, %v1641
        %v1667 = vsel %vm1542, %v601, %v1664
        %v1668 = vsel %vm1542, 0, %v1666
        %v1669 = vmul.f32 %v1667, %v1667
        %v1670 = vmul.f32 %v1669, -0.001358992
        %v1671 = vadd.f32 %v1670, 0.041655596
        %v1672 = vmul.f32 %v1669, %v1671
        %v1673 = vadd.f32 %v1672, -0.4999988
        %v1674 = vmul.f32 %v1669, %v1673
        %v1675 = vadd.f32 1.0, %v1674
        %v1676 = vmul.f32 %v1667, %v1667
        %v1677 = vmul.f32 %v1676, -0.00019511016
        %v1678 = vadd.f32 %v1677, 0.008332121
        %v1679 = vmul.f32 %v1676, %v1678
        %v1680 = vadd.f32 %v1679, -0.16666654
        %v1681 = vmul.f32 %v1676, %v1680
        %v1682 = vadd.f32 %v1681, 1.0
        %v1683 = vmul.f32 %v1682, %v1667
        %vm1684 = vweird.f32 %v601
        %v1685 = vadd.s32 %v1668, 3
        %v1686 = vand.u32 %v1685, 3
        %vm1687 = vcmp.lt.s32.totalorder %v1686, 2
        %vm1688 = vcmp.eq.s32.totalorder %v1686, 0
        %v1689 = vxor.u32 %v1683, 2147483648
        %v1690 = vsel %vm1688, %v1675, %v1689
        %vm1691 = vcmp.eq.s32.totalorder %v1686, 2
        %v1692 = vxor.u32 %v1675, 2147483648
        %v1693 = vsel %vm1691, %v1692, %v1683
        %v1694 = vsel %vm1687, %v1690, %v1693
        %v1695 = vsel %vm1684, nan, %v1694
        %v1696 = vand.u32 2147483647, %v602
        %vm1697 = vcmp.le.f32.partialorder %v1696, 0.7853982
        %vm1698 = vcmp.lt.s32.totalorder %v602, 0
        %v1699 = vand.u32 %v602, 2139095040
        %v1700 = vshrl.u32 %v1699, 23
        %v1701 = vsub.s32 %v1700, 127
        %v1702 = vand.u32 2147483647, %v602
        %v1703 = vand.u32 %v1702, 8388607
        %v1704 = vor.u32 %v1703, 8388608
        %v1705 = vsub.s32 0, %v1704
        %v1706 = vadd.s32 %v1701, 1
        %vm1707 = vcmp.gt.s32.totalorder %v1706, 0
        %v1708 = vsel %vm1707, %v1706, 0
        %v1709 = vshrl.u32 %v1708, 5
        %v1710 = vand.u32 %v1708, 31
        %v1711 = vsub.s32 32, %v1710
        %v1712 = vshrl.u32 683565275, %v1711
        %v1713 = vshll.u32 683565275, %v1710
        %v1714 = vshrl.u32 2475754826, %v1711
        %v1715 = vor.u32 %v1713, %v1714
        %v1716 = vshll.u32 2475754826, %v1710
        %v1717 = vshrl.u32 2131351028, %v1711
        %v1718 = vor.u32 %v1716, %v1717
        %v1719 = vshll.u32 2131351028, %v1710
        %v1720 = vshrl.u32 2102212464, %v1711
        %v1721 = vor.u32 %v1719, %v1720
        %v1722 = vshll.u32 2102212464, %v1710
        %v1723 = vshrl.u32 920167782, %v1711
        %v1724 = vor.u32 %v1722, %v1723
        %v1725 = vshll.u32 920167782, %v1710
        %v1726 = vshrl.u32 1326507024, %v1711
        %v1727 = vor.u32 %v1725, %v1726
        %vm1728 = vcmp.lt.s32.totalorder %v1709, 1
        %vm1729 = vcmp.lt.s32.totalorder %v1709, 2
        %vm1730 = vcmp.lt.s32.totalorder %v1709, 3
        %vm1731 = vcmp.lt.s32.totalorder %v1709, 4
        %v1732 = vsel %vm1728, %v1712, %v1715
        %v1733 = vsel %vm1731, %v1721, 2102212464
        %v1734 = vsel %vm1730, %v1718, %v1733
        %v1735 = vsel %vm1729, %v1732, %v1734
        %v1736 = vsel %vm1728, %v1715, %v1718
        %v1737 = vsel %vm1731, %v1724, 920167782
        %v1738 = vsel %vm1730, %v1721, %v1737
        %v1739 = vsel %vm1729, %v1736, %v1738
        %v1740 = vsel %vm1728, %v1718, %v1721
        %v1741 = vsel %vm1731, %v1727, 1326507024
        %v1742 = vsel %vm1730, %v1724, %v1741
        %v1743 = vsel %vm1729, %v1740, %v1742
        %v1744 = vshll.u32 %v1704, 8
        %v1745 = vand.u32 %v1744, 65535
        %v1746 = vshrl.u32 %v1744, 16
        %v1747 = vand.u32 %v1743, 65535
        %v1748 = vshrl.u32 %v1743, 16
        %v1749 = vmul.u32 %v1745, %v1747
        %v1750 = vmul.u32 %v1745, %v1748
        %v1751 = vmul.u32 %v1746, %v1747
        %v1752 = vmul.u32 %v1746, %v1748
        %v1753 = vshll.u32 %v1750, 16
        %v1754 = vshrl.u32 %v1750, 16
        %v1755 = vshll.u32 %v1751, 16
        %v1756 = vshrl.u32 %v1751, 16
        %vm1757 = vc.u32 %v1749, %v1753
        %v1758 = vsel %vm1757, 1, 0
        %v1759 = vadd.s32 %v1749, %v1753
        %v1760 = vadd.s32 %v1752, %v1758
        %vm1761 = vc.u32 %v1759, %v1755
        %v1762 = vsel %vm1761, 1, 0
        %v1763 = vadd.s32 %v1759, %v1755
        %v1764 = vadd.s32 %v1760, %v1762
        %v1765 = vadd.s32 %v1764, %v1754
        %v1766 = vadd.s32 %v1765, %v1756
        %v1767 = vand.u32 %v1744, 65535
        %v1768 = vshrl.u32 %v1744, 16
        %v1769 = vand.u32 %v1739, 65535
        %v1770 = vshrl.u32 %v1739, 16
        %v1771 = vmul.u32 %v1767, %v1769
        %v1772 = vmul.u32 %v1767, %v1770
        %v1773 = vmul.u32 %v1768, %v1769
        %v1774 = vmul.u32 %v1768, %v1770
        %v1775 = vshll.u32 %v1772, 16
        %v1776 = vshrl.u32 %v1772, 16
        %v1777 = vshll.u32 %v1773, 16
        %v1778 = vshrl.u32 %v1773, 16
        %vm1779 = vc.u32 %v1771, %v1775
        %v1780 = vsel %vm1779, 1, 0
        %v1781 = vadd.s32 %v1771, %v1775
        %v1782 = vadd.s32 %v1774, %v1780
        %vm1783 = vc.u32 %v1781, %v1777
        %v1784 = vsel %vm1783, 1, 0
        %v1785 = vadd.s32 %v1781, %v1777
        %v1786 = vadd.s32 %v1782, %v1784
        %v1787 = vadd.s32 %v1786, %v1776
        %v1788 = vadd.s32 %v1787, %v1778
        %v1789 = vmul.u32 %v1744, %v1735
        %v1790 = vadd.s32 %v1766, %v1785
        %vm1791 = vc.u32 %v1766, %v1785
        %v1792 = vadd.s32 %v1788, 1
        %v1793 = vsel %vm1791, %v1792, %v1788
        %v1794 = vadd.s32 %v1789, %v1793
        %v1795 = vadd.s32 %v1794, 536870912
        %v1796 = vshrl.u32 %v1795, 30
        %v1797 = vshll.u32 %v1796, 30
        %v1798 = vsub.s32 %v1794, %v1797
        %vm1799 = vcmp.lt.s32.totalorder %v1798, 0
        %v1800 = vsub.s32 0, %v1798
        %v1801 = vsel %vm1799, %v1800, %v1798
        %v1802 = vclz %v1801
        %v1803 = vsub.s32 %v1802, 2
        %vm1804 = vcmp.gt.s32.totalorder 0, %v1803
        %v1805 = vsel %vm1804, 0, %v1803
        %v1806 = vsub.s32 32, %v1805
        %v1807 = vshll.u32 %v1798, %v1805
        %v1808 = vshrl.u32 %v1790, %v1806
        %v1809 = vor.u32 %v1807, %v1808
        %v1810 = vsub.s32 4294967266, %v1805
        %v1811 = vadd.s32 %v1810, 127
        %v1812 = vshll.u32 %v1811, 23
        %v1813 = vor.u32 4788187, %v1812
        %v1814 = vand.u32 2147483647, %v1813
        %v1816 = vcvt.s32.f32 %v1809
        %v1817 = vmul.f32 %v1816, %v1814
        %v1818 = vxor.u32 %v1817, 2147483648
        %v1819 = vsel %vm1698, %v1818, %v1817
        %v1820 = vsub.s32 4, %v1796
        %v1821 = vsel %vm1698, %v1820, %v1796
        %v1822 = vsel %vm1697, %v602, %v1819
        %v1823 = vsel %vm1697, 0, %v1821
        %v1824 = vmul.f32 %v1822, %v1822
        %v1825 = vmul.f32 %v1824, -0.001358992
        %v1826 = vadd.f32 %v1825, 0.041655596
        %v1827 = vmul.f32 %v1824, %v1826
        %v1828 = vadd.f32 %v1827, -0.4999988
        %v1829 = vmul.f32 %v1824, %v1828
        %v1830 = vadd.f32 1.0, %v1829
        %v1831 = vmul.f32 %v1822, %v1822
        %v1832 = vmul.f32 %v1831, -0.00019511016
        %v1833 = vadd.f32 %v1832, 0.008332121
        %v1834 = vmul.f32 %v1831, %v1833
        %v1835 = vadd.f32 %v1834, -0.16666654
        %v1836 = vmul.f32 %v1831, %v1835
        %v1837 = vadd.f32 %v1836, 1.0
        %v1838 = vmul.f32 %v1837, %v1822
        %vm1839 = vweird.f32 %v602
        %v1840 = vadd.s32 %v1823, 3
        %v1841 = vand.u32 %v1840, 3
        %vm1842 = vcmp.lt.s32.totalorder %v1841, 2
        %vm1843 = vcmp.eq.s32.totalorder %v1841, 0
        %v1844 = vxor.u32 %v1838, 2147483648
        %v1845 = vsel %vm1843, %v1830, %v1844
        %vm1846 = vcmp.eq.s32.totalorder %v1841, 2
        %v1847 = vxor.u32 %v1830, 2147483648
        %v1848 = vsel %vm1846, %v1847, %v1838
        %v1849 = vsel %vm1842, %v1845, %v1848
        %v1850 = vsel %vm1839, nan, %v1849
        %v1851 = vand.u32 2147483647, %v603
        %vm1852 = vcmp.le.f32.partialorder %v1851, 0.7853982
        %vm1853 = vcmp.lt.s32.totalorder %v603, 0
        %v1854 = vand.u32 %v603, 2139095040
        %v1855 = vshrl.u32 %v1854, 23
        %v1856 = vsub.s32 %v1855, 127
        %v1857 = vand.u32 2147483647, %v603
        %v1858 = vand.u32 %v1857, 8388607
        %v1859 = vor.u32 %v1858, 8388608
        %v1860 = vsub.s32 0, %v1859
        %v1861 = vadd.s32 %v1856, 1
        %vm1862 = vcmp.gt.s32.totalorder %v1861, 0
        %v1863 = vsel %vm1862, %v1861, 0
        %v1864 = vshrl.u32 %v1863, 5
        %v1865 = vand.u32 %v1863, 31
        %v1866 = vsub.s32 32, %v1865
        %v1867 = vshrl.u32 683565275, %v1866
        %v1868 = vshll.u32 683565275, %v1865
        %v1869 = vshrl.u32 2475754826, %v1866
        %v1870 = vor.u32 %v1868, %v1869
        %v1871 = vshll.u32 2475754826, %v1865
        %v1872 = vshrl.u32 2131351028, %v1866
        %v1873 = vor.u32 %v1871, %v1872
        %v1874 = vshll.u32 2131351028, %v1865
        %v1875 = vshrl.u32 2102212464, %v1866
        %v1876 = vor.u32 %v1874, %v1875
        %v1877 = vshll.u32 2102212464, %v1865
        %v1878 = vshrl.u32 920167782, %v1866
        %v1879 = vor.u32 %v1877, %v1878
        %v1880 = vshll.u32 920167782, %v1865
        %v1881 = vshrl.u32 1326507024, %v1866
        %v1882 = vor.u32 %v1880, %v1881
        %vm1883 = vcmp.lt.s32.totalorder %v1864, 1
        %vm1884 = vcmp.lt.s32.totalorder %v1864, 2
        %vm1885 = vcmp.lt.s32.totalorder %v1864, 3
        %vm1886 = vcmp.lt.s32.totalorder %v1864, 4
        %v1887 = vsel %vm1883, %v1867, %v1870
        %v1888 = vsel %vm1886, %v1876, 2102212464
        %v1889 = vsel %vm1885, %v1873, %v1888
        %v1890 = vsel %vm1884, %v1887, %v1889
        %v1891 = vsel %vm1883, %v1870, %v1873
        %v1892 = vsel %vm1886, %v1879, 920167782
        %v1893 = vsel %vm1885, %v1876, %v1892
        %v1894 = vsel %vm1884, %v1891, %v1893
        %v1895 = vsel %vm1883, %v1873, %v1876
        %v1896 = vsel %vm1886, %v1882, 1326507024
        %v1897 = vsel %vm1885, %v1879, %v1896
        %v1898 = vsel %vm1884, %v1895, %v1897
        %v1899 = vshll.u32 %v1859, 8
        %v1900 = vand.u32 %v1899, 65535
        %v1901 = vshrl.u32 %v1899, 16
        %v1902 = vand.u32 %v1898, 65535
        %v1903 = vshrl.u32 %v1898, 16
        %v1904 = vmul.u32 %v1900, %v1902
        %v1905 = vmul.u32 %v1900, %v1903
        %v1906 = vmul.u32 %v1901, %v1902
        %v1907 = vmul.u32 %v1901, %v1903
        %v1908 = vshll.u32 %v1905, 16
        %v1909 = vshrl.u32 %v1905, 16
        %v1910 = vshll.u32 %v1906, 16
        %v1911 = vshrl.u32 %v1906, 16
        %vm1912 = vc.u32 %v1904, %v1908
        %v1913 = vsel %vm1912, 1, 0
        %v1914 = vadd.s32 %v1904, %v1908
        %v1915 = vadd.s32 %v1907, %v1913
        %vm1916 = vc.u32 %v1914, %v1910
        %v1917 = vsel %vm1916, 1, 0
        %v1918 = vadd.s32 %v1914, %v1910
        %v1919 = vadd.s32 %v1915, %v1917
        %v1920 = vadd.s32 %v1919, %v1909
        %v1921 = vadd.s32 %v1920, %v1911
        %v1922 = vand.u32 %v1899, 65535
        %v1923 = vshrl.u32 %v1899, 16
        %v1924 = vand.u32 %v1894, 65535
        %v1925 = vshrl.u32 %v1894, 16
        %v1926 = vmul.u32 %v1922, %v1924
        %v1927 = vmul.u32 %v1922, %v1925
        %v1928 = vmul.u32 %v1923, %v1924
        %v1929 = vmul.u32 %v1923, %v1925
        %v1930 = vshll.u32 %v1927, 16
        %v1931 = vshrl.u32 %v1927, 16
        %v1932 = vshll.u32 %v1928, 16
        %v1933 = vshrl.u32 %v1928, 16
        %vm1934 = vc.u32 %v1926, %v1930
        %v1935 = vsel %vm1934, 1, 0
        %v1936 = vadd.s32 %v1926, %v1930
        %v1937 = vadd.s32 %v1929, %v1935
        %vm1938 = vc.u32 %v1936, %v1932
        %v1939 = vsel %vm1938, 1, 0
        %v1940 = vadd.s32 %v1936, %v1932
        %v1941 = vadd.s32 %v1937, %v1939
        %v1942 = vadd.s32 %v1941, %v1931
        %v1943 = vadd.s32 %v1942, %v1933
        %v1944 = vmul.u32 %v1899, %v1890
        %v1945 = vadd.s32 %v1921, %v1940
        %vm1946 = vc.u32 %v1921, %v1940
        %v1947 = vadd.s32 %v1943, 1
        %v1948 = vsel %vm1946, %v1947, %v1943
        %v1949 = vadd.s32 %v1944, %v1948
        %v1950 = vadd.s32 %v1949, 536870912
        %v1951 = vshrl.u32 %v1950, 30
        %v1952 = vshll.u32 %v1951, 30
        %v1953 = vsub.s32 %v1949, %v1952
        %vm1954 = vcmp.lt.s32.totalorder %v1953, 0
        %v1955 = vsub.s32 0, %v1953
        %v1956 = vsel %vm1954, %v1955, %v1953
        %v1957 = vclz %v1956
        %v1958 = vsub.s32 %v1957, 2
        %vm1959 = vcmp.gt.s32.totalorder 0, %v1958
        %v1960 = vsel %vm1959, 0, %v1958
        %v1961 = vsub.s32 32, %v1960
        %v1962 = vshll.u32 %v1953, %v1960
        %v1963 = vshrl.u32 %v1945, %v1961
        %v1964 = vor.u32 %v1962, %v1963
        %v1965 = vsub.s32 4294967266, %v1960
        %v1966 = vadd.s32 %v1965, 127
        %v1967 = vshll.u32 %v1966, 23
        %v1968 = vor.u32 4788187, %v1967
        %v1969 = vand.u32 2147483647, %v1968
        %v1971 = vcvt.s32.f32 %v1964
        %v1972 = vmul.f32 %v1971, %v1969
        %v1973 = vxor.u32 %v1972, 2147483648
        %v1974 = vsel %vm1853, %v1973, %v1972
        %v1975 = vsub.s32 4, %v1951
        %v1976 = vsel %vm1853, %v1975, %v1951
        %v1977 = vsel %vm1852, %v603, %v1974
        %v1978 = vsel %vm1852, 0, %v1976
        %v1979 = vmul.f32 %v1977, %v1977
        %v1980 = vmul.f32 %v1979, -0.001358992
        %v1981 = vadd.f32 %v1980, 0.041655596
        %v1982 = vmul.f32 %v1979, %v1981
        %v1983 = vadd.f32 %v1982, -0.4999988
        %v1984 = vmul.f32 %v1979, %v1983
        %v1985 = vadd.f32 1.0, %v1984
        %v1986 = vmul.f32 %v1977, %v1977
        %v1987 = vmul.f32 %v1986, -0.00019511016
        %v1988 = vadd.f32 %v1987, 0.008332121
        %v1989 = vmul.f32 %v1986, %v1988
        %v1990 = vadd.f32 %v1989, -0.16666654
        %v1991 = vmul.f32 %v1986, %v1990
        %v1992 = vadd.f32 %v1991, 1.0
        %v1993 = vmul.f32 %v1992, %v1977
        %vm1994 = vweird.f32 %v603
        %v1995 = vadd.s32 %v1978, 3
        %v1996 = vand.u32 %v1995, 3
        %vm1997 = vcmp.lt.s32.totalorder %v1996, 2
        %vm1998 = vcmp.eq.s32.totalorder %v1996, 0
        %v1999 = vxor.u32 %v1993, 2147483648
        %v2000 = vsel %vm1998, %v1985, %v1999
        %vm2001 = vcmp.eq.s32.totalorder %v1996, 2
        %v2002 = vxor.u32 %v1985, 2147483648
        %v2003 = vsel %vm2001, %v2002, %v1993
        %v2004 = vsel %vm1997, %v2000, %v2003
        %v2005 = vsel %vm1994, nan, %v2004
        %v2006 = vand.u32 2147483647, %v604
        %vm2007 = vcmp.le.f32.partialorder %v2006, 0.7853982
        %vm2008 = vcmp.lt.s32.totalorder %v604, 0
        %v2009 = vand.u32 %v604, 2139095040
        %v2010 = vshrl.u32 %v2009, 23
        %v2011 = vsub.s32 %v2010, 127
        %v2012 = vand.u32 2147483647, %v604
        %v2013 = vand.u32 %v2012, 8388607
        %v2014 = vor.u32 %v2013, 8388608
        %v2015 = vsub.s32 0, %v2014
        %v2016 = vadd.s32 %v2011, 1
        %vm2017 = vcmp.gt.s32.totalorder %v2016, 0
        %v2018 = vsel %vm2017, %v2016, 0
        %v2019 = vshrl.u32 %v2018, 5
        %v2020 = vand.u32 %v2018, 31
        %v2021 = vsub.s32 32, %v2020
        %v2022 = vshrl.u32 683565275, %v2021
        %v2023 = vshll.u32 683565275, %v2020
        %v2024 = vshrl.u32 2475754826, %v2021
        %v2025 = vor.u32 %v2023, %v2024
        %v2026 = vshll.u32 2475754826, %v2020
        %v2027 = vshrl.u32 2131351028, %v2021
        %v2028 = vor.u32 %v2026, %v2027
        %v2029 = vshll.u32 2131351028, %v2020
        %v2030 = vshrl.u32 2102212464, %v2021
        %v2031 = vor.u32 %v2029, %v2030
        %v2032 = vshll.u32 2102212464, %v2020
        %v2033 = vshrl.u32 920167782, %v2021
        %v2034 = vor.u32 %v2032, %v2033
        %v2035 = vshll.u32 920167782, %v2020
        %v2036 = vshrl.u32 1326507024, %v2021
        %v2037 = vor.u32 %v2035, %v2036
        %vm2038 = vcmp.lt.s32.totalorder %v2019, 1
        %vm2039 = vcmp.lt.s32.totalorder %v2019, 2
        %vm2040 = vcmp.lt.s32.totalorder %v2019, 3
        %vm2041 = vcmp.lt.s32.totalorder %v2019, 4
        %v2042 = vsel %vm2038, %v2022, %v2025
        %v2043 = vsel %vm2041, %v2031, 2102212464
        %v2044 = vsel %vm2040, %v2028, %v2043
        %v2045 = vsel %vm2039, %v2042, %v2044
        %v2046 = vsel %vm2038, %v2025, %v2028
        %v2047 = vsel %vm2041, %v2034, 920167782
        %v2048 = vsel %vm2040, %v2031, %v2047
        %v2049 = vsel %vm2039, %v2046, %v2048
        %v2050 = vsel %vm2038, %v2028, %v2031
        %v2051 = vsel %vm2041, %v2037, 1326507024
        %v2052 = vsel %vm2040, %v2034, %v2051
        %v2053 = vsel %vm2039, %v2050, %v2052
        %v2054 = vshll.u32 %v2014, 8
        %v2055 = vand.u32 %v2054, 65535
        %v2056 = vshrl.u32 %v2054, 16
        %v2057 = vand.u32 %v2053, 65535
        %v2058 = vshrl.u32 %v2053, 16
        %v2059 = vmul.u32 %v2055, %v2057
        %v2060 = vmul.u32 %v2055, %v2058
        %v2061 = vmul.u32 %v2056, %v2057
        %v2062 = vmul.u32 %v2056, %v2058
        %v2063 = vshll.u32 %v2060, 16
        %v2064 = vshrl.u32 %v2060, 16
        %v2065 = vshll.u32 %v2061, 16
        %v2066 = vshrl.u32 %v2061, 16
        %vm2067 = vc.u32 %v2059, %v2063
        %v2068 = vsel %vm2067, 1, 0
        %v2069 = vadd.s32 %v2059, %v2063
        %v2070 = vadd.s32 %v2062, %v2068
        %vm2071 = vc.u32 %v2069, %v2065
        %v2072 = vsel %vm2071, 1, 0
        %v2073 = vadd.s32 %v2069, %v2065
        %v2074 = vadd.s32 %v2070, %v2072
        %v2075 = vadd.s32 %v2074, %v2064
        %v2076 = vadd.s32 %v2075, %v2066
        %v2077 = vand.u32 %v2054, 65535
        %v2078 = vshrl.u32 %v2054, 16
        %v2079 = vand.u32 %v2049, 65535
        %v2080 = vshrl.u32 %v2049, 16
        %v2081 = vmul.u32 %v2077, %v2079
        %v2082 = vmul.u32 %v2077, %v2080
        %v2083 = vmul.u32 %v2078, %v2079
        %v2084 = vmul.u32 %v2078, %v2080
        %v2085 = vshll.u32 %v2082, 16
        %v2086 = vshrl.u32 %v2082, 16
        %v2087 = vshll.u32 %v2083, 16
        %v2088 = vshrl.u32 %v2083, 16
        %vm2089 = vc.u32 %v2081, %v2085
        %v2090 = vsel %vm2089, 1, 0
        %v2091 = vadd.s32 %v2081, %v2085
        %v2092 = vadd.s32 %v2084, %v2090
        %vm2093 = vc.u32 %v2091, %v2087
        %v2094 = vsel %vm2093, 1, 0
        %v2095 = vadd.s32 %v2091, %v2087
        %v2096 = vadd.s32 %v2092, %v2094
        %v2097 = vadd.s32 %v2096, %v2086
        %v2098 = vadd.s32 %v2097, %v2088
        %v2099 = vmul.u32 %v2054, %v2045
        %v2100 = vadd.s32 %v2076, %v2095
        %vm2101 = vc.u32 %v2076, %v2095
        %v2102 = vadd.s32 %v2098, 1
        %v2103 = vsel %vm2101, %v2102, %v2098
        %v2104 = vadd.s32 %v2099, %v2103
        %v2105 = vadd.s32 %v2104, 536870912
        %v2106 = vshrl.u32 %v2105, 30
        %v2107 = vshll.u32 %v2106, 30
        %v2108 = vsub.s32 %v2104, %v2107
        %vm2109 = vcmp.lt.s32.totalorder %v2108, 0
        %v2110 = vsub.s32 0, %v2108
        %v2111 = vsel %vm2109, %v2110, %v2108
        %v2112 = vclz %v2111
        %v2113 = vsub.s32 %v2112, 2
        %vm2114 = vcmp.gt.s32.totalorder 0, %v2113
        %v2115 = vsel %vm2114, 0, %v2113
        %v2116 = vsub.s32 32, %v2115
        %v2117 = vshll.u32 %v2108, %v2115
        %v2118 = vshrl.u32 %v2100, %v2116
        %v2119 = vor.u32 %v2117, %v2118
        %v2120 = vsub.s32 4294967266, %v2115
        %v2121 = vadd.s32 %v2120, 127
        %v2122 = vshll.u32 %v2121, 23
        %v2123 = vor.u32 4788187, %v2122
        %v2124 = vand.u32 2147483647, %v2123
        %v2126 = vcvt.s32.f32 %v2119
        %v2127 = vmul.f32 %v2126, %v2124
        %v2128 = vxor.u32 %v2127, 2147483648
        %v2129 = vsel %vm2008, %v2128, %v2127
        %v2130 = vsub.s32 4, %v2106
        %v2131 = vsel %vm2008, %v2130, %v2106
        %v2132 = vsel %vm2007, %v604, %v2129
        %v2133 = vsel %vm2007, 0, %v2131
        %v2134 = vmul.f32 %v2132, %v2132
        %v2135 = vmul.f32 %v2134, -0.001358992
        %v2136 = vadd.f32 %v2135, 0.041655596
        %v2137 = vmul.f32 %v2134, %v2136
        %v2138 = vadd.f32 %v2137, -0.4999988
        %v2139 = vmul.f32 %v2134, %v2138
        %v2140 = vadd.f32 1.0, %v2139
        %v2141 = vmul.f32 %v2132, %v2132
        %v2142 = vmul.f32 %v2141, -0.00019511016
        %v2143 = vadd.f32 %v2142, 0.008332121
        %v2144 = vmul.f32 %v2141, %v2143
        %v2145 = vadd.f32 %v2144, -0.16666654
        %v2146 = vmul.f32 %v2141, %v2145
        %v2147 = vadd.f32 %v2146, 1.0
        %v2148 = vmul.f32 %v2147, %v2132
        %vm2149 = vweird.f32 %v604
        %v2150 = vadd.s32 %v2133, 3
        %v2151 = vand.u32 %v2150, 3
        %vm2152 = vcmp.lt.s32.totalorder %v2151, 2
        %vm2153 = vcmp.eq.s32.totalorder %v2151, 0
        %v2154 = vxor.u32 %v2148, 2147483648
        %v2155 = vsel %vm2153, %v2140, %v2154
        %vm2156 = vcmp.eq.s32.totalorder %v2151, 2
        %v2157 = vxor.u32 %v2140, 2147483648
        %v2158 = vsel %vm2156, %v2157, %v2148
        %v2159 = vsel %vm2152, %v2155, %v2158
        %v2160 = vsel %vm2149, nan, %v2159
        %v2161 = vand.u32 2147483647, %v605
        %vm2162 = vcmp.le.f32.partialorder %v2161, 0.7853982
        %vm2163 = vcmp.lt.s32.totalorder %v605, 0
        %v2164 = vand.u32 %v605, 2139095040
        %v2165 = vshrl.u32 %v2164, 23
        %v2166 = vsub.s32 %v2165, 127
        %v2167 = vand.u32 2147483647, %v605
        %v2168 = vand.u32 %v2167, 8388607
        %v2169 = vor.u32 %v2168, 8388608
        %v2170 = vsub.s32 0, %v2169
        %v2171 = vadd.s32 %v2166, 1
        %vm2172 = vcmp.gt.s32.totalorder %v2171, 0
        %v2173 = vsel %vm2172, %v2171, 0
        %v2174 = vshrl.u32 %v2173, 5
        %v2175 = vand.u32 %v2173, 31
        %v2176 = vsub.s32 32, %v2175
        %v2177 = vshrl.u32 683565275, %v2176
        %v2178 = vshll.u32 683565275, %v2175
        %v2179 = vshrl.u32 2475754826, %v2176
        %v2180 = vor.u32 %v2178, %v2179
        %v2181 = vshll.u32 2475754826, %v2175
        %v2182 = vshrl.u32 2131351028, %v2176
        %v2183 = vor.u32 %v2181, %v2182
        %v2184 = vshll.u32 2131351028, %v2175
        %v2185 = vshrl.u32 2102212464, %v2176
        %v2186 = vor.u32 %v2184, %v2185
        %v2187 = vshll.u32 2102212464, %v2175
        %v2188 = vshrl.u32 920167782, %v2176
        %v2189 = vor.u32 %v2187, %v2188
        %v2190 = vshll.u32 920167782, %v2175
        %v2191 = vshrl.u32 1326507024, %v2176
        %v2192 = vor.u32 %v2190, %v2191
        %vm2193 = vcmp.lt.s32.totalorder %v2174, 1
        %vm2194 = vcmp.lt.s32.totalorder %v2174, 2
        %vm2195 = vcmp.lt.s32.totalorder %v2174, 3
        %vm2196 = vcmp.lt.s32.totalorder %v2174, 4
        %v2197 = vsel %vm2193, %v2177, %v2180
        %v2198 = vsel %vm2196, %v2186, 2102212464
        %v2199 = vsel %vm2195, %v2183, %v2198
        %v2200 = vsel %vm2194, %v2197, %v2199
        %v2201 = vsel %vm2193, %v2180, %v2183
        %v2202 = vsel %vm2196, %v2189, 920167782
        %v2203 = vsel %vm2195, %v2186, %v2202
        %v2204 = vsel %vm2194, %v2201, %v2203
        %v2205 = vsel %vm2193, %v2183, %v2186
        %v2206 = vsel %vm2196, %v2192, 1326507024
        %v2207 = vsel %vm2195, %v2189, %v2206
        %v2208 = vsel %vm2194, %v2205, %v2207
        %v2209 = vshll.u32 %v2169, 8
        %v2210 = vand.u32 %v2209, 65535
        %v2211 = vshrl.u32 %v2209, 16
        %v2212 = vand.u32 %v2208, 65535
        %v2213 = vshrl.u32 %v2208, 16
        %v2214 = vmul.u32 %v2210, %v2212
        %v2215 = vmul.u32 %v2210, %v2213
        %v2216 = vmul.u32 %v2211, %v2212
        %v2217 = vmul.u32 %v2211, %v2213
        %v2218 = vshll.u32 %v2215, 16
        %v2219 = vshrl.u32 %v2215, 16
        %v2220 = vshll.u32 %v2216, 16
        %v2221 = vshrl.u32 %v2216, 16
        %vm2222 = vc.u32 %v2214, %v2218
        %v2223 = vsel %vm2222, 1, 0
        %v2224 = vadd.s32 %v2214, %v2218
        %v2225 = vadd.s32 %v2217, %v2223
        %vm2226 = vc.u32 %v2224, %v2220
        %v2227 = vsel %vm2226, 1, 0
        %v2228 = vadd.s32 %v2224, %v2220
        %v2229 = vadd.s32 %v2225, %v2227
        %v2230 = vadd.s32 %v2229, %v2219
        %v2231 = vadd.s32 %v2230, %v2221
        %v2232 = vand.u32 %v2209, 65535
        %v2233 = vshrl.u32 %v2209, 16
        %v2234 = vand.u32 %v2204, 65535
        %v2235 = vshrl.u32 %v2204, 16
        %v2236 = vmul.u32 %v2232, %v2234
        %v2237 = vmul.u32 %v2232, %v2235
        %v2238 = vmul.u32 %v2233, %v2234
        %v2239 = vmul.u32 %v2233, %v2235
        %v2240 = vshll.u32 %v2237, 16
        %v2241 = vshrl.u32 %v2237, 16
        %v2242 = vshll.u32 %v2238, 16
        %v2243 = vshrl.u32 %v2238, 16
        %vm2244 = vc.u32 %v2236, %v2240
        %v2245 = vsel %vm2244, 1, 0
        %v2246 = vadd.s32 %v2236, %v2240
        %v2247 = vadd.s32 %v2239, %v2245
        %vm2248 = vc.u32 %v2246, %v2242
        %v2249 = vsel %vm2248, 1, 0
        %v2250 = vadd.s32 %v2246, %v2242
        %v2251 = vadd.s32 %v2247, %v2249
        %v2252 = vadd.s32 %v2251, %v2241
        %v2253 = vadd.s32 %v2252, %v2243
        %v2254 = vmul.u32 %v2209, %v2200
        %v2255 = vadd.s32 %v2231, %v2250
        %vm2256 = vc.u32 %v2231, %v2250
        %v2257 = vadd.s32 %v2253, 1
        %v2258 = vsel %vm2256, %v2257, %v2253
        %v2259 = vadd.s32 %v2254, %v2258
        %v2260 = vadd.s32 %v2259, 536870912
        %v2261 = vshrl.u32 %v2260, 30
        %v2262 = vshll.u32 %v2261, 30
        %v2263 = vsub.s32 %v2259, %v2262
        %vm2264 = vcmp.lt.s32.totalorder %v2263, 0
        %v2265 = vsub.s32 0, %v2263
        %v2266 = vsel %vm2264, %v2265, %v2263
        %v2267 = vclz %v2266
        %v2268 = vsub.s32 %v2267, 2
        %vm2269 = vcmp.gt.s32.totalorder 0, %v2268
        %v2270 = vsel %vm2269, 0, %v2268
        %v2271 = vsub.s32 32, %v2270
        %v2272 = vshll.u32 %v2263, %v2270
        %v2273 = vshrl.u32 %v2255, %v2271
        %v2274 = vor.u32 %v2272, %v2273
        %v2275 = vsub.s32 4294967266, %v2270
        %v2276 = vadd.s32 %v2275, 127
        %v2277 = vshll.u32 %v2276, 23
        %v2278 = vor.u32 4788187, %v2277
        %v2279 = vand.u32 2147483647, %v2278
        %v2281 = vcvt.s32.f32 %v2274
        %v2282 = vmul.f32 %v2281, %v2279
        %v2283 = vxor.u32 %v2282, 2147483648
        %v2284 = vsel %vm2163, %v2283, %v2282
        %v2285 = vsub.s32 4, %v2261
        %v2286 = vsel %vm2163, %v2285, %v2261
        %v2287 = vsel %vm2162, %v605, %v2284
        %v2288 = vsel %vm2162, 0, %v2286
        %v2289 = vmul.f32 %v2287, %v2287
        %v2290 = vmul.f32 %v2289, -0.001358992
        %v2291 = vadd.f32 %v2290, 0.041655596
        %v2292 = vmul.f32 %v2289, %v2291
        %v2293 = vadd.f32 %v2292, -0.4999988
        %v2294 = vmul.f32 %v2289, %v2293
        %v2295 = vadd.f32 1.0, %v2294
        %v2296 = vmul.f32 %v2287, %v2287
        %v2297 = vmul.f32 %v2296, -0.00019511016
        %v2298 = vadd.f32 %v2297, 0.008332121
        %v2299 = vmul.f32 %v2296, %v2298
        %v2300 = vadd.f32 %v2299, -0.16666654
        %v2301 = vmul.f32 %v2296, %v2300
        %v2302 = vadd.f32 %v2301, 1.0
        %v2303 = vmul.f32 %v2302, %v2287
        %vm2304 = vweird.f32 %v605
        %v2305 = vadd.s32 %v2288, 3
        %v2306 = vand.u32 %v2305, 3
        %vm2307 = vcmp.lt.s32.totalorder %v2306, 2
        %vm2308 = vcmp.eq.s32.totalorder %v2306, 0
        %v2309 = vxor.u32 %v2303, 2147483648
        %v2310 = vsel %vm2308, %v2295, %v2309
        %vm2311 = vcmp.eq.s32.totalorder %v2306, 2
        %v2312 = vxor.u32 %v2295, 2147483648
        %v2313 = vsel %vm2311, %v2312, %v2303
        %v2314 = vsel %vm2307, %v2310, %v2313
        %v2315 = vsel %vm2304, nan, %v2314
        %v2316 = vand.u32 2147483647, %v606
        %vm2317 = vcmp.le.f32.partialorder %v2316, 0.7853982
        %vm2318 = vcmp.lt.s32.totalorder %v606, 0
        %v2319 = vand.u32 %v606, 2139095040
        %v2320 = vshrl.u32 %v2319, 23
        %v2321 = vsub.s32 %v2320, 127
        %v2322 = vand.u32 2147483647, %v606
        %v2323 = vand.u32 %v2322, 8388607
        %v2324 = vor.u32 %v2323, 8388608
        %v2325 = vsub.s32 0, %v2324
        %v2326 = vadd.s32 %v2321, 1
        %vm2327 = vcmp.gt.s32.totalorder %v2326, 0
        %v2328 = vsel %vm2327, %v2326, 0
        %v2329 = vshrl.u32 %v2328, 5
        %v2330 = vand.u32 %v2328, 31
        %v2331 = vsub.s32 32, %v2330
        %v2332 = vshrl.u32 683565275, %v2331
        %v2333 = vshll.u32 683565275, %v2330
        %v2334 = vshrl.u32 2475754826, %v2331
        %v2335 = vor.u32 %v2333, %v2334
        %v2336 = vshll.u32 2475754826, %v2330
        %v2337 = vshrl.u32 2131351028, %v2331
        %v2338 = vor.u32 %v2336, %v2337
        %v2339 = vshll.u32 2131351028, %v2330
        %v2340 = vshrl.u32 2102212464, %v2331
        %v2341 = vor.u32 %v2339, %v2340
        %v2342 = vshll.u32 2102212464, %v2330
        %v2343 = vshrl.u32 920167782, %v2331
        %v2344 = vor.u32 %v2342, %v2343
        %v2345 = vshll.u32 920167782, %v2330
        %v2346 = vshrl.u32 1326507024, %v2331
        %v2347 = vor.u32 %v2345, %v2346
        %vm2348 = vcmp.lt.s32.totalorder %v2329, 1
        %vm2349 = vcmp.lt.s32.totalorder %v2329, 2
        %vm2350 = vcmp.lt.s32.totalorder %v2329, 3
        %vm2351 = vcmp.lt.s32.totalorder %v2329, 4
        %v2352 = vsel %vm2348, %v2332, %v2335
        %v2353 = vsel %vm2351, %v2341, 2102212464
        %v2354 = vsel %vm2350, %v2338, %v2353
        %v2355 = vsel %vm2349, %v2352, %v2354
        %v2356 = vsel %vm2348, %v2335, %v2338
        %v2357 = vsel %vm2351, %v2344, 920167782
        %v2358 = vsel %vm2350, %v2341, %v2357
        %v2359 = vsel %vm2349, %v2356, %v2358
        %v2360 = vsel %vm2348, %v2338, %v2341
        %v2361 = vsel %vm2351, %v2347, 1326507024
        %v2362 = vsel %vm2350, %v2344, %v2361
        %v2363 = vsel %vm2349, %v2360, %v2362
        %v2364 = vshll.u32 %v2324, 8
        %v2365 = vand.u32 %v2364, 65535
        %v2366 = vshrl.u32 %v2364, 16
        %v2367 = vand.u32 %v2363, 65535
        %v2368 = vshrl.u32 %v2363, 16
        %v2369 = vmul.u32 %v2365, %v2367
        %v2370 = vmul.u32 %v2365, %v2368
        %v2371 = vmul.u32 %v2366, %v2367
        %v2372 = vmul.u32 %v2366, %v2368
        %v2373 = vshll.u32 %v2370, 16
        %v2374 = vshrl.u32 %v2370, 16
        %v2375 = vshll.u32 %v2371, 16
        %v2376 = vshrl.u32 %v2371, 16
        %vm2377 = vc.u32 %v2369, %v2373
        %v2378 = vsel %vm2377, 1, 0
        %v2379 = vadd.s32 %v2369, %v2373
        %v2380 = vadd.s32 %v2372, %v2378
        %vm2381 = vc.u32 %v2379, %v2375
        %v2382 = vsel %vm2381, 1, 0
        %v2383 = vadd.s32 %v2379, %v2375
        %v2384 = vadd.s32 %v2380, %v2382
        %v2385 = vadd.s32 %v2384, %v2374
        %v2386 = vadd.s32 %v2385, %v2376
        %v2387 = vand.u32 %v2364, 65535
        %v2388 = vshrl.u32 %v2364, 16
        %v2389 = vand.u32 %v2359, 65535
        %v2390 = vshrl.u32 %v2359, 16
        %v2391 = vmul.u32 %v2387, %v2389
        %v2392 = vmul.u32 %v2387, %v2390
        %v2393 = vmul.u32 %v2388, %v2389
        %v2394 = vmul.u32 %v2388, %v2390
        %v2395 = vshll.u32 %v2392, 16
        %v2396 = vshrl.u32 %v2392, 16
        %v2397 = vshll.u32 %v2393, 16
        %v2398 = vshrl.u32 %v2393, 16
        %vm2399 = vc.u32 %v2391, %v2395
        %v2400 = vsel %vm2399, 1, 0
        %v2401 = vadd.s32 %v2391, %v2395
        %v2402 = vadd.s32 %v2394, %v2400
        %vm2403 = vc.u32 %v2401, %v2397
        %v2404 = vsel %vm2403, 1, 0
        %v2405 = vadd.s32 %v2401, %v2397
        %v2406 = vadd.s32 %v2402, %v2404
        %v2407 = vadd.s32 %v2406, %v2396
        %v2408 = vadd.s32 %v2407, %v2398
        %v2409 = vmul.u32 %v2364, %v2355
        %v2410 = vadd.s32 %v2386, %v2405
        %vm2411 = vc.u32 %v2386, %v2405
        %v2412 = vadd.s32 %v2408, 1
        %v2413 = vsel %vm2411, %v2412, %v2408
        %v2414 = vadd.s32 %v2409, %v2413
        %v2415 = vadd.s32 %v2414, 536870912
        %v2416 = vshrl.u32 %v2415, 30
        %v2417 = vshll.u32 %v2416, 30
        %v2418 = vsub.s32 %v2414, %v2417
        %vm2419 = vcmp.lt.s32.totalorder %v2418, 0
        %v2420 = vsub.s32 0, %v2418
        %v2421 = vsel %vm2419, %v2420, %v2418
        %v2422 = vclz %v2421
        %v2423 = vsub.s32 %v2422, 2
        %vm2424 = vcmp.gt.s32.totalorder 0, %v2423
        %v2425 = vsel %vm2424, 0, %v2423
        %v2426 = vsub.s32 32, %v2425
        %v2427 = vshll.u32 %v2418, %v2425
        %v2428 = vshrl.u32 %v2410, %v2426
        %v2429 = vor.u32 %v2427, %v2428
        %v2430 = vsub.s32 4294967266, %v2425
        %v2431 = vadd.s32 %v2430, 127
        %v2432 = vshll.u32 %v2431, 23
        %v2433 = vor.u32 4788187, %v2432
        %v2434 = vand.u32 2147483647, %v2433
        %v2436 = vcvt.s32.f32 %v2429
        %v2437 = vmul.f32 %v2436, %v2434
        %v2438 = vxor.u32 %v2437, 2147483648
        %v2439 = vsel %vm2318, %v2438, %v2437
        %v2440 = vsub.s32 4, %v2416
        %v2441 = vsel %vm2318, %v2440, %v2416
        %v2442 = vsel %vm2317, %v606, %v2439
        %v2443 = vsel %vm2317, 0, %v2441
        %v2444 = vmul.f32 %v2442, %v2442
        %v2445 = vmul.f32 %v2444, -0.001358992
        %v2446 = vadd.f32 %v2445, 0.041655596
        %v2447 = vmul.f32 %v2444, %v2446
        %v2448 = vadd.f32 %v2447, -0.4999988
        %v2449 = vmul.f32 %v2444, %v2448
        %v2450 = vadd.f32 1.0, %v2449
        %v2451 = vmul.f32 %v2442, %v2442
        %v2452 = vmul.f32 %v2451, -0.00019511016
        %v2453 = vadd.f32 %v2452, 0.008332121
        %v2454 = vmul.f32 %v2451, %v2453
        %v2455 = vadd.f32 %v2454, -0.16666654
        %v2456 = vmul.f32 %v2451, %v2455
        %v2457 = vadd.f32 %v2456, 1.0
        %v2458 = vmul.f32 %v2457, %v2442
        %vm2459 = vweird.f32 %v606
        %v2460 = vadd.s32 %v2443, 3
        %v2461 = vand.u32 %v2460, 3
        %vm2462 = vcmp.lt.s32.totalorder %v2461, 2
        %vm2463 = vcmp.eq.s32.totalorder %v2461, 0
        %v2464 = vxor.u32 %v2458, 2147483648
        %v2465 = vsel %vm2463, %v2450, %v2464
        %vm2466 = vcmp.eq.s32.totalorder %v2461, 2
        %v2467 = vxor.u32 %v2450, 2147483648
        %v2468 = vsel %vm2466, %v2467, %v2458
        %v2469 = vsel %vm2462, %v2465, %v2468
        %v2470 = vsel %vm2459, nan, %v2469
        %v2471 = vand.u32 2147483647, %v607
        %vm2472 = vcmp.le.f32.partialorder %v2471, 0.7853982
        %vm2473 = vcmp.lt.s32.totalorder %v607, 0
        %v2474 = vand.u32 %v607, 2139095040
        %v2475 = vshrl.u32 %v2474, 23
        %v2476 = vsub.s32 %v2475, 127
        %v2477 = vand.u32 2147483647, %v607
        %v2478 = vand.u32 %v2477, 8388607
        %v2479 = vor.u32 %v2478, 8388608
        %v2480 = vsub.s32 0, %v2479
        %v2481 = vadd.s32 %v2476, 1
        %vm2482 = vcmp.gt.s32.totalorder %v2481, 0
        %v2483 = vsel %vm2482, %v2481, 0
        %v2484 = vshrl.u32 %v2483, 5
        %v2485 = vand.u32 %v2483, 31
        %v2486 = vsub.s32 32, %v2485
        %v2487 = vshrl.u32 683565275, %v2486
        %v2488 = vshll.u32 683565275, %v2485
        %v2489 = vshrl.u32 2475754826, %v2486
        %v2490 = vor.u32 %v2488, %v2489
        %v2491 = vshll.u32 2475754826, %v2485
        %v2492 = vshrl.u32 2131351028, %v2486
        %v2493 = vor.u32 %v2491, %v2492
        %v2494 = vshll.u32 2131351028, %v2485
        %v2495 = vshrl.u32 2102212464, %v2486
        %v2496 = vor.u32 %v2494, %v2495
        %v2497 = vshll.u32 2102212464, %v2485
        %v2498 = vshrl.u32 920167782, %v2486
        %v2499 = vor.u32 %v2497, %v2498
        %v2500 = vshll.u32 920167782, %v2485
        %v2501 = vshrl.u32 1326507024, %v2486
        %v2502 = vor.u32 %v2500, %v2501
        %vm2503 = vcmp.lt.s32.totalorder %v2484, 1
        %vm2504 = vcmp.lt.s32.totalorder %v2484, 2
        %vm2505 = vcmp.lt.s32.totalorder %v2484, 3
        %vm2506 = vcmp.lt.s32.totalorder %v2484, 4
        %v2507 = vsel %vm2503, %v2487, %v2490
        %v2508 = vsel %vm2506, %v2496, 2102212464
        %v2509 = vsel %vm2505, %v2493, %v2508
        %v2510 = vsel %vm2504, %v2507, %v2509
        %v2511 = vsel %vm2503, %v2490, %v2493
        %v2512 = vsel %vm2506, %v2499, 920167782
        %v2513 = vsel %vm2505, %v2496, %v2512
        %v2514 = vsel %vm2504, %v2511, %v2513
        %v2515 = vsel %vm2503, %v2493, %v2496
        %v2516 = vsel %vm2506, %v2502, 1326507024
        %v2517 = vsel %vm2505, %v2499, %v2516
        %v2518 = vsel %vm2504, %v2515, %v2517
        %v2519 = vshll.u32 %v2479, 8
        %v2520 = vand.u32 %v2519, 65535
        %v2521 = vshrl.u32 %v2519, 16
        %v2522 = vand.u32 %v2518, 65535
        %v2523 = vshrl.u32 %v2518, 16
        %v2524 = vmul.u32 %v2520, %v2522
        %v2525 = vmul.u32 %v2520, %v2523
        %v2526 = vmul.u32 %v2521, %v2522
        %v2527 = vmul.u32 %v2521, %v2523
        %v2528 = vshll.u32 %v2525, 16
        %v2529 = vshrl.u32 %v2525, 16
        %v2530 = vshll.u32 %v2526, 16
        %v2531 = vshrl.u32 %v2526, 16
        %vm2532 = vc.u32 %v2524, %v2528
        %v2533 = vsel %vm2532, 1, 0
        %v2534 = vadd.s32 %v2524, %v2528
        %v2535 = vadd.s32 %v2527, %v2533
        %vm2536 = vc.u32 %v2534, %v2530
        %v2537 = vsel %vm2536, 1, 0
        %v2538 = vadd.s32 %v2534, %v2530
        %v2539 = vadd.s32 %v2535, %v2537
        %v2540 = vadd.s32 %v2539, %v2529
        %v2541 = vadd.s32 %v2540, %v2531
        %v2542 = vand.u32 %v2519, 65535
        %v2543 = vshrl.u32 %v2519, 16
        %v2544 = vand.u32 %v2514, 65535
        %v2545 = vshrl.u32 %v2514, 16
        %v2546 = vmul.u32 %v2542, %v2544
        %v2547 = vmul.u32 %v2542, %v2545
        %v2548 = vmul.u32 %v2543, %v2544
        %v2549 = vmul.u32 %v2543, %v2545
        %v2550 = vshll.u32 %v2547, 16
        %v2551 = vshrl.u32 %v2547, 16
        %v2552 = vshll.u32 %v2548, 16
        %v2553 = vshrl.u32 %v2548, 16
        %vm2554 = vc.u32 %v2546, %v2550
        %v2555 = vsel %vm2554, 1, 0
        %v2556 = vadd.s32 %v2546, %v2550
        %v2557 = vadd.s32 %v2549, %v2555
        %vm2558 = vc.u32 %v2556, %v2552
        %v2559 = vsel %vm2558, 1, 0
        %v2560 = vadd.s32 %v2556, %v2552
        %v2561 = vadd.s32 %v2557, %v2559
        %v2562 = vadd.s32 %v2561, %v2551
        %v2563 = vadd.s32 %v2562, %v2553
        %v2564 = vmul.u32 %v2519, %v2510
        %v2565 = vadd.s32 %v2541, %v2560
        %vm2566 = vc.u32 %v2541, %v2560
        %v2567 = vadd.s32 %v2563, 1
        %v2568 = vsel %vm2566, %v2567, %v2563
        %v2569 = vadd.s32 %v2564, %v2568
        %v2570 = vadd.s32 %v2569, 536870912
        %v2571 = vshrl.u32 %v2570, 30
        %v2572 = vshll.u32 %v2571, 30
        %v2573 = vsub.s32 %v2569, %v2572
        %vm2574 = vcmp.lt.s32.totalorder %v2573, 0
        %v2575 = vsub.s32 0, %v2573
        %v2576 = vsel %vm2574, %v2575, %v2573
        %v2577 = vclz %v2576
        %v2578 = vsub.s32 %v2577, 2
        %vm2579 = vcmp.gt.s32.totalorder 0, %v2578
        %v2580 = vsel %vm2579, 0, %v2578
        %v2581 = vsub.s32 32, %v2580
        %v2582 = vshll.u32 %v2573, %v2580
        %v2583 = vshrl.u32 %v2565, %v2581
        %v2584 = vor.u32 %v2582, %v2583
        %v2585 = vsub.s32 4294967266, %v2580
        %v2586 = vadd.s32 %v2585, 127
        %v2587 = vshll.u32 %v2586, 23
        %v2588 = vor.u32 4788187, %v2587
        %v2589 = vand.u32 2147483647, %v2588
        %v2591 = vcvt.s32.f32 %v2584
        %v2592 = vmul.f32 %v2591, %v2589
        %v2593 = vxor.u32 %v2592, 2147483648
        %v2594 = vsel %vm2473, %v2593, %v2592
        %v2595 = vsub.s32 4, %v2571
        %v2596 = vsel %vm2473, %v2595, %v2571
        %v2597 = vsel %vm2472, %v607, %v2594
        %v2598 = vsel %vm2472, 0, %v2596
        %v2599 = vmul.f32 %v2597, %v2597
        %v2600 = vmul.f32 %v2599, -0.001358992
        %v2601 = vadd.f32 %v2600, 0.041655596
        %v2602 = vmul.f32 %v2599, %v2601
        %v2603 = vadd.f32 %v2602, -0.4999988
        %v2604 = vmul.f32 %v2599, %v2603
        %v2605 = vadd.f32 1.0, %v2604
        %v2606 = vmul.f32 %v2597, %v2597
        %v2607 = vmul.f32 %v2606, -0.00019511016
        %v2608 = vadd.f32 %v2607, 0.008332121
        %v2609 = vmul.f32 %v2606, %v2608
        %v2610 = vadd.f32 %v2609, -0.16666654
        %v2611 = vmul.f32 %v2606, %v2610
        %v2612 = vadd.f32 %v2611, 1.0
        %v2613 = vmul.f32 %v2612, %v2597
        %vm2614 = vweird.f32 %v607
        %v2615 = vadd.s32 %v2598, 3
        %v2616 = vand.u32 %v2615, 3
        %vm2617 = vcmp.lt.s32.totalorder %v2616, 2
        %vm2618 = vcmp.eq.s32.totalorder %v2616, 0
        %v2619 = vxor.u32 %v2613, 2147483648
        %v2620 = vsel %vm2618, %v2605, %v2619
        %vm2621 = vcmp.eq.s32.totalorder %v2616, 2
        %v2622 = vxor.u32 %v2605, 2147483648
        %v2623 = vsel %vm2621, %v2622, %v2613
        %v2624 = vsel %vm2617, %v2620, %v2623
        %v2625 = vsel %vm2614, nan, %v2624
        %v2626 = vand.u32 2147483647, %v608
        %vm2627 = vcmp.le.f32.partialorder %v2626, 0.7853982
        %vm2628 = vcmp.lt.s32.totalorder %v608, 0
        %v2629 = vand.u32 %v608, 2139095040
        %v2630 = vshrl.u32 %v2629, 23
        %v2631 = vsub.s32 %v2630, 127
        %v2632 = vand.u32 2147483647, %v608
        %v2633 = vand.u32 %v2632, 8388607
        %v2634 = vor.u32 %v2633, 8388608
        %v2635 = vsub.s32 0, %v2634
        %v2636 = vadd.s32 %v2631, 1
        %vm2637 = vcmp.gt.s32.totalorder %v2636, 0
        %v2638 = vsel %vm2637, %v2636, 0
        %v2639 = vshrl.u32 %v2638, 5
        %v2640 = vand.u32 %v2638, 31
        %v2641 = vsub.s32 32, %v2640
        %v2642 = vshrl.u32 683565275, %v2641
        %v2643 = vshll.u32 683565275, %v2640
        %v2644 = vshrl.u32 2475754826, %v2641
        %v2645 = vor.u32 %v2643, %v2644
        %v2646 = vshll.u32 2475754826, %v2640
        %v2647 = vshrl.u32 2131351028, %v2641
        %v2648 = vor.u32 %v2646, %v2647
        %v2649 = vshll.u32 2131351028, %v2640
        %v2650 = vshrl.u32 2102212464, %v2641
        %v2651 = vor.u32 %v2649, %v2650
        %v2652 = vshll.u32 2102212464, %v2640
        %v2653 = vshrl.u32 920167782, %v2641
        %v2654 = vor.u32 %v2652, %v2653
        %v2655 = vshll.u32 920167782, %v2640
        %v2656 = vshrl.u32 1326507024, %v2641
        %v2657 = vor.u32 %v2655, %v2656
        %vm2658 = vcmp.lt.s32.totalorder %v2639, 1
        %vm2659 = vcmp.lt.s32.totalorder %v2639, 2
        %vm2660 = vcmp.lt.s32.totalorder %v2639, 3
        %vm2661 = vcmp.lt.s32.totalorder %v2639, 4
        %v2662 = vsel %vm2658, %v2642, %v2645
        %v2663 = vsel %vm2661, %v2651, 2102212464
        %v2664 = vsel %vm2660, %v2648, %v2663
        %v2665 = vsel %vm2659, %v2662, %v2664
        %v2666 = vsel %vm2658, %v2645, %v2648
        %v2667 = vsel %vm2661, %v2654, 920167782
        %v2668 = vsel %vm2660, %v2651, %v2667
        %v2669 = vsel %vm2659, %v2666, %v2668
        %v2670 = vsel %vm2658, %v2648, %v2651
        %v2671 = vsel %vm2661, %v2657, 1326507024
        %v2672 = vsel %vm2660, %v2654, %v2671
        %v2673 = vsel %vm2659, %v2670, %v2672
        %v2674 = vshll.u32 %v2634, 8
        %v2675 = vand.u32 %v2674, 65535
        %v2676 = vshrl.u32 %v2674, 16
        %v2677 = vand.u32 %v2673, 65535
        %v2678 = vshrl.u32 %v2673, 16
        %v2679 = vmul.u32 %v2675, %v2677
        %v2680 = vmul.u32 %v2675, %v2678
        %v2681 = vmul.u32 %v2676, %v2677
        %v2682 = vmul.u32 %v2676, %v2678
        %v2683 = vshll.u32 %v2680, 16
        %v2684 = vshrl.u32 %v2680, 16
        %v2685 = vshll.u32 %v2681, 16
        %v2686 = vshrl.u32 %v2681, 16
        %vm2687 = vc.u32 %v2679, %v2683
        %v2688 = vsel %vm2687, 1, 0
        %v2689 = vadd.s32 %v2679, %v2683
        %v2690 = vadd.s32 %v2682, %v2688
        %vm2691 = vc.u32 %v2689, %v2685
        %v2692 = vsel %vm2691, 1, 0
        %v2693 = vadd.s32 %v2689, %v2685
        %v2694 = vadd.s32 %v2690, %v2692
        %v2695 = vadd.s32 %v2694, %v2684
        %v2696 = vadd.s32 %v2695, %v2686
        %v2697 = vand.u32 %v2674, 65535
        %v2698 = vshrl.u32 %v2674, 16
        %v2699 = vand.u32 %v2669, 65535
        %v2700 = vshrl.u32 %v2669, 16
        %v2701 = vmul.u32 %v2697, %v2699
        %v2702 = vmul.u32 %v2697, %v2700
        %v2703 = vmul.u32 %v2698, %v2699
        %v2704 = vmul.u32 %v2698, %v2700
        %v2705 = vshll.u32 %v2702, 16
        %v2706 = vshrl.u32 %v2702, 16
        %v2707 = vshll.u32 %v2703, 16
        %v2708 = vshrl.u32 %v2703, 16
        %vm2709 = vc.u32 %v2701, %v2705
        %v2710 = vsel %vm2709, 1, 0
        %v2711 = vadd.s32 %v2701, %v2705
        %v2712 = vadd.s32 %v2704, %v2710
        %vm2713 = vc.u32 %v2711, %v2707
        %v2714 = vsel %vm2713, 1, 0
        %v2715 = vadd.s32 %v2711, %v2707
        %v2716 = vadd.s32 %v2712, %v2714
        %v2717 = vadd.s32 %v2716, %v2706
        %v2718 = vadd.s32 %v2717, %v2708
        %v2719 = vmul.u32 %v2674, %v2665
        %v2720 = vadd.s32 %v2696, %v2715
        %vm2721 = vc.u32 %v2696, %v2715
        %v2722 = vadd.s32 %v2718, 1
        %v2723 = vsel %vm2721, %v2722, %v2718
        %v2724 = vadd.s32 %v2719, %v2723
        %v2725 = vadd.s32 %v2724, 536870912
        %v2726 = vshrl.u32 %v2725, 30
        %v2727 = vshll.u32 %v2726, 30
        %v2728 = vsub.s32 %v2724, %v2727
        %vm2729 = vcmp.lt.s32.totalorder %v2728, 0
        %v2730 = vsub.s32 0, %v2728
        %v2731 = vsel %vm2729, %v2730, %v2728
        %v2732 = vclz %v2731
        %v2733 = vsub.s32 %v2732, 2
        %vm2734 = vcmp.gt.s32.totalorder 0, %v2733
        %v2735 = vsel %vm2734, 0, %v2733
        %v2736 = vsub.s32 32, %v2735
        %v2737 = vshll.u32 %v2728, %v2735
        %v2738 = vshrl.u32 %v2720, %v2736
        %v2739 = vor.u32 %v2737, %v2738
        %v2740 = vsub.s32 4294967266, %v2735
        %v2741 = vadd.s32 %v2740, 127
        %v2742 = vshll.u32 %v2741, 23
        %v2743 = vor.u32 4788187, %v2742
        %v2744 = vand.u32 2147483647, %v2743
        %v2746 = vcvt.s32.f32 %v2739
        %v2747 = vmul.f32 %v2746, %v2744
        %v2748 = vxor.u32 %v2747, 2147483648
        %v2749 = vsel %vm2628, %v2748, %v2747
        %v2750 = vsub.s32 4, %v2726
        %v2751 = vsel %vm2628, %v2750, %v2726
        %v2752 = vsel %vm2627, %v608, %v2749
        %v2753 = vsel %vm2627, 0, %v2751
        %v2754 = vmul.f32 %v2752, %v2752
        %v2755 = vmul.f32 %v2754, -0.001358992
        %v2756 = vadd.f32 %v2755, 0.041655596
        %v2757 = vmul.f32 %v2754, %v2756
        %v2758 = vadd.f32 %v2757, -0.4999988
        %v2759 = vmul.f32 %v2754, %v2758
        %v2760 = vadd.f32 1.0, %v2759
        %v2761 = vmul.f32 %v2752, %v2752
        %v2762 = vmul.f32 %v2761, -0.00019511016
        %v2763 = vadd.f32 %v2762, 0.008332121
        %v2764 = vmul.f32 %v2761, %v2763
        %v2765 = vadd.f32 %v2764, -0.16666654
        %v2766 = vmul.f32 %v2761, %v2765
        %v2767 = vadd.f32 %v2766, 1.0
        %v2768 = vmul.f32 %v2767, %v2752
        %vm2769 = vweird.f32 %v608
        %v2770 = vadd.s32 %v2753, 3
        %v2771 = vand.u32 %v2770, 3
        %vm2772 = vcmp.lt.s32.totalorder %v2771, 2
        %vm2773 = vcmp.eq.s32.totalorder %v2771, 0
        %v2774 = vxor.u32 %v2768, 2147483648
        %v2775 = vsel %vm2773, %v2760, %v2774
        %vm2776 = vcmp.eq.s32.totalorder %v2771, 2
        %v2777 = vxor.u32 %v2760, 2147483648
        %v2778 = vsel %vm2776, %v2777, %v2768
        %v2779 = vsel %vm2772, %v2775, %v2778
        %v2780 = vsel %vm2769, nan, %v2779
        %v2781 = vand.u32 2147483647, %v609
        %vm2782 = vcmp.le.f32.partialorder %v2781, 0.7853982
        %vm2783 = vcmp.lt.s32.totalorder %v609, 0
        %v2784 = vand.u32 %v609, 2139095040
        %v2785 = vshrl.u32 %v2784, 23
        %v2786 = vsub.s32 %v2785, 127
        %v2787 = vand.u32 2147483647, %v609
        %v2788 = vand.u32 %v2787, 8388607
        %v2789 = vor.u32 %v2788, 8388608
        %v2790 = vsub.s32 0, %v2789
        %v2791 = vadd.s32 %v2786, 1
        %vm2792 = vcmp.gt.s32.totalorder %v2791, 0
        %v2793 = vsel %vm2792, %v2791, 0
        %v2794 = vshrl.u32 %v2793, 5
        %v2795 = vand.u32 %v2793, 31
        %v2796 = vsub.s32 32, %v2795
        %v2797 = vshrl.u32 683565275, %v2796
        %v2798 = vshll.u32 683565275, %v2795
        %v2799 = vshrl.u32 2475754826, %v2796
        %v2800 = vor.u32 %v2798, %v2799
        %v2801 = vshll.u32 2475754826, %v2795
        %v2802 = vshrl.u32 2131351028, %v2796
        %v2803 = vor.u32 %v2801, %v2802
        %v2804 = vshll.u32 2131351028, %v2795
        %v2805 = vshrl.u32 2102212464, %v2796
        %v2806 = vor.u32 %v2804, %v2805
        %v2807 = vshll.u32 2102212464, %v2795
        %v2808 = vshrl.u32 920167782, %v2796
        %v2809 = vor.u32 %v2807, %v2808
        %v2810 = vshll.u32 920167782, %v2795
        %v2811 = vshrl.u32 1326507024, %v2796
        %v2812 = vor.u32 %v2810, %v2811
        %vm2813 = vcmp.lt.s32.totalorder %v2794, 1
        %vm2814 = vcmp.lt.s32.totalorder %v2794, 2
        %vm2815 = vcmp.lt.s32.totalorder %v2794, 3
        %vm2816 = vcmp.lt.s32.totalorder %v2794, 4
        %v2817 = vsel %vm2813, %v2797, %v2800
        %v2818 = vsel %vm2816, %v2806, 2102212464
        %v2819 = vsel %vm2815, %v2803, %v2818
        %v2820 = vsel %vm2814, %v2817, %v2819
        %v2821 = vsel %vm2813, %v2800, %v2803
        %v2822 = vsel %vm2816, %v2809, 920167782
        %v2823 = vsel %vm2815, %v2806, %v2822
        %v2824 = vsel %vm2814, %v2821, %v2823
        %v2825 = vsel %vm2813, %v2803, %v2806
        %v2826 = vsel %vm2816, %v2812, 1326507024
        %v2827 = vsel %vm2815, %v2809, %v2826
        %v2828 = vsel %vm2814, %v2825, %v2827
        %v2829 = vshll.u32 %v2789, 8
        %v2830 = vand.u32 %v2829, 65535
        %v2831 = vshrl.u32 %v2829, 16
        %v2832 = vand.u32 %v2828, 65535
        %v2833 = vshrl.u32 %v2828, 16
        %v2834 = vmul.u32 %v2830, %v2832
        %v2835 = vmul.u32 %v2830, %v2833
        %v2836 = vmul.u32 %v2831, %v2832
        %v2837 = vmul.u32 %v2831, %v2833
        %v2838 = vshll.u32 %v2835, 16
        %v2839 = vshrl.u32 %v2835, 16
        %v2840 = vshll.u32 %v2836, 16
        %v2841 = vshrl.u32 %v2836, 16
        %vm2842 = vc.u32 %v2834, %v2838
        %v2843 = vsel %vm2842, 1, 0
        %v2844 = vadd.s32 %v2834, %v2838
        %v2845 = vadd.s32 %v2837, %v2843
        %vm2846 = vc.u32 %v2844, %v2840
        %v2847 = vsel %vm2846, 1, 0
        %v2848 = vadd.s32 %v2844, %v2840
        %v2849 = vadd.s32 %v2845, %v2847
        %v2850 = vadd.s32 %v2849, %v2839
        %v2851 = vadd.s32 %v2850, %v2841
        %v2852 = vand.u32 %v2829, 65535
        %v2853 = vshrl.u32 %v2829, 16
        %v2854 = vand.u32 %v2824, 65535
        %v2855 = vshrl.u32 %v2824, 16
        %v2856 = vmul.u32 %v2852, %v2854
        %v2857 = vmul.u32 %v2852, %v2855
        %v2858 = vmul.u32 %v2853, %v2854
        %v2859 = vmul.u32 %v2853, %v2855
        %v2860 = vshll.u32 %v2857, 16
        %v2861 = vshrl.u32 %v2857, 16
        %v2862 = vshll.u32 %v2858, 16
        %v2863 = vshrl.u32 %v2858, 16
        %vm2864 = vc.u32 %v2856, %v2860
        %v2865 = vsel %vm2864, 1, 0
        %v2866 = vadd.s32 %v2856, %v2860
        %v2867 = vadd.s32 %v2859, %v2865
        %vm2868 = vc.u32 %v2866, %v2862
        %v2869 = vsel %vm2868, 1, 0
        %v2870 = vadd.s32 %v2866, %v2862
        %v2871 = vadd.s32 %v2867, %v2869
        %v2872 = vadd.s32 %v2871, %v2861
        %v2873 = vadd.s32 %v2872, %v2863
        %v2874 = vmul.u32 %v2829, %v2820
        %v2875 = vadd.s32 %v2851, %v2870
        %vm2876 = vc.u32 %v2851, %v2870
        %v2877 = vadd.s32 %v2873, 1
        %v2878 = vsel %vm2876, %v2877, %v2873
        %v2879 = vadd.s32 %v2874, %v2878
        %v2880 = vadd.s32 %v2879, 536870912
        %v2881 = vshrl.u32 %v2880, 30
        %v2882 = vshll.u32 %v2881, 30
        %v2883 = vsub.s32 %v2879, %v2882
        %vm2884 = vcmp.lt.s32.totalorder %v2883, 0
        %v2885 = vsub.s32 0, %v2883
        %v2886 = vsel %vm2884, %v2885, %v2883
        %v2887 = vclz %v2886
        %v2888 = vsub.s32 %v2887, 2
        %vm2889 = vcmp.gt.s32.totalorder 0, %v2888
        %v2890 = vsel %vm2889, 0, %v2888
        %v2891 = vsub.s32 32, %v2890
        %v2892 = vshll.u32 %v2883, %v2890
        %v2893 = vshrl.u32 %v2875, %v2891
        %v2894 = vor.u32 %v2892, %v2893
        %v2895 = vsub.s32 4294967266, %v2890
        %v2896 = vadd.s32 %v2895, 127
        %v2897 = vshll.u32 %v2896, 23
        %v2898 = vor.u32 4788187, %v2897
        %v2899 = vand.u32 2147483647, %v2898
        %v2901 = vcvt.s32.f32 %v2894
        %v2902 = vmul.f32 %v2901, %v2899
        %v2903 = vxor.u32 %v2902, 2147483648
        %v2904 = vsel %vm2783, %v2903, %v2902
        %v2905 = vsub.s32 4, %v2881
        %v2906 = vsel %vm2783, %v2905, %v2881
        %v2907 = vsel %vm2782, %v609, %v2904
        %v2908 = vsel %vm2782, 0, %v2906
        %v2909 = vmul.f32 %v2907, %v2907
        %v2910 = vmul.f32 %v2909, -0.001358992
        %v2911 = vadd.f32 %v2910, 0.041655596
        %v2912 = vmul.f32 %v2909, %v2911
        %v2913 = vadd.f32 %v2912, -0.4999988
        %v2914 = vmul.f32 %v2909, %v2913
        %v2915 = vadd.f32 1.0, %v2914
        %v2916 = vmul.f32 %v2907, %v2907
        %v2917 = vmul.f32 %v2916, -0.00019511016
        %v2918 = vadd.f32 %v2917, 0.008332121
        %v2919 = vmul.f32 %v2916, %v2918
        %v2920 = vadd.f32 %v2919, -0.16666654
        %v2921 = vmul.f32 %v2916, %v2920
        %v2922 = vadd.f32 %v2921, 1.0
        %v2923 = vmul.f32 %v2922, %v2907
        %vm2924 = vweird.f32 %v609
        %v2925 = vadd.s32 %v2908, 3
        %v2926 = vand.u32 %v2925, 3
        %vm2927 = vcmp.lt.s32.totalorder %v2926, 2
        %vm2928 = vcmp.eq.s32.totalorder %v2926, 0
        %v2929 = vxor.u32 %v2923, 2147483648
        %v2930 = vsel %vm2928, %v2915, %v2929
        %vm2931 = vcmp.eq.s32.totalorder %v2926, 2
        %v2932 = vxor.u32 %v2915, 2147483648
        %v2933 = vsel %vm2931, %v2932, %v2923
        %v2934 = vsel %vm2927, %v2930, %v2933
        %v2935 = vsel %vm2924, nan, %v2934
        %v2936 = vand.u32 2147483647, %v610
        %vm2937 = vcmp.le.f32.partialorder %v2936, 0.7853982
        %vm2938 = vcmp.lt.s32.totalorder %v610, 0
        %v2939 = vand.u32 %v610, 2139095040
        %v2940 = vshrl.u32 %v2939, 23
        %v2941 = vsub.s32 %v2940, 127
        %v2942 = vand.u32 2147483647, %v610
        %v2943 = vand.u32 %v2942, 8388607
        %v2944 = vor.u32 %v2943, 8388608
        %v2945 = vsub.s32 0, %v2944
        %v2946 = vadd.s32 %v2941, 1
        %vm2947 = vcmp.gt.s32.totalorder %v2946, 0
        %v2948 = vsel %vm2947, %v2946, 0
        %v2949 = vshrl.u32 %v2948, 5
        %v2950 = vand.u32 %v2948, 31
        %v2951 = vsub.s32 32, %v2950
        %v2952 = vshrl.u32 683565275, %v2951
        %v2953 = vshll.u32 683565275, %v2950
        %v2954 = vshrl.u32 2475754826, %v2951
        %v2955 = vor.u32 %v2953, %v2954
        %v2956 = vshll.u32 2475754826, %v2950
        %v2957 = vshrl.u32 2131351028, %v2951
        %v2958 = vor.u32 %v2956, %v2957
        %v2959 = vshll.u32 2131351028, %v2950
        %v2960 = vshrl.u32 2102212464, %v2951
        %v2961 = vor.u32 %v2959, %v2960
        %v2962 = vshll.u32 2102212464, %v2950
        %v2963 = vshrl.u32 920167782, %v2951
        %v2964 = vor.u32 %v2962, %v2963
        %v2965 = vshll.u32 920167782, %v2950
        %v2966 = vshrl.u32 1326507024, %v2951
        %v2967 = vor.u32 %v2965, %v2966
        %vm2968 = vcmp.lt.s32.totalorder %v2949, 1
        %vm2969 = vcmp.lt.s32.totalorder %v2949, 2
        %vm2970 = vcmp.lt.s32.totalorder %v2949, 3
        %vm2971 = vcmp.lt.s32.totalorder %v2949, 4
        %v2972 = vsel %vm2968, %v2952, %v2955
        %v2973 = vsel %vm2971, %v2961, 2102212464
        %v2974 = vsel %vm2970, %v2958, %v2973
        %v2975 = vsel %vm2969, %v2972, %v2974
        %v2976 = vsel %vm2968, %v2955, %v2958
        %v2977 = vsel %vm2971, %v2964, 920167782
        %v2978 = vsel %vm2970, %v2961, %v2977
        %v2979 = vsel %vm2969, %v2976, %v2978
        %v2980 = vsel %vm2968, %v2958, %v2961
        %v2981 = vsel %vm2971, %v2967, 1326507024
        %v2982 = vsel %vm2970, %v2964, %v2981
        %v2983 = vsel %vm2969, %v2980, %v2982
        %v2984 = vshll.u32 %v2944, 8
        %v2985 = vand.u32 %v2984, 65535
        %v2986 = vshrl.u32 %v2984, 16
        %v2987 = vand.u32 %v2983, 65535
        %v2988 = vshrl.u32 %v2983, 16
        %v2989 = vmul.u32 %v2985, %v2987
        %v2990 = vmul.u32 %v2985, %v2988
        %v2991 = vmul.u32 %v2986, %v2987
        %v2992 = vmul.u32 %v2986, %v2988
        %v2993 = vshll.u32 %v2990, 16
        %v2994 = vshrl.u32 %v2990, 16
        %v2995 = vshll.u32 %v2991, 16
        %v2996 = vshrl.u32 %v2991, 16
        %vm2997 = vc.u32 %v2989, %v2993
        %v2998 = vsel %vm2997, 1, 0
        %v2999 = vadd.s32 %v2989, %v2993
        %v3000 = vadd.s32 %v2992, %v2998
        %vm3001 = vc.u32 %v2999, %v2995
        %v3002 = vsel %vm3001, 1, 0
        %v3003 = vadd.s32 %v2999, %v2995
        %v3004 = vadd.s32 %v3000, %v3002
        %v3005 = vadd.s32 %v3004, %v2994
        %v3006 = vadd.s32 %v3005, %v2996
        %v3007 = vand.u32 %v2984, 65535
        %v3008 = vshrl.u32 %v2984, 16
        %v3009 = vand.u32 %v2979, 65535
        %v3010 = vshrl.u32 %v2979, 16
        %v3011 = vmul.u32 %v3007, %v3009
        %v3012 = vmul.u32 %v3007, %v3010
        %v3013 = vmul.u32 %v3008, %v3009
        %v3014 = vmul.u32 %v3008, %v3010
        %v3015 = vshll.u32 %v3012, 16
        %v3016 = vshrl.u32 %v3012, 16
        %v3017 = vshll.u32 %v3013, 16
        %v3018 = vshrl.u32 %v3013, 16
        %vm3019 = vc.u32 %v3011, %v3015
        %v3020 = vsel %vm3019, 1, 0
        %v3021 = vadd.s32 %v3011, %v3015
        %v3022 = vadd.s32 %v3014, %v3020
        %vm3023 = vc.u32 %v3021, %v3017
        %v3024 = vsel %vm3023, 1, 0
        %v3025 = vadd.s32 %v3021, %v3017
        %v3026 = vadd.s32 %v3022, %v3024
        %v3027 = vadd.s32 %v3026, %v3016
        %v3028 = vadd.s32 %v3027, %v3018
        %v3029 = vmul.u32 %v2984, %v2975
        %v3030 = vadd.s32 %v3006, %v3025
        %vm3031 = vc.u32 %v3006, %v3025
        %v3032 = vadd.s32 %v3028, 1
        %v3033 = vsel %vm3031, %v3032, %v3028
        %v3034 = vadd.s32 %v3029, %v3033
        %v3035 = vadd.s32 %v3034, 536870912
        %v3036 = vshrl.u32 %v3035, 30
        %v3037 = vshll.u32 %v3036, 30
        %v3038 = vsub.s32 %v3034, %v3037
        %vm3039 = vcmp.lt.s32.totalorder %v3038, 0
        %v3040 = vsub.s32 0, %v3038
        %v3041 = vsel %vm3039, %v3040, %v3038
        %v3042 = vclz %v3041
        %v3043 = vsub.s32 %v3042, 2
        %vm3044 = vcmp.gt.s32.totalorder 0, %v3043
        %v3045 = vsel %vm3044, 0, %v3043
        %v3046 = vsub.s32 32, %v3045
        %v3047 = vshll.u32 %v3038, %v3045
        %v3048 = vshrl.u32 %v3030, %v3046
        %v3049 = vor.u32 %v3047, %v3048
        %v3050 = vsub.s32 4294967266, %v3045
        %v3051 = vadd.s32 %v3050, 127
        %v3052 = vshll.u32 %v3051, 23
        %v3053 = vor.u32 4788187, %v3052
        %v3054 = vand.u32 2147483647, %v3053
        %v3056 = vcvt.s32.f32 %v3049
        %v3057 = vmul.f32 %v3056, %v3054
        %v3058 = vxor.u32 %v3057, 2147483648
        %v3059 = vsel %vm2938, %v3058, %v3057
        %v3060 = vsub.s32 4, %v3036
        %v3061 = vsel %vm2938, %v3060, %v3036
        %v3062 = vsel %vm2937, %v610, %v3059
        %v3063 = vsel %vm2937, 0, %v3061
        %v3064 = vmul.f32 %v3062, %v3062
        %v3065 = vmul.f32 %v3064, -0.001358992
        %v3066 = vadd.f32 %v3065, 0.041655596
        %v3067 = vmul.f32 %v3064, %v3066
        %v3068 = vadd.f32 %v3067, -0.4999988
        %v3069 = vmul.f32 %v3064, %v3068
        %v3070 = vadd.f32 1.0, %v3069
        %v3071 = vmul.f32 %v3062, %v3062
        %v3072 = vmul.f32 %v3071, -0.00019511016
        %v3073 = vadd.f32 %v3072, 0.008332121
        %v3074 = vmul.f32 %v3071, %v3073
        %v3075 = vadd.f32 %v3074, -0.16666654
        %v3076 = vmul.f32 %v3071, %v3075
        %v3077 = vadd.f32 %v3076, 1.0
        %v3078 = vmul.f32 %v3077, %v3062
        %vm3079 = vweird.f32 %v610
        %v3080 = vadd.s32 %v3063, 3
        %v3081 = vand.u32 %v3080, 3
        %vm3082 = vcmp.lt.s32.totalorder %v3081, 2
        %vm3083 = vcmp.eq.s32.totalorder %v3081, 0
        %v3084 = vxor.u32 %v3078, 2147483648
        %v3085 = vsel %vm3083, %v3070, %v3084
        %vm3086 = vcmp.eq.s32.totalorder %v3081, 2
        %v3087 = vxor.u32 %v3070, 2147483648
        %v3088 = vsel %vm3086, %v3087, %v3078
        %v3089 = vsel %vm3082, %v3085, %v3088
        %v3090 = vsel %vm3079, nan, %v3089
        %3091 = vst [vmem:[%s244] sm:$0xff] %v765
        %3092 = vst [vmem:[%s244 + $0x8] sm:$0xff] %v920
        %3093 = vst [vmem:[%s244 + $0x10] sm:$0xff] %v1075
        %3094 = vst [vmem:[%s244 + $0x18] sm:$0xff] %v1230
        %3095 = vst [vmem:[%s244 + $0x20] sm:$0xff] %v1385
        %3096 = vst [vmem:[%s244 + $0x28] sm:$0xff] %v1540
        %3097 = vst [vmem:[%s244 + $0x30] sm:$0xff] %v1695
        %3098 = vst [vmem:[%s244 + $0x38] sm:$0xff] %v1850
        %3099 = vst [vmem:[%s244 + $0x40] sm:$0xff] %v2005
        %3100 = vst [vmem:[%s244 + $0x48] sm:$0xff] %v2160
        %3101 = vst [vmem:[%s244 + $0x50] sm:$0xff] %v2315
        %3102 = vst [vmem:[%s244 + $0x58] sm:$0xff] %v2470
        %3103 = vst [vmem:[%s244 + $0x60] sm:$0xff] %v2625
        %3104 = vst [vmem:[%s244 + $0x68] sm:$0xff] %v2780
        %3105 = vst [vmem:[%s244 + $0x70] sm:$0xff] %v2935
        %3106 = vst [vmem:[%s244 + $0x78] sm:$0xff] %v3090
        %v3107 = vmul.f32 %v502, %v475
        %v3108 = vmul.f32 %v502, %v482
        %v3109 = vmul.f32 %v507, %v475
        %v3110 = vmul.f32 %v507, %v482
        %v3111 = vmul.f32 %v512, %v475
        %v3112 = vmul.f32 %v512, %v482
        %v3113 = vmul.f32 %v517, %v475
        %v3114 = vmul.f32 %v517, %v482
        %v3115 = vmul.f32 %v522, %v475
        %v3116 = vmul.f32 %v522, %v482
        %v3117 = vmul.f32 %v527, %v475
        %v3118 = vmul.f32 %v527, %v482
        %v3119 = vmul.f32 %v532, %v475
        %v3120 = vmul.f32 %v532, %v482
        %v3121 = vmul.f32 %v537, %v475
        %v3122 = vmul.f32 %v537, %v482
        %v3123 = vadd.f32 %v3107, %v558
        %v3124 = vadd.f32 %v3108, %v558
        %v3125 = vadd.f32 %v3109, %v563
        %v3126 = vadd.f32 %v3110, %v563
        %v3127 = vadd.f32 %v3111, %v568
        %v3128 = vadd.f32 %v3112, %v568
        %v3129 = vadd.f32 %v3113, %v573
        %v3130 = vadd.f32 %v3114, %v573
        %v3131 = vadd.f32 %v3115, %v578
        %v3132 = vadd.f32 %v3116, %v578
        %v3133 = vadd.f32 %v3117, %v583
        %v3134 = vadd.f32 %v3118, %v583
        %v3135 = vadd.f32 %v3119, %v588
        %v3136 = vadd.f32 %v3120, %v588
        %v3137 = vadd.f32 %v3121, %v593
        %v3138 = vadd.f32 %v3122, %v593
        %v3139 = vand.u32 2147483647, %v3123
        %vm3140 = vcmp.le.f32.partialorder %v3139, 0.7853982
        %vm3141 = vcmp.lt.s32.totalorder %v3123, 0
        %v3142 = vand.u32 %v3123, 2139095040
        %v3143 = vshrl.u32 %v3142, 23
        %v3144 = vsub.s32 %v3143, 127
        %v3145 = vand.u32 2147483647, %v3123
        %v3146 = vand.u32 %v3145, 8388607
        %v3147 = vor.u32 %v3146, 8388608
        %v3148 = vsub.s32 0, %v3147
        %v3149 = vadd.s32 %v3144, 1
        %vm3150 = vcmp.gt.s32.totalorder %v3149, 0
        %v3151 = vsel %vm3150, %v3149, 0
        %v3152 = vshrl.u32 %v3151, 5
        %v3153 = vand.u32 %v3151, 31
        %v3154 = vsub.s32 32, %v3153
        %v3155 = vshrl.u32 683565275, %v3154
        %v3156 = vshll.u32 683565275, %v3153
        %v3157 = vshrl.u32 2475754826, %v3154
        %v3158 = vor.u32 %v3156, %v3157
        %v3159 = vshll.u32 2475754826, %v3153
        %v3160 = vshrl.u32 2131351028, %v3154
        %v3161 = vor.u32 %v3159, %v3160
        %v3162 = vshll.u32 2131351028, %v3153
        %v3163 = vshrl.u32 2102212464, %v3154
        %v3164 = vor.u32 %v3162, %v3163
        %v3165 = vshll.u32 2102212464, %v3153
        %v3166 = vshrl.u32 920167782, %v3154
        %v3167 = vor.u32 %v3165, %v3166
        %v3168 = vshll.u32 920167782, %v3153
        %v3169 = vshrl.u32 1326507024, %v3154
        %v3170 = vor.u32 %v3168, %v3169
        %vm3171 = vcmp.lt.s32.totalorder %v3152, 1
        %vm3172 = vcmp.lt.s32.totalorder %v3152, 2
        %vm3173 = vcmp.lt.s32.totalorder %v3152, 3
        %vm3174 = vcmp.lt.s32.totalorder %v3152, 4
        %v3175 = vsel %vm3171, %v3155, %v3158
        %v3176 = vsel %vm3174, %v3164, 2102212464
        %v3177 = vsel %vm3173, %v3161, %v3176
        %v3178 = vsel %vm3172, %v3175, %v3177
        %v3179 = vsel %vm3171, %v3158, %v3161
        %v3180 = vsel %vm3174, %v3167, 920167782
        %v3181 = vsel %vm3173, %v3164, %v3180
        %v3182 = vsel %vm3172, %v3179, %v3181
        %v3183 = vsel %vm3171, %v3161, %v3164
        %v3184 = vsel %vm3174, %v3170, 1326507024
        %v3185 = vsel %vm3173, %v3167, %v3184
        %v3186 = vsel %vm3172, %v3183, %v3185
        %v3187 = vshll.u32 %v3147, 8
        %v3188 = vand.u32 %v3187, 65535
        %v3189 = vshrl.u32 %v3187, 16
        %v3190 = vand.u32 %v3186, 65535
        %v3191 = vshrl.u32 %v3186, 16
        %v3192 = vmul.u32 %v3188, %v3190
        %v3193 = vmul.u32 %v3188, %v3191
        %v3194 = vmul.u32 %v3189, %v3190
        %v3195 = vmul.u32 %v3189, %v3191
        %v3196 = vshll.u32 %v3193, 16
        %v3197 = vshrl.u32 %v3193, 16
        %v3198 = vshll.u32 %v3194, 16
        %v3199 = vshrl.u32 %v3194, 16
        %vm3200 = vc.u32 %v3192, %v3196
        %v3201 = vsel %vm3200, 1, 0
        %v3202 = vadd.s32 %v3192, %v3196
        %v3203 = vadd.s32 %v3195, %v3201
        %vm3204 = vc.u32 %v3202, %v3198
        %v3205 = vsel %vm3204, 1, 0
        %v3206 = vadd.s32 %v3202, %v3198
        %v3207 = vadd.s32 %v3203, %v3205
        %v3208 = vadd.s32 %v3207, %v3197
        %v3209 = vadd.s32 %v3208, %v3199
        %v3210 = vand.u32 %v3187, 65535
        %v3211 = vshrl.u32 %v3187, 16
        %v3212 = vand.u32 %v3182, 65535
        %v3213 = vshrl.u32 %v3182, 16
        %v3214 = vmul.u32 %v3210, %v3212
        %v3215 = vmul.u32 %v3210, %v3213
        %v3216 = vmul.u32 %v3211, %v3212
        %v3217 = vmul.u32 %v3211, %v3213
        %v3218 = vshll.u32 %v3215, 16
        %v3219 = vshrl.u32 %v3215, 16
        %v3220 = vshll.u32 %v3216, 16
        %v3221 = vshrl.u32 %v3216, 16
        %vm3222 = vc.u32 %v3214, %v3218
        %v3223 = vsel %vm3222, 1, 0
        %v3224 = vadd.s32 %v3214, %v3218
        %v3225 = vadd.s32 %v3217, %v3223
        %vm3226 = vc.u32 %v3224, %v3220
        %v3227 = vsel %vm3226, 1, 0
        %v3228 = vadd.s32 %v3224, %v3220
        %v3229 = vadd.s32 %v3225, %v3227
        %v3230 = vadd.s32 %v3229, %v3219
        %v3231 = vadd.s32 %v3230, %v3221
        %v3232 = vmul.u32 %v3187, %v3178
        %v3233 = vadd.s32 %v3209, %v3228
        %vm3234 = vc.u32 %v3209, %v3228
        %v3235 = vadd.s32 %v3231, 1
        %v3236 = vsel %vm3234, %v3235, %v3231
        %v3237 = vadd.s32 %v3232, %v3236
        %v3238 = vadd.s32 %v3237, 536870912
        %v3239 = vshrl.u32 %v3238, 30
        %v3240 = vshll.u32 %v3239, 30
        %v3241 = vsub.s32 %v3237, %v3240
        %vm3242 = vcmp.lt.s32.totalorder %v3241, 0
        %v3243 = vsub.s32 0, %v3241
        %v3244 = vsel %vm3242, %v3243, %v3241
        %v3245 = vclz %v3244
        %v3246 = vsub.s32 %v3245, 2
        %vm3247 = vcmp.gt.s32.totalorder 0, %v3246
        %v3248 = vsel %vm3247, 0, %v3246
        %v3249 = vsub.s32 32, %v3248
        %v3250 = vshll.u32 %v3241, %v3248
        %v3251 = vshrl.u32 %v3233, %v3249
        %v3252 = vor.u32 %v3250, %v3251
        %v3253 = vsub.s32 4294967266, %v3248
        %v3254 = vadd.s32 %v3253, 127
        %v3255 = vshll.u32 %v3254, 23
        %v3256 = vor.u32 4788187, %v3255
        %v3257 = vand.u32 2147483647, %v3256
        %v3259 = vcvt.s32.f32 %v3252
        %v3260 = vmul.f32 %v3259, %v3257
        %v3261 = vxor.u32 %v3260, 2147483648
        %v3262 = vsel %vm3141, %v3261, %v3260
        %v3263 = vsub.s32 4, %v3239
        %v3264 = vsel %vm3141, %v3263, %v3239
        %v3265 = vsel %vm3140, %v3123, %v3262
        %v3266 = vsel %vm3140, 0, %v3264
        %v3267 = vmul.f32 %v3265, %v3265
        %v3268 = vmul.f32 %v3267, -0.001358992
        %v3269 = vadd.f32 %v3268, 0.041655596
        %v3270 = vmul.f32 %v3267, %v3269
        %v3271 = vadd.f32 %v3270, -0.4999988
        %v3272 = vmul.f32 %v3267, %v3271
        %v3273 = vadd.f32 1.0, %v3272
        %v3274 = vmul.f32 %v3265, %v3265
        %v3275 = vmul.f32 %v3274, -0.00019511016
        %v3276 = vadd.f32 %v3275, 0.008332121
        %v3277 = vmul.f32 %v3274, %v3276
        %v3278 = vadd.f32 %v3277, -0.16666654
        %v3279 = vmul.f32 %v3274, %v3278
        %v3280 = vadd.f32 %v3279, 1.0
        %v3281 = vmul.f32 %v3280, %v3265
        %vm3282 = vweird.f32 %v3123
        %v3283 = vadd.s32 %v3266, 3
        %v3284 = vand.u32 %v3283, 3
        %vm3285 = vcmp.lt.s32.totalorder %v3284, 2
        %vm3286 = vcmp.eq.s32.totalorder %v3284, 0
        %v3287 = vxor.u32 %v3281, 2147483648
        %v3288 = vsel %vm3286, %v3273, %v3287
        %vm3289 = vcmp.eq.s32.totalorder %v3284, 2
        %v3290 = vxor.u32 %v3273, 2147483648
        %v3291 = vsel %vm3289, %v3290, %v3281
        %v3292 = vsel %vm3285, %v3288, %v3291
        %v3293 = vsel %vm3282, nan, %v3292
        %v3294 = vand.u32 2147483647, %v3124
        %vm3295 = vcmp.le.f32.partialorder %v3294, 0.7853982
        %vm3296 = vcmp.lt.s32.totalorder %v3124, 0
        %v3297 = vand.u32 %v3124, 2139095040
        %v3298 = vshrl.u32 %v3297, 23
        %v3299 = vsub.s32 %v3298, 127
        %v3300 = vand.u32 2147483647, %v3124
        %v3301 = vand.u32 %v3300, 8388607
        %v3302 = vor.u32 %v3301, 8388608
        %v3303 = vsub.s32 0, %v3302
        %v3304 = vadd.s32 %v3299, 1
        %vm3305 = vcmp.gt.s32.totalorder %v3304, 0
        %v3306 = vsel %vm3305, %v3304, 0
        %v3307 = vshrl.u32 %v3306, 5
        %v3308 = vand.u32 %v3306, 31
        %v3309 = vsub.s32 32, %v3308
        %v3310 = vshrl.u32 683565275, %v3309
        %v3311 = vshll.u32 683565275, %v3308
        %v3312 = vshrl.u32 2475754826, %v3309
        %v3313 = vor.u32 %v3311, %v3312
        %v3314 = vshll.u32 2475754826, %v3308
        %v3315 = vshrl.u32 2131351028, %v3309
        %v3316 = vor.u32 %v3314, %v3315
        %v3317 = vshll.u32 2131351028, %v3308
        %v3318 = vshrl.u32 2102212464, %v3309
        %v3319 = vor.u32 %v3317, %v3318
        %v3320 = vshll.u32 2102212464, %v3308
        %v3321 = vshrl.u32 920167782, %v3309
        %v3322 = vor.u32 %v3320, %v3321
        %v3323 = vshll.u32 920167782, %v3308
        %v3324 = vshrl.u32 1326507024, %v3309
        %v3325 = vor.u32 %v3323, %v3324
        %vm3326 = vcmp.lt.s32.totalorder %v3307, 1
        %vm3327 = vcmp.lt.s32.totalorder %v3307, 2
        %vm3328 = vcmp.lt.s32.totalorder %v3307, 3
        %vm3329 = vcmp.lt.s32.totalorder %v3307, 4
        %v3330 = vsel %vm3326, %v3310, %v3313
        %v3331 = vsel %vm3329, %v3319, 2102212464
        %v3332 = vsel %vm3328, %v3316, %v3331
        %v3333 = vsel %vm3327, %v3330, %v3332
        %v3334 = vsel %vm3326, %v3313, %v3316
        %v3335 = vsel %vm3329, %v3322, 920167782
        %v3336 = vsel %vm3328, %v3319, %v3335
        %v3337 = vsel %vm3327, %v3334, %v3336
        %v3338 = vsel %vm3326, %v3316, %v3319
        %v3339 = vsel %vm3329, %v3325, 1326507024
        %v3340 = vsel %vm3328, %v3322, %v3339
        %v3341 = vsel %vm3327, %v3338, %v3340
        %v3342 = vshll.u32 %v3302, 8
        %v3343 = vand.u32 %v3342, 65535
        %v3344 = vshrl.u32 %v3342, 16
        %v3345 = vand.u32 %v3341, 65535
        %v3346 = vshrl.u32 %v3341, 16
        %v3347 = vmul.u32 %v3343, %v3345
        %v3348 = vmul.u32 %v3343, %v3346
        %v3349 = vmul.u32 %v3344, %v3345
        %v3350 = vmul.u32 %v3344, %v3346
        %v3351 = vshll.u32 %v3348, 16
        %v3352 = vshrl.u32 %v3348, 16
        %v3353 = vshll.u32 %v3349, 16
        %v3354 = vshrl.u32 %v3349, 16
        %vm3355 = vc.u32 %v3347, %v3351
        %v3356 = vsel %vm3355, 1, 0
        %v3357 = vadd.s32 %v3347, %v3351
        %v3358 = vadd.s32 %v3350, %v3356
        %vm3359 = vc.u32 %v3357, %v3353
        %v3360 = vsel %vm3359, 1, 0
        %v3361 = vadd.s32 %v3357, %v3353
        %v3362 = vadd.s32 %v3358, %v3360
        %v3363 = vadd.s32 %v3362, %v3352
        %v3364 = vadd.s32 %v3363, %v3354
        %v3365 = vand.u32 %v3342, 65535
        %v3366 = vshrl.u32 %v3342, 16
        %v3367 = vand.u32 %v3337, 65535
        %v3368 = vshrl.u32 %v3337, 16
        %v3369 = vmul.u32 %v3365, %v3367
        %v3370 = vmul.u32 %v3365, %v3368
        %v3371 = vmul.u32 %v3366, %v3367
        %v3372 = vmul.u32 %v3366, %v3368
        %v3373 = vshll.u32 %v3370, 16
        %v3374 = vshrl.u32 %v3370, 16
        %v3375 = vshll.u32 %v3371, 16
        %v3376 = vshrl.u32 %v3371, 16
        %vm3377 = vc.u32 %v3369, %v3373
        %v3378 = vsel %vm3377, 1, 0
        %v3379 = vadd.s32 %v3369, %v3373
        %v3380 = vadd.s32 %v3372, %v3378
        %vm3381 = vc.u32 %v3379, %v3375
        %v3382 = vsel %vm3381, 1, 0
        %v3383 = vadd.s32 %v3379, %v3375
        %v3384 = vadd.s32 %v3380, %v3382
        %v3385 = vadd.s32 %v3384, %v3374
        %v3386 = vadd.s32 %v3385, %v3376
        %v3387 = vmul.u32 %v3342, %v3333
        %v3388 = vadd.s32 %v3364, %v3383
        %vm3389 = vc.u32 %v3364, %v3383
        %v3390 = vadd.s32 %v3386, 1
        %v3391 = vsel %vm3389, %v3390, %v3386
        %v3392 = vadd.s32 %v3387, %v3391
        %v3393 = vadd.s32 %v3392, 536870912
        %v3394 = vshrl.u32 %v3393, 30
        %v3395 = vshll.u32 %v3394, 30
        %v3396 = vsub.s32 %v3392, %v3395
        %vm3397 = vcmp.lt.s32.totalorder %v3396, 0
        %v3398 = vsub.s32 0, %v3396
        %v3399 = vsel %vm3397, %v3398, %v3396
        %v3400 = vclz %v3399
        %v3401 = vsub.s32 %v3400, 2
        %vm3402 = vcmp.gt.s32.totalorder 0, %v3401
        %v3403 = vsel %vm3402, 0, %v3401
        %v3404 = vsub.s32 32, %v3403
        %v3405 = vshll.u32 %v3396, %v3403
        %v3406 = vshrl.u32 %v3388, %v3404
        %v3407 = vor.u32 %v3405, %v3406
        %v3408 = vsub.s32 4294967266, %v3403
        %v3409 = vadd.s32 %v3408, 127
        %v3410 = vshll.u32 %v3409, 23
        %v3411 = vor.u32 4788187, %v3410
        %v3412 = vand.u32 2147483647, %v3411
        %v3414 = vcvt.s32.f32 %v3407
        %v3415 = vmul.f32 %v3414, %v3412
        %v3416 = vxor.u32 %v3415, 2147483648
        %v3417 = vsel %vm3296, %v3416, %v3415
        %v3418 = vsub.s32 4, %v3394
        %v3419 = vsel %vm3296, %v3418, %v3394
        %v3420 = vsel %vm3295, %v3124, %v3417
        %v3421 = vsel %vm3295, 0, %v3419
        %v3422 = vmul.f32 %v3420, %v3420
        %v3423 = vmul.f32 %v3422, -0.001358992
        %v3424 = vadd.f32 %v3423, 0.041655596
        %v3425 = vmul.f32 %v3422, %v3424
        %v3426 = vadd.f32 %v3425, -0.4999988
        %v3427 = vmul.f32 %v3422, %v3426
        %v3428 = vadd.f32 1.0, %v3427
        %v3429 = vmul.f32 %v3420, %v3420
        %v3430 = vmul.f32 %v3429, -0.00019511016
        %v3431 = vadd.f32 %v3430, 0.008332121
        %v3432 = vmul.f32 %v3429, %v3431
        %v3433 = vadd.f32 %v3432, -0.16666654
        %v3434 = vmul.f32 %v3429, %v3433
        %v3435 = vadd.f32 %v3434, 1.0
        %v3436 = vmul.f32 %v3435, %v3420
        %vm3437 = vweird.f32 %v3124
        %v3438 = vadd.s32 %v3421, 3
        %v3439 = vand.u32 %v3438, 3
        %vm3440 = vcmp.lt.s32.totalorder %v3439, 2
        %vm3441 = vcmp.eq.s32.totalorder %v3439, 0
        %v3442 = vxor.u32 %v3436, 2147483648
        %v3443 = vsel %vm3441, %v3428, %v3442
        %vm3444 = vcmp.eq.s32.totalorder %v3439, 2
        %v3445 = vxor.u32 %v3428, 2147483648
        %v3446 = vsel %vm3444, %v3445, %v3436
        %v3447 = vsel %vm3440, %v3443, %v3446
        %v3448 = vsel %vm3437, nan, %v3447
        %v3449 = vand.u32 2147483647, %v3125
        %vm3450 = vcmp.le.f32.partialorder %v3449, 0.7853982
        %vm3451 = vcmp.lt.s32.totalorder %v3125, 0
        %v3452 = vand.u32 %v3125, 2139095040
        %v3453 = vshrl.u32 %v3452, 23
        %v3454 = vsub.s32 %v3453, 127
        %v3455 = vand.u32 2147483647, %v3125
        %v3456 = vand.u32 %v3455, 8388607
        %v3457 = vor.u32 %v3456, 8388608
        %v3458 = vsub.s32 0, %v3457
        %v3459 = vadd.s32 %v3454, 1
        %vm3460 = vcmp.gt.s32.totalorder %v3459, 0
        %v3461 = vsel %vm3460, %v3459, 0
        %v3462 = vshrl.u32 %v3461, 5
        %v3463 = vand.u32 %v3461, 31
        %v3464 = vsub.s32 32, %v3463
        %v3465 = vshrl.u32 683565275, %v3464
        %v3466 = vshll.u32 683565275, %v3463
        %v3467 = vshrl.u32 2475754826, %v3464
        %v3468 = vor.u32 %v3466, %v3467
        %v3469 = vshll.u32 2475754826, %v3463
        %v3470 = vshrl.u32 2131351028, %v3464
        %v3471 = vor.u32 %v3469, %v3470
        %v3472 = vshll.u32 2131351028, %v3463
        %v3473 = vshrl.u32 2102212464, %v3464
        %v3474 = vor.u32 %v3472, %v3473
        %v3475 = vshll.u32 2102212464, %v3463
        %v3476 = vshrl.u32 920167782, %v3464
        %v3477 = vor.u32 %v3475, %v3476
        %v3478 = vshll.u32 920167782, %v3463
        %v3479 = vshrl.u32 1326507024, %v3464
        %v3480 = vor.u32 %v3478, %v3479
        %vm3481 = vcmp.lt.s32.totalorder %v3462, 1
        %vm3482 = vcmp.lt.s32.totalorder %v3462, 2
        %vm3483 = vcmp.lt.s32.totalorder %v3462, 3
        %vm3484 = vcmp.lt.s32.totalorder %v3462, 4
        %v3485 = vsel %vm3481, %v3465, %v3468
        %v3486 = vsel %vm3484, %v3474, 2102212464
        %v3487 = vsel %vm3483, %v3471, %v3486
        %v3488 = vsel %vm3482, %v3485, %v3487
        %v3489 = vsel %vm3481, %v3468, %v3471
        %v3490 = vsel %vm3484, %v3477, 920167782
        %v3491 = vsel %vm3483, %v3474, %v3490
        %v3492 = vsel %vm3482, %v3489, %v3491
        %v3493 = vsel %vm3481, %v3471, %v3474
        %v3494 = vsel %vm3484, %v3480, 1326507024
        %v3495 = vsel %vm3483, %v3477, %v3494
        %v3496 = vsel %vm3482, %v3493, %v3495
        %v3497 = vshll.u32 %v3457, 8
        %v3498 = vand.u32 %v3497, 65535
        %v3499 = vshrl.u32 %v3497, 16
        %v3500 = vand.u32 %v3496, 65535
        %v3501 = vshrl.u32 %v3496, 16
        %v3502 = vmul.u32 %v3498, %v3500
        %v3503 = vmul.u32 %v3498, %v3501
        %v3504 = vmul.u32 %v3499, %v3500
        %v3505 = vmul.u32 %v3499, %v3501
        %v3506 = vshll.u32 %v3503, 16
        %v3507 = vshrl.u32 %v3503, 16
        %v3508 = vshll.u32 %v3504, 16
        %v3509 = vshrl.u32 %v3504, 16
        %vm3510 = vc.u32 %v3502, %v3506
        %v3511 = vsel %vm3510, 1, 0
        %v3512 = vadd.s32 %v3502, %v3506
        %v3513 = vadd.s32 %v3505, %v3511
        %vm3514 = vc.u32 %v3512, %v3508
        %v3515 = vsel %vm3514, 1, 0
        %v3516 = vadd.s32 %v3512, %v3508
        %v3517 = vadd.s32 %v3513, %v3515
        %v3518 = vadd.s32 %v3517, %v3507
        %v3519 = vadd.s32 %v3518, %v3509
        %v3520 = vand.u32 %v3497, 65535
        %v3521 = vshrl.u32 %v3497, 16
        %v3522 = vand.u32 %v3492, 65535
        %v3523 = vshrl.u32 %v3492, 16
        %v3524 = vmul.u32 %v3520, %v3522
        %v3525 = vmul.u32 %v3520, %v3523
        %v3526 = vmul.u32 %v3521, %v3522
        %v3527 = vmul.u32 %v3521, %v3523
        %v3528 = vshll.u32 %v3525, 16
        %v3529 = vshrl.u32 %v3525, 16
        %v3530 = vshll.u32 %v3526, 16
        %v3531 = vshrl.u32 %v3526, 16
        %vm3532 = vc.u32 %v3524, %v3528
        %v3533 = vsel %vm3532, 1, 0
        %v3534 = vadd.s32 %v3524, %v3528
        %v3535 = vadd.s32 %v3527, %v3533
        %vm3536 = vc.u32 %v3534, %v3530
        %v3537 = vsel %vm3536, 1, 0
        %v3538 = vadd.s32 %v3534, %v3530
        %v3539 = vadd.s32 %v3535, %v3537
        %v3540 = vadd.s32 %v3539, %v3529
        %v3541 = vadd.s32 %v3540, %v3531
        %v3542 = vmul.u32 %v3497, %v3488
        %v3543 = vadd.s32 %v3519, %v3538
        %vm3544 = vc.u32 %v3519, %v3538
        %v3545 = vadd.s32 %v3541, 1
        %v3546 = vsel %vm3544, %v3545, %v3541
        %v3547 = vadd.s32 %v3542, %v3546
        %v3548 = vadd.s32 %v3547, 536870912
        %v3549 = vshrl.u32 %v3548, 30
        %v3550 = vshll.u32 %v3549, 30
        %v3551 = vsub.s32 %v3547, %v3550
        %vm3552 = vcmp.lt.s32.totalorder %v3551, 0
        %v3553 = vsub.s32 0, %v3551
        %v3554 = vsel %vm3552, %v3553, %v3551
        %v3555 = vclz %v3554
        %v3556 = vsub.s32 %v3555, 2
        %vm3557 = vcmp.gt.s32.totalorder 0, %v3556
        %v3558 = vsel %vm3557, 0, %v3556
        %v3559 = vsub.s32 32, %v3558
        %v3560 = vshll.u32 %v3551, %v3558
        %v3561 = vshrl.u32 %v3543, %v3559
        %v3562 = vor.u32 %v3560, %v3561
        %v3563 = vsub.s32 4294967266, %v3558
        %v3564 = vadd.s32 %v3563, 127
        %v3565 = vshll.u32 %v3564, 23
        %v3566 = vor.u32 4788187, %v3565
        %v3567 = vand.u32 2147483647, %v3566
        %v3569 = vcvt.s32.f32 %v3562
        %v3570 = vmul.f32 %v3569, %v3567
        %v3571 = vxor.u32 %v3570, 2147483648
        %v3572 = vsel %vm3451, %v3571, %v3570
        %v3573 = vsub.s32 4, %v3549
        %v3574 = vsel %vm3451, %v3573, %v3549
        %v3575 = vsel %vm3450, %v3125, %v3572
        %v3576 = vsel %vm3450, 0, %v3574
        %v3577 = vmul.f32 %v3575, %v3575
        %v3578 = vmul.f32 %v3577, -0.001358992
        %v3579 = vadd.f32 %v3578, 0.041655596
        %v3580 = vmul.f32 %v3577, %v3579
        %v3581 = vadd.f32 %v3580, -0.4999988
        %v3582 = vmul.f32 %v3577, %v3581
        %v3583 = vadd.f32 1.0, %v3582
        %v3584 = vmul.f32 %v3575, %v3575
        %v3585 = vmul.f32 %v3584, -0.00019511016
        %v3586 = vadd.f32 %v3585, 0.008332121
        %v3587 = vmul.f32 %v3584, %v3586
        %v3588 = vadd.f32 %v3587, -0.16666654
        %v3589 = vmul.f32 %v3584, %v3588
        %v3590 = vadd.f32 %v3589, 1.0
        %v3591 = vmul.f32 %v3590, %v3575
        %vm3592 = vweird.f32 %v3125
        %v3593 = vadd.s32 %v3576, 3
        %v3594 = vand.u32 %v3593, 3
        %vm3595 = vcmp.lt.s32.totalorder %v3594, 2
        %vm3596 = vcmp.eq.s32.totalorder %v3594, 0
        %v3597 = vxor.u32 %v3591, 2147483648
        %v3598 = vsel %vm3596, %v3583, %v3597
        %vm3599 = vcmp.eq.s32.totalorder %v3594, 2
        %v3600 = vxor.u32 %v3583, 2147483648
        %v3601 = vsel %vm3599, %v3600, %v3591
        %v3602 = vsel %vm3595, %v3598, %v3601
        %v3603 = vsel %vm3592, nan, %v3602
        %v3604 = vand.u32 2147483647, %v3126
        %vm3605 = vcmp.le.f32.partialorder %v3604, 0.7853982
        %vm3606 = vcmp.lt.s32.totalorder %v3126, 0
        %v3607 = vand.u32 %v3126, 2139095040
        %v3608 = vshrl.u32 %v3607, 23
        %v3609 = vsub.s32 %v3608, 127
        %v3610 = vand.u32 2147483647, %v3126
        %v3611 = vand.u32 %v3610, 8388607
        %v3612 = vor.u32 %v3611, 8388608
        %v3613 = vsub.s32 0, %v3612
        %v3614 = vadd.s32 %v3609, 1
        %vm3615 = vcmp.gt.s32.totalorder %v3614, 0
        %v3616 = vsel %vm3615, %v3614, 0
        %v3617 = vshrl.u32 %v3616, 5
        %v3618 = vand.u32 %v3616, 31
        %v3619 = vsub.s32 32, %v3618
        %v3620 = vshrl.u32 683565275, %v3619
        %v3621 = vshll.u32 683565275, %v3618
        %v3622 = vshrl.u32 2475754826, %v3619
        %v3623 = vor.u32 %v3621, %v3622
        %v3624 = vshll.u32 2475754826, %v3618
        %v3625 = vshrl.u32 2131351028, %v3619
        %v3626 = vor.u32 %v3624, %v3625
        %v3627 = vshll.u32 2131351028, %v3618
        %v3628 = vshrl.u32 2102212464, %v3619
        %v3629 = vor.u32 %v3627, %v3628
        %v3630 = vshll.u32 2102212464, %v3618
        %v3631 = vshrl.u32 920167782, %v3619
        %v3632 = vor.u32 %v3630, %v3631
        %v3633 = vshll.u32 920167782, %v3618
        %v3634 = vshrl.u32 1326507024, %v3619
        %v3635 = vor.u32 %v3633, %v3634
        %vm3636 = vcmp.lt.s32.totalorder %v3617, 1
        %vm3637 = vcmp.lt.s32.totalorder %v3617, 2
        %vm3638 = vcmp.lt.s32.totalorder %v3617, 3
        %vm3639 = vcmp.lt.s32.totalorder %v3617, 4
        %v3640 = vsel %vm3636, %v3620, %v3623
        %v3641 = vsel %vm3639, %v3629, 2102212464
        %v3642 = vsel %vm3638, %v3626, %v3641
        %v3643 = vsel %vm3637, %v3640, %v3642
        %v3644 = vsel %vm3636, %v3623, %v3626
        %v3645 = vsel %vm3639, %v3632, 920167782
        %v3646 = vsel %vm3638, %v3629, %v3645
        %v3647 = vsel %vm3637, %v3644, %v3646
        %v3648 = vsel %vm3636, %v3626, %v3629
        %v3649 = vsel %vm3639, %v3635, 1326507024
        %v3650 = vsel %vm3638, %v3632, %v3649
        %v3651 = vsel %vm3637, %v3648, %v3650
        %v3652 = vshll.u32 %v3612, 8
        %v3653 = vand.u32 %v3652, 65535
        %v3654 = vshrl.u32 %v3652, 16
        %v3655 = vand.u32 %v3651, 65535
        %v3656 = vshrl.u32 %v3651, 16
        %v3657 = vmul.u32 %v3653, %v3655
        %v3658 = vmul.u32 %v3653, %v3656
        %v3659 = vmul.u32 %v3654, %v3655
        %v3660 = vmul.u32 %v3654, %v3656
        %v3661 = vshll.u32 %v3658, 16
        %v3662 = vshrl.u32 %v3658, 16
        %v3663 = vshll.u32 %v3659, 16
        %v3664 = vshrl.u32 %v3659, 16
        %vm3665 = vc.u32 %v3657, %v3661
        %v3666 = vsel %vm3665, 1, 0
        %v3667 = vadd.s32 %v3657, %v3661
        %v3668 = vadd.s32 %v3660, %v3666
        %vm3669 = vc.u32 %v3667, %v3663
        %v3670 = vsel %vm3669, 1, 0
        %v3671 = vadd.s32 %v3667, %v3663
        %v3672 = vadd.s32 %v3668, %v3670
        %v3673 = vadd.s32 %v3672, %v3662
        %v3674 = vadd.s32 %v3673, %v3664
        %v3675 = vand.u32 %v3652, 65535
        %v3676 = vshrl.u32 %v3652, 16
        %v3677 = vand.u32 %v3647, 65535
        %v3678 = vshrl.u32 %v3647, 16
        %v3679 = vmul.u32 %v3675, %v3677
        %v3680 = vmul.u32 %v3675, %v3678
        %v3681 = vmul.u32 %v3676, %v3677
        %v3682 = vmul.u32 %v3676, %v3678
        %v3683 = vshll.u32 %v3680, 16
        %v3684 = vshrl.u32 %v3680, 16
        %v3685 = vshll.u32 %v3681, 16
        %v3686 = vshrl.u32 %v3681, 16
        %vm3687 = vc.u32 %v3679, %v3683
        %v3688 = vsel %vm3687, 1, 0
        %v3689 = vadd.s32 %v3679, %v3683
        %v3690 = vadd.s32 %v3682, %v3688
        %vm3691 = vc.u32 %v3689, %v3685
        %v3692 = vsel %vm3691, 1, 0
        %v3693 = vadd.s32 %v3689, %v3685
        %v3694 = vadd.s32 %v3690, %v3692
        %v3695 = vadd.s32 %v3694, %v3684
        %v3696 = vadd.s32 %v3695, %v3686
        %v3697 = vmul.u32 %v3652, %v3643
        %v3698 = vadd.s32 %v3674, %v3693
        %vm3699 = vc.u32 %v3674, %v3693
        %v3700 = vadd.s32 %v3696, 1
        %v3701 = vsel %vm3699, %v3700, %v3696
        %v3702 = vadd.s32 %v3697, %v3701
        %v3703 = vadd.s32 %v3702, 536870912
        %v3704 = vshrl.u32 %v3703, 30
        %v3705 = vshll.u32 %v3704, 30
        %v3706 = vsub.s32 %v3702, %v3705
        %vm3707 = vcmp.lt.s32.totalorder %v3706, 0
        %v3708 = vsub.s32 0, %v3706
        %v3709 = vsel %vm3707, %v3708, %v3706
        %v3710 = vclz %v3709
        %v3711 = vsub.s32 %v3710, 2
        %vm3712 = vcmp.gt.s32.totalorder 0, %v3711
        %v3713 = vsel %vm3712, 0, %v3711
        %v3714 = vsub.s32 32, %v3713
        %v3715 = vshll.u32 %v3706, %v3713
        %v3716 = vshrl.u32 %v3698, %v3714
        %v3717 = vor.u32 %v3715, %v3716
        %v3718 = vsub.s32 4294967266, %v3713
        %v3719 = vadd.s32 %v3718, 127
        %v3720 = vshll.u32 %v3719, 23
        %v3721 = vor.u32 4788187, %v3720
        %v3722 = vand.u32 2147483647, %v3721
        %v3724 = vcvt.s32.f32 %v3717
        %v3725 = vmul.f32 %v3724, %v3722
        %v3726 = vxor.u32 %v3725, 2147483648
        %v3727 = vsel %vm3606, %v3726, %v3725
        %v3728 = vsub.s32 4, %v3704
        %v3729 = vsel %vm3606, %v3728, %v3704
        %v3730 = vsel %vm3605, %v3126, %v3727
        %v3731 = vsel %vm3605, 0, %v3729
        %v3732 = vmul.f32 %v3730, %v3730
        %v3733 = vmul.f32 %v3732, -0.001358992
        %v3734 = vadd.f32 %v3733, 0.041655596
        %v3735 = vmul.f32 %v3732, %v3734
        %v3736 = vadd.f32 %v3735, -0.4999988
        %v3737 = vmul.f32 %v3732, %v3736
        %v3738 = vadd.f32 1.0, %v3737
        %v3739 = vmul.f32 %v3730, %v3730
        %v3740 = vmul.f32 %v3739, -0.00019511016
        %v3741 = vadd.f32 %v3740, 0.008332121
        %v3742 = vmul.f32 %v3739, %v3741
        %v3743 = vadd.f32 %v3742, -0.16666654
        %v3744 = vmul.f32 %v3739, %v3743
        %v3745 = vadd.f32 %v3744, 1.0
        %v3746 = vmul.f32 %v3745, %v3730
        %vm3747 = vweird.f32 %v3126
        %v3748 = vadd.s32 %v3731, 3
        %v3749 = vand.u32 %v3748, 3
        %vm3750 = vcmp.lt.s32.totalorder %v3749, 2
        %vm3751 = vcmp.eq.s32.totalorder %v3749, 0
        %v3752 = vxor.u32 %v3746, 2147483648
        %v3753 = vsel %vm3751, %v3738, %v3752
        %vm3754 = vcmp.eq.s32.totalorder %v3749, 2
        %v3755 = vxor.u32 %v3738, 2147483648
        %v3756 = vsel %vm3754, %v3755, %v3746
        %v3757 = vsel %vm3750, %v3753, %v3756
        %v3758 = vsel %vm3747, nan, %v3757
        %v3759 = vand.u32 2147483647, %v3127
        %vm3760 = vcmp.le.f32.partialorder %v3759, 0.7853982
        %vm3761 = vcmp.lt.s32.totalorder %v3127, 0
        %v3762 = vand.u32 %v3127, 2139095040
        %v3763 = vshrl.u32 %v3762, 23
        %v3764 = vsub.s32 %v3763, 127
        %v3765 = vand.u32 2147483647, %v3127
        %v3766 = vand.u32 %v3765, 8388607
        %v3767 = vor.u32 %v3766, 8388608
        %v3768 = vsub.s32 0, %v3767
        %v3769 = vadd.s32 %v3764, 1
        %vm3770 = vcmp.gt.s32.totalorder %v3769, 0
        %v3771 = vsel %vm3770, %v3769, 0
        %v3772 = vshrl.u32 %v3771, 5
        %v3773 = vand.u32 %v3771, 31
        %v3774 = vsub.s32 32, %v3773
        %v3775 = vshrl.u32 683565275, %v3774
        %v3776 = vshll.u32 683565275, %v3773
        %v3777 = vshrl.u32 2475754826, %v3774
        %v3778 = vor.u32 %v3776, %v3777
        %v3779 = vshll.u32 2475754826, %v3773
        %v3780 = vshrl.u32 2131351028, %v3774
        %v3781 = vor.u32 %v3779, %v3780
        %v3782 = vshll.u32 2131351028, %v3773
        %v3783 = vshrl.u32 2102212464, %v3774
        %v3784 = vor.u32 %v3782, %v3783
        %v3785 = vshll.u32 2102212464, %v3773
        %v3786 = vshrl.u32 920167782, %v3774
        %v3787 = vor.u32 %v3785, %v3786
        %v3788 = vshll.u32 920167782, %v3773
        %v3789 = vshrl.u32 1326507024, %v3774
        %v3790 = vor.u32 %v3788, %v3789
        %vm3791 = vcmp.lt.s32.totalorder %v3772, 1
        %vm3792 = vcmp.lt.s32.totalorder %v3772, 2
        %vm3793 = vcmp.lt.s32.totalorder %v3772, 3
        %vm3794 = vcmp.lt.s32.totalorder %v3772, 4
        %v3795 = vsel %vm3791, %v3775, %v3778
        %v3796 = vsel %vm3794, %v3784, 2102212464
        %v3797 = vsel %vm3793, %v3781, %v3796
        %v3798 = vsel %vm3792, %v3795, %v3797
        %v3799 = vsel %vm3791, %v3778, %v3781
        %v3800 = vsel %vm3794, %v3787, 920167782
        %v3801 = vsel %vm3793, %v3784, %v3800
        %v3802 = vsel %vm3792, %v3799, %v3801
        %v3803 = vsel %vm3791, %v3781, %v3784
        %v3804 = vsel %vm3794, %v3790, 1326507024
        %v3805 = vsel %vm3793, %v3787, %v3804
        %v3806 = vsel %vm3792, %v3803, %v3805
        %v3807 = vshll.u32 %v3767, 8
        %v3808 = vand.u32 %v3807, 65535
        %v3809 = vshrl.u32 %v3807, 16
        %v3810 = vand.u32 %v3806, 65535
        %v3811 = vshrl.u32 %v3806, 16
        %v3812 = vmul.u32 %v3808, %v3810
        %v3813 = vmul.u32 %v3808, %v3811
        %v3814 = vmul.u32 %v3809, %v3810
        %v3815 = vmul.u32 %v3809, %v3811
        %v3816 = vshll.u32 %v3813, 16
        %v3817 = vshrl.u32 %v3813, 16
        %v3818 = vshll.u32 %v3814, 16
        %v3819 = vshrl.u32 %v3814, 16
        %vm3820 = vc.u32 %v3812, %v3816
        %v3821 = vsel %vm3820, 1, 0
        %v3822 = vadd.s32 %v3812, %v3816
        %v3823 = vadd.s32 %v3815, %v3821
        %vm3824 = vc.u32 %v3822, %v3818
        %v3825 = vsel %vm3824, 1, 0
        %v3826 = vadd.s32 %v3822, %v3818
        %v3827 = vadd.s32 %v3823, %v3825
        %v3828 = vadd.s32 %v3827, %v3817
        %v3829 = vadd.s32 %v3828, %v3819
        %v3830 = vand.u32 %v3807, 65535
        %v3831 = vshrl.u32 %v3807, 16
        %v3832 = vand.u32 %v3802, 65535
        %v3833 = vshrl.u32 %v3802, 16
        %v3834 = vmul.u32 %v3830, %v3832
        %v3835 = vmul.u32 %v3830, %v3833
        %v3836 = vmul.u32 %v3831, %v3832
        %v3837 = vmul.u32 %v3831, %v3833
        %v3838 = vshll.u32 %v3835, 16
        %v3839 = vshrl.u32 %v3835, 16
        %v3840 = vshll.u32 %v3836, 16
        %v3841 = vshrl.u32 %v3836, 16
        %vm3842 = vc.u32 %v3834, %v3838
        %v3843 = vsel %vm3842, 1, 0
        %v3844 = vadd.s32 %v3834, %v3838
        %v3845 = vadd.s32 %v3837, %v3843
        %vm3846 = vc.u32 %v3844, %v3840
        %v3847 = vsel %vm3846, 1, 0
        %v3848 = vadd.s32 %v3844, %v3840
        %v3849 = vadd.s32 %v3845, %v3847
        %v3850 = vadd.s32 %v3849, %v3839
        %v3851 = vadd.s32 %v3850, %v3841
        %v3852 = vmul.u32 %v3807, %v3798
        %v3853 = vadd.s32 %v3829, %v3848
        %vm3854 = vc.u32 %v3829, %v3848
        %v3855 = vadd.s32 %v3851, 1
        %v3856 = vsel %vm3854, %v3855, %v3851
        %v3857 = vadd.s32 %v3852, %v3856
        %v3858 = vadd.s32 %v3857, 536870912
        %v3859 = vshrl.u32 %v3858, 30
        %v3860 = vshll.u32 %v3859, 30
        %v3861 = vsub.s32 %v3857, %v3860
        %vm3862 = vcmp.lt.s32.totalorder %v3861, 0
        %v3863 = vsub.s32 0, %v3861
        %v3864 = vsel %vm3862, %v3863, %v3861
        %v3865 = vclz %v3864
        %v3866 = vsub.s32 %v3865, 2
        %vm3867 = vcmp.gt.s32.totalorder 0, %v3866
        %v3868 = vsel %vm3867, 0, %v3866
        %v3869 = vsub.s32 32, %v3868
        %v3870 = vshll.u32 %v3861, %v3868
        %v3871 = vshrl.u32 %v3853, %v3869
        %v3872 = vor.u32 %v3870, %v3871
        %v3873 = vsub.s32 4294967266, %v3868
        %v3874 = vadd.s32 %v3873, 127
        %v3875 = vshll.u32 %v3874, 23
        %v3876 = vor.u32 4788187, %v3875
        %v3877 = vand.u32 2147483647, %v3876
        %v3879 = vcvt.s32.f32 %v3872
        %v3880 = vmul.f32 %v3879, %v3877
        %v3881 = vxor.u32 %v3880, 2147483648
        %v3882 = vsel %vm3761, %v3881, %v3880
        %v3883 = vsub.s32 4, %v3859
        %v3884 = vsel %vm3761, %v3883, %v3859
        %v3885 = vsel %vm3760, %v3127, %v3882
        %v3886 = vsel %vm3760, 0, %v3884
        %v3887 = vmul.f32 %v3885, %v3885
        %v3888 = vmul.f32 %v3887, -0.001358992
        %v3889 = vadd.f32 %v3888, 0.041655596
        %v3890 = vmul.f32 %v3887, %v3889
        %v3891 = vadd.f32 %v3890, -0.4999988
        %v3892 = vmul.f32 %v3887, %v3891
        %v3893 = vadd.f32 1.0, %v3892
        %v3894 = vmul.f32 %v3885, %v3885
        %v3895 = vmul.f32 %v3894, -0.00019511016
        %v3896 = vadd.f32 %v3895, 0.008332121
        %v3897 = vmul.f32 %v3894, %v3896
        %v3898 = vadd.f32 %v3897, -0.16666654
        %v3899 = vmul.f32 %v3894, %v3898
        %v3900 = vadd.f32 %v3899, 1.0
        %v3901 = vmul.f32 %v3900, %v3885
        %vm3902 = vweird.f32 %v3127
        %v3903 = vadd.s32 %v3886, 3
        %v3904 = vand.u32 %v3903, 3
        %vm3905 = vcmp.lt.s32.totalorder %v3904, 2
        %vm3906 = vcmp.eq.s32.totalorder %v3904, 0
        %v3907 = vxor.u32 %v3901, 2147483648
        %v3908 = vsel %vm3906, %v3893, %v3907
        %vm3909 = vcmp.eq.s32.totalorder %v3904, 2
        %v3910 = vxor.u32 %v3893, 2147483648
        %v3911 = vsel %vm3909, %v3910, %v3901
        %v3912 = vsel %vm3905, %v3908, %v3911
        %v3913 = vsel %vm3902, nan, %v3912
        %v3914 = vand.u32 2147483647, %v3128
        %vm3915 = vcmp.le.f32.partialorder %v3914, 0.7853982
        %vm3916 = vcmp.lt.s32.totalorder %v3128, 0
        %v3917 = vand.u32 %v3128, 2139095040
        %v3918 = vshrl.u32 %v3917, 23
        %v3919 = vsub.s32 %v3918, 127
        %v3920 = vand.u32 2147483647, %v3128
        %v3921 = vand.u32 %v3920, 8388607
        %v3922 = vor.u32 %v3921, 8388608
        %v3923 = vsub.s32 0, %v3922
        %v3924 = vadd.s32 %v3919, 1
        %vm3925 = vcmp.gt.s32.totalorder %v3924, 0
        %v3926 = vsel %vm3925, %v3924, 0
        %v3927 = vshrl.u32 %v3926, 5
        %v3928 = vand.u32 %v3926, 31
        %v3929 = vsub.s32 32, %v3928
        %v3930 = vshrl.u32 683565275, %v3929
        %v3931 = vshll.u32 683565275, %v3928
        %v3932 = vshrl.u32 2475754826, %v3929
        %v3933 = vor.u32 %v3931, %v3932
        %v3934 = vshll.u32 2475754826, %v3928
        %v3935 = vshrl.u32 2131351028, %v3929
        %v3936 = vor.u32 %v3934, %v3935
        %v3937 = vshll.u32 2131351028, %v3928
        %v3938 = vshrl.u32 2102212464, %v3929
        %v3939 = vor.u32 %v3937, %v3938
        %v3940 = vshll.u32 2102212464, %v3928
        %v3941 = vshrl.u32 920167782, %v3929
        %v3942 = vor.u32 %v3940, %v3941
        %v3943 = vshll.u32 920167782, %v3928
        %v3944 = vshrl.u32 1326507024, %v3929
        %v3945 = vor.u32 %v3943, %v3944
        %vm3946 = vcmp.lt.s32.totalorder %v3927, 1
        %vm3947 = vcmp.lt.s32.totalorder %v3927, 2
        %vm3948 = vcmp.lt.s32.totalorder %v3927, 3
        %vm3949 = vcmp.lt.s32.totalorder %v3927, 4
        %v3950 = vsel %vm3946, %v3930, %v3933
        %v3951 = vsel %vm3949, %v3939, 2102212464
        %v3952 = vsel %vm3948, %v3936, %v3951
        %v3953 = vsel %vm3947, %v3950, %v3952
        %v3954 = vsel %vm3946, %v3933, %v3936
        %v3955 = vsel %vm3949, %v3942, 920167782
        %v3956 = vsel %vm3948, %v3939, %v3955
        %v3957 = vsel %vm3947, %v3954, %v3956
        %v3958 = vsel %vm3946, %v3936, %v3939
        %v3959 = vsel %vm3949, %v3945, 1326507024
        %v3960 = vsel %vm3948, %v3942, %v3959
        %v3961 = vsel %vm3947, %v3958, %v3960
        %v3962 = vshll.u32 %v3922, 8
        %v3963 = vand.u32 %v3962, 65535
        %v3964 = vshrl.u32 %v3962, 16
        %v3965 = vand.u32 %v3961, 65535
        %v3966 = vshrl.u32 %v3961, 16
        %v3967 = vmul.u32 %v3963, %v3965
        %v3968 = vmul.u32 %v3963, %v3966
        %v3969 = vmul.u32 %v3964, %v3965
        %v3970 = vmul.u32 %v3964, %v3966
        %v3971 = vshll.u32 %v3968, 16
        %v3972 = vshrl.u32 %v3968, 16
        %v3973 = vshll.u32 %v3969, 16
        %v3974 = vshrl.u32 %v3969, 16
        %vm3975 = vc.u32 %v3967, %v3971
        %v3976 = vsel %vm3975, 1, 0
        %v3977 = vadd.s32 %v3967, %v3971
        %v3978 = vadd.s32 %v3970, %v3976
        %vm3979 = vc.u32 %v3977, %v3973
        %v3980 = vsel %vm3979, 1, 0
        %v3981 = vadd.s32 %v3977, %v3973
        %v3982 = vadd.s32 %v3978, %v3980
        %v3983 = vadd.s32 %v3982, %v3972
        %v3984 = vadd.s32 %v3983, %v3974
        %v3985 = vand.u32 %v3962, 65535
        %v3986 = vshrl.u32 %v3962, 16
        %v3987 = vand.u32 %v3957, 65535
        %v3988 = vshrl.u32 %v3957, 16
        %v3989 = vmul.u32 %v3985, %v3987
        %v3990 = vmul.u32 %v3985, %v3988
        %v3991 = vmul.u32 %v3986, %v3987
        %v3992 = vmul.u32 %v3986, %v3988
        %v3993 = vshll.u32 %v3990, 16
        %v3994 = vshrl.u32 %v3990, 16
        %v3995 = vshll.u32 %v3991, 16
        %v3996 = vshrl.u32 %v3991, 16
        %vm3997 = vc.u32 %v3989, %v3993
        %v3998 = vsel %vm3997, 1, 0
        %v3999 = vadd.s32 %v3989, %v3993
        %v4000 = vadd.s32 %v3992, %v3998
        %vm4001 = vc.u32 %v3999, %v3995
        %v4002 = vsel %vm4001, 1, 0
        %v4003 = vadd.s32 %v3999, %v3995
        %v4004 = vadd.s32 %v4000, %v4002
        %v4005 = vadd.s32 %v4004, %v3994
        %v4006 = vadd.s32 %v4005, %v3996
        %v4007 = vmul.u32 %v3962, %v3953
        %v4008 = vadd.s32 %v3984, %v4003
        %vm4009 = vc.u32 %v3984, %v4003
        %v4010 = vadd.s32 %v4006, 1
        %v4011 = vsel %vm4009, %v4010, %v4006
        %v4012 = vadd.s32 %v4007, %v4011
        %v4013 = vadd.s32 %v4012, 536870912
        %v4014 = vshrl.u32 %v4013, 30
        %v4015 = vshll.u32 %v4014, 30
        %v4016 = vsub.s32 %v4012, %v4015
        %vm4017 = vcmp.lt.s32.totalorder %v4016, 0
        %v4018 = vsub.s32 0, %v4016
        %v4019 = vsel %vm4017, %v4018, %v4016
        %v4020 = vclz %v4019
        %v4021 = vsub.s32 %v4020, 2
        %vm4022 = vcmp.gt.s32.totalorder 0, %v4021
        %v4023 = vsel %vm4022, 0, %v4021
        %v4024 = vsub.s32 32, %v4023
        %v4025 = vshll.u32 %v4016, %v4023
        %v4026 = vshrl.u32 %v4008, %v4024
        %v4027 = vor.u32 %v4025, %v4026
        %v4028 = vsub.s32 4294967266, %v4023
        %v4029 = vadd.s32 %v4028, 127
        %v4030 = vshll.u32 %v4029, 23
        %v4031 = vor.u32 4788187, %v4030
        %v4032 = vand.u32 2147483647, %v4031
        %v4034 = vcvt.s32.f32 %v4027
        %v4035 = vmul.f32 %v4034, %v4032
        %v4036 = vxor.u32 %v4035, 2147483648
        %v4037 = vsel %vm3916, %v4036, %v4035
        %v4038 = vsub.s32 4, %v4014
        %v4039 = vsel %vm3916, %v4038, %v4014
        %v4040 = vsel %vm3915, %v3128, %v4037
        %v4041 = vsel %vm3915, 0, %v4039
        %v4042 = vmul.f32 %v4040, %v4040
        %v4043 = vmul.f32 %v4042, -0.001358992
        %v4044 = vadd.f32 %v4043, 0.041655596
        %v4045 = vmul.f32 %v4042, %v4044
        %v4046 = vadd.f32 %v4045, -0.4999988
        %v4047 = vmul.f32 %v4042, %v4046
        %v4048 = vadd.f32 1.0, %v4047
        %v4049 = vmul.f32 %v4040, %v4040
        %v4050 = vmul.f32 %v4049, -0.00019511016
        %v4051 = vadd.f32 %v4050, 0.008332121
        %v4052 = vmul.f32 %v4049, %v4051
        %v4053 = vadd.f32 %v4052, -0.16666654
        %v4054 = vmul.f32 %v4049, %v4053
        %v4055 = vadd.f32 %v4054, 1.0
        %v4056 = vmul.f32 %v4055, %v4040
        %vm4057 = vweird.f32 %v3128
        %v4058 = vadd.s32 %v4041, 3
        %v4059 = vand.u32 %v4058, 3
        %vm4060 = vcmp.lt.s32.totalorder %v4059, 2
        %vm4061 = vcmp.eq.s32.totalorder %v4059, 0
        %v4062 = vxor.u32 %v4056, 2147483648
        %v4063 = vsel %vm4061, %v4048, %v4062
        %vm4064 = vcmp.eq.s32.totalorder %v4059, 2
        %v4065 = vxor.u32 %v4048, 2147483648
        %v4066 = vsel %vm4064, %v4065, %v4056
        %v4067 = vsel %vm4060, %v4063, %v4066
        %v4068 = vsel %vm4057, nan, %v4067
        %v4069 = vand.u32 2147483647, %v3129
        %vm4070 = vcmp.le.f32.partialorder %v4069, 0.7853982
        %vm4071 = vcmp.lt.s32.totalorder %v3129, 0
        %v4072 = vand.u32 %v3129, 2139095040
        %v4073 = vshrl.u32 %v4072, 23
        %v4074 = vsub.s32 %v4073, 127
        %v4075 = vand.u32 2147483647, %v3129
        %v4076 = vand.u32 %v4075, 8388607
        %v4077 = vor.u32 %v4076, 8388608
        %v4078 = vsub.s32 0, %v4077
        %v4079 = vadd.s32 %v4074, 1
        %vm4080 = vcmp.gt.s32.totalorder %v4079, 0
        %v4081 = vsel %vm4080, %v4079, 0
        %v4082 = vshrl.u32 %v4081, 5
        %v4083 = vand.u32 %v4081, 31
        %v4084 = vsub.s32 32, %v4083
        %v4085 = vshrl.u32 683565275, %v4084
        %v4086 = vshll.u32 683565275, %v4083
        %v4087 = vshrl.u32 2475754826, %v4084
        %v4088 = vor.u32 %v4086, %v4087
        %v4089 = vshll.u32 2475754826, %v4083
        %v4090 = vshrl.u32 2131351028, %v4084
        %v4091 = vor.u32 %v4089, %v4090
        %v4092 = vshll.u32 2131351028, %v4083
        %v4093 = vshrl.u32 2102212464, %v4084
        %v4094 = vor.u32 %v4092, %v4093
        %v4095 = vshll.u32 2102212464, %v4083
        %v4096 = vshrl.u32 920167782, %v4084
        %v4097 = vor.u32 %v4095, %v4096
        %v4098 = vshll.u32 920167782, %v4083
        %v4099 = vshrl.u32 1326507024, %v4084
        %v4100 = vor.u32 %v4098, %v4099
        %vm4101 = vcmp.lt.s32.totalorder %v4082, 1
        %vm4102 = vcmp.lt.s32.totalorder %v4082, 2
        %vm4103 = vcmp.lt.s32.totalorder %v4082, 3
        %vm4104 = vcmp.lt.s32.totalorder %v4082, 4
        %v4105 = vsel %vm4101, %v4085, %v4088
        %v4106 = vsel %vm4104, %v4094, 2102212464
        %v4107 = vsel %vm4103, %v4091, %v4106
        %v4108 = vsel %vm4102, %v4105, %v4107
        %v4109 = vsel %vm4101, %v4088, %v4091
        %v4110 = vsel %vm4104, %v4097, 920167782
        %v4111 = vsel %vm4103, %v4094, %v4110
        %v4112 = vsel %vm4102, %v4109, %v4111
        %v4113 = vsel %vm4101, %v4091, %v4094
        %v4114 = vsel %vm4104, %v4100, 1326507024
        %v4115 = vsel %vm4103, %v4097, %v4114
        %v4116 = vsel %vm4102, %v4113, %v4115
        %v4117 = vshll.u32 %v4077, 8
        %v4118 = vand.u32 %v4117, 65535
        %v4119 = vshrl.u32 %v4117, 16
        %v4120 = vand.u32 %v4116, 65535
        %v4121 = vshrl.u32 %v4116, 16
        %v4122 = vmul.u32 %v4118, %v4120
        %v4123 = vmul.u32 %v4118, %v4121
        %v4124 = vmul.u32 %v4119, %v4120
        %v4125 = vmul.u32 %v4119, %v4121
        %v4126 = vshll.u32 %v4123, 16
        %v4127 = vshrl.u32 %v4123, 16
        %v4128 = vshll.u32 %v4124, 16
        %v4129 = vshrl.u32 %v4124, 16
        %vm4130 = vc.u32 %v4122, %v4126
        %v4131 = vsel %vm4130, 1, 0
        %v4132 = vadd.s32 %v4122, %v4126
        %v4133 = vadd.s32 %v4125, %v4131
        %vm4134 = vc.u32 %v4132, %v4128
        %v4135 = vsel %vm4134, 1, 0
        %v4136 = vadd.s32 %v4132, %v4128
        %v4137 = vadd.s32 %v4133, %v4135
        %v4138 = vadd.s32 %v4137, %v4127
        %v4139 = vadd.s32 %v4138, %v4129
        %v4140 = vand.u32 %v4117, 65535
        %v4141 = vshrl.u32 %v4117, 16
        %v4142 = vand.u32 %v4112, 65535
        %v4143 = vshrl.u32 %v4112, 16
        %v4144 = vmul.u32 %v4140, %v4142
        %v4145 = vmul.u32 %v4140, %v4143
        %v4146 = vmul.u32 %v4141, %v4142
        %v4147 = vmul.u32 %v4141, %v4143
        %v4148 = vshll.u32 %v4145, 16
        %v4149 = vshrl.u32 %v4145, 16
        %v4150 = vshll.u32 %v4146, 16
        %v4151 = vshrl.u32 %v4146, 16
        %vm4152 = vc.u32 %v4144, %v4148
        %v4153 = vsel %vm4152, 1, 0
        %v4154 = vadd.s32 %v4144, %v4148
        %v4155 = vadd.s32 %v4147, %v4153
        %vm4156 = vc.u32 %v4154, %v4150
        %v4157 = vsel %vm4156, 1, 0
        %v4158 = vadd.s32 %v4154, %v4150
        %v4159 = vadd.s32 %v4155, %v4157
        %v4160 = vadd.s32 %v4159, %v4149
        %v4161 = vadd.s32 %v4160, %v4151
        %v4162 = vmul.u32 %v4117, %v4108
        %v4163 = vadd.s32 %v4139, %v4158
        %vm4164 = vc.u32 %v4139, %v4158
        %v4165 = vadd.s32 %v4161, 1
        %v4166 = vsel %vm4164, %v4165, %v4161
        %v4167 = vadd.s32 %v4162, %v4166
        %v4168 = vadd.s32 %v4167, 536870912
        %v4169 = vshrl.u32 %v4168, 30
        %v4170 = vshll.u32 %v4169, 30
        %v4171 = vsub.s32 %v4167, %v4170
        %vm4172 = vcmp.lt.s32.totalorder %v4171, 0
        %v4173 = vsub.s32 0, %v4171
        %v4174 = vsel %vm4172, %v4173, %v4171
        %v4175 = vclz %v4174
        %v4176 = vsub.s32 %v4175, 2
        %vm4177 = vcmp.gt.s32.totalorder 0, %v4176
        %v4178 = vsel %vm4177, 0, %v4176
        %v4179 = vsub.s32 32, %v4178
        %v4180 = vshll.u32 %v4171, %v4178
        %v4181 = vshrl.u32 %v4163, %v4179
        %v4182 = vor.u32 %v4180, %v4181
        %v4183 = vsub.s32 4294967266, %v4178
        %v4184 = vadd.s32 %v4183, 127
        %v4185 = vshll.u32 %v4184, 23
        %v4186 = vor.u32 4788187, %v4185
        %v4187 = vand.u32 2147483647, %v4186
        %v4189 = vcvt.s32.f32 %v4182
        %v4190 = vmul.f32 %v4189, %v4187
        %v4191 = vxor.u32 %v4190, 2147483648
        %v4192 = vsel %vm4071, %v4191, %v4190
        %v4193 = vsub.s32 4, %v4169
        %v4194 = vsel %vm4071, %v4193, %v4169
        %v4195 = vsel %vm4070, %v3129, %v4192
        %v4196 = vsel %vm4070, 0, %v4194
        %v4197 = vmul.f32 %v4195, %v4195
        %v4198 = vmul.f32 %v4197, -0.001358992
        %v4199 = vadd.f32 %v4198, 0.041655596
        %v4200 = vmul.f32 %v4197, %v4199
        %v4201 = vadd.f32 %v4200, -0.4999988
        %v4202 = vmul.f32 %v4197, %v4201
        %v4203 = vadd.f32 1.0, %v4202
        %v4204 = vmul.f32 %v4195, %v4195
        %v4205 = vmul.f32 %v4204, -0.00019511016
        %v4206 = vadd.f32 %v4205, 0.008332121
        %v4207 = vmul.f32 %v4204, %v4206
        %v4208 = vadd.f32 %v4207, -0.16666654
        %v4209 = vmul.f32 %v4204, %v4208
        %v4210 = vadd.f32 %v4209, 1.0
        %v4211 = vmul.f32 %v4210, %v4195
        %vm4212 = vweird.f32 %v3129
        %v4213 = vadd.s32 %v4196, 3
        %v4214 = vand.u32 %v4213, 3
        %vm4215 = vcmp.lt.s32.totalorder %v4214, 2
        %vm4216 = vcmp.eq.s32.totalorder %v4214, 0
        %v4217 = vxor.u32 %v4211, 2147483648
        %v4218 = vsel %vm4216, %v4203, %v4217
        %vm4219 = vcmp.eq.s32.totalorder %v4214, 2
        %v4220 = vxor.u32 %v4203, 2147483648
        %v4221 = vsel %vm4219, %v4220, %v4211
        %v4222 = vsel %vm4215, %v4218, %v4221
        %v4223 = vsel %vm4212, nan, %v4222
        %v4224 = vand.u32 2147483647, %v3130
        %vm4225 = vcmp.le.f32.partialorder %v4224, 0.7853982
        %vm4226 = vcmp.lt.s32.totalorder %v3130, 0
        %v4227 = vand.u32 %v3130, 2139095040
        %v4228 = vshrl.u32 %v4227, 23
        %v4229 = vsub.s32 %v4228, 127
        %v4230 = vand.u32 2147483647, %v3130
        %v4231 = vand.u32 %v4230, 8388607
        %v4232 = vor.u32 %v4231, 8388608
        %v4233 = vsub.s32 0, %v4232
        %v4234 = vadd.s32 %v4229, 1
        %vm4235 = vcmp.gt.s32.totalorder %v4234, 0
        %v4236 = vsel %vm4235, %v4234, 0
        %v4237 = vshrl.u32 %v4236, 5
        %v4238 = vand.u32 %v4236, 31
        %v4239 = vsub.s32 32, %v4238
        %v4240 = vshrl.u32 683565275, %v4239
        %v4241 = vshll.u32 683565275, %v4238
        %v4242 = vshrl.u32 2475754826, %v4239
        %v4243 = vor.u32 %v4241, %v4242
        %v4244 = vshll.u32 2475754826, %v4238
        %v4245 = vshrl.u32 2131351028, %v4239
        %v4246 = vor.u32 %v4244, %v4245
        %v4247 = vshll.u32 2131351028, %v4238
        %v4248 = vshrl.u32 2102212464, %v4239
        %v4249 = vor.u32 %v4247, %v4248
        %v4250 = vshll.u32 2102212464, %v4238
        %v4251 = vshrl.u32 920167782, %v4239
        %v4252 = vor.u32 %v4250, %v4251
        %v4253 = vshll.u32 920167782, %v4238
        %v4254 = vshrl.u32 1326507024, %v4239
        %v4255 = vor.u32 %v4253, %v4254
        %vm4256 = vcmp.lt.s32.totalorder %v4237, 1
        %vm4257 = vcmp.lt.s32.totalorder %v4237, 2
        %vm4258 = vcmp.lt.s32.totalorder %v4237, 3
        %vm4259 = vcmp.lt.s32.totalorder %v4237, 4
        %v4260 = vsel %vm4256, %v4240, %v4243
        %v4261 = vsel %vm4259, %v4249, 2102212464
        %v4262 = vsel %vm4258, %v4246, %v4261
        %v4263 = vsel %vm4257, %v4260, %v4262
        %v4264 = vsel %vm4256, %v4243, %v4246
        %v4265 = vsel %vm4259, %v4252, 920167782
        %v4266 = vsel %vm4258, %v4249, %v4265
        %v4267 = vsel %vm4257, %v4264, %v4266
        %v4268 = vsel %vm4256, %v4246, %v4249
        %v4269 = vsel %vm4259, %v4255, 1326507024
        %v4270 = vsel %vm4258, %v4252, %v4269
        %v4271 = vsel %vm4257, %v4268, %v4270
        %v4272 = vshll.u32 %v4232, 8
        %v4273 = vand.u32 %v4272, 65535
        %v4274 = vshrl.u32 %v4272, 16
        %v4275 = vand.u32 %v4271, 65535
        %v4276 = vshrl.u32 %v4271, 16
        %v4277 = vmul.u32 %v4273, %v4275
        %v4278 = vmul.u32 %v4273, %v4276
        %v4279 = vmul.u32 %v4274, %v4275
        %v4280 = vmul.u32 %v4274, %v4276
        %v4281 = vshll.u32 %v4278, 16
        %v4282 = vshrl.u32 %v4278, 16
        %v4283 = vshll.u32 %v4279, 16
        %v4284 = vshrl.u32 %v4279, 16
        %vm4285 = vc.u32 %v4277, %v4281
        %v4286 = vsel %vm4285, 1, 0
        %v4287 = vadd.s32 %v4277, %v4281
        %v4288 = vadd.s32 %v4280, %v4286
        %vm4289 = vc.u32 %v4287, %v4283
        %v4290 = vsel %vm4289, 1, 0
        %v4291 = vadd.s32 %v4287, %v4283
        %v4292 = vadd.s32 %v4288, %v4290
        %v4293 = vadd.s32 %v4292, %v4282
        %v4294 = vadd.s32 %v4293, %v4284
        %v4295 = vand.u32 %v4272, 65535
        %v4296 = vshrl.u32 %v4272, 16
        %v4297 = vand.u32 %v4267, 65535
        %v4298 = vshrl.u32 %v4267, 16
        %v4299 = vmul.u32 %v4295, %v4297
        %v4300 = vmul.u32 %v4295, %v4298
        %v4301 = vmul.u32 %v4296, %v4297
        %v4302 = vmul.u32 %v4296, %v4298
        %v4303 = vshll.u32 %v4300, 16
        %v4304 = vshrl.u32 %v4300, 16
        %v4305 = vshll.u32 %v4301, 16
        %v4306 = vshrl.u32 %v4301, 16
        %vm4307 = vc.u32 %v4299, %v4303
        %v4308 = vsel %vm4307, 1, 0
        %v4309 = vadd.s32 %v4299, %v4303
        %v4310 = vadd.s32 %v4302, %v4308
        %vm4311 = vc.u32 %v4309, %v4305
        %v4312 = vsel %vm4311, 1, 0
        %v4313 = vadd.s32 %v4309, %v4305
        %v4314 = vadd.s32 %v4310, %v4312
        %v4315 = vadd.s32 %v4314, %v4304
        %v4316 = vadd.s32 %v4315, %v4306
        %v4317 = vmul.u32 %v4272, %v4263
        %v4318 = vadd.s32 %v4294, %v4313
        %vm4319 = vc.u32 %v4294, %v4313
        %v4320 = vadd.s32 %v4316, 1
        %v4321 = vsel %vm4319, %v4320, %v4316
        %v4322 = vadd.s32 %v4317, %v4321
        %v4323 = vadd.s32 %v4322, 536870912
        %v4324 = vshrl.u32 %v4323, 30
        %v4325 = vshll.u32 %v4324, 30
        %v4326 = vsub.s32 %v4322, %v4325
        %vm4327 = vcmp.lt.s32.totalorder %v4326, 0
        %v4328 = vsub.s32 0, %v4326
        %v4329 = vsel %vm4327, %v4328, %v4326
        %v4330 = vclz %v4329
        %v4331 = vsub.s32 %v4330, 2
        %vm4332 = vcmp.gt.s32.totalorder 0, %v4331
        %v4333 = vsel %vm4332, 0, %v4331
        %v4334 = vsub.s32 32, %v4333
        %v4335 = vshll.u32 %v4326, %v4333
        %v4336 = vshrl.u32 %v4318, %v4334
        %v4337 = vor.u32 %v4335, %v4336
        %v4338 = vsub.s32 4294967266, %v4333
        %v4339 = vadd.s32 %v4338, 127
        %v4340 = vshll.u32 %v4339, 23
        %v4341 = vor.u32 4788187, %v4340
        %v4342 = vand.u32 2147483647, %v4341
        %v4344 = vcvt.s32.f32 %v4337
        %v4345 = vmul.f32 %v4344, %v4342
        %v4346 = vxor.u32 %v4345, 2147483648
        %v4347 = vsel %vm4226, %v4346, %v4345
        %v4348 = vsub.s32 4, %v4324
        %v4349 = vsel %vm4226, %v4348, %v4324
        %v4350 = vsel %vm4225, %v3130, %v4347
        %v4351 = vsel %vm4225, 0, %v4349
        %v4352 = vmul.f32 %v4350, %v4350
        %v4353 = vmul.f32 %v4352, -0.001358992
        %v4354 = vadd.f32 %v4353, 0.041655596
        %v4355 = vmul.f32 %v4352, %v4354
        %v4356 = vadd.f32 %v4355, -0.4999988
        %v4357 = vmul.f32 %v4352, %v4356
        %v4358 = vadd.f32 1.0, %v4357
        %v4359 = vmul.f32 %v4350, %v4350
        %v4360 = vmul.f32 %v4359, -0.00019511016
        %v4361 = vadd.f32 %v4360, 0.008332121
        %v4362 = vmul.f32 %v4359, %v4361
        %v4363 = vadd.f32 %v4362, -0.16666654
        %v4364 = vmul.f32 %v4359, %v4363
        %v4365 = vadd.f32 %v4364, 1.0
        %v4366 = vmul.f32 %v4365, %v4350
        %vm4367 = vweird.f32 %v3130
        %v4368 = vadd.s32 %v4351, 3
        %v4369 = vand.u32 %v4368, 3
        %vm4370 = vcmp.lt.s32.totalorder %v4369, 2
        %vm4371 = vcmp.eq.s32.totalorder %v4369, 0
        %v4372 = vxor.u32 %v4366, 2147483648
        %v4373 = vsel %vm4371, %v4358, %v4372
        %vm4374 = vcmp.eq.s32.totalorder %v4369, 2
        %v4375 = vxor.u32 %v4358, 2147483648
        %v4376 = vsel %vm4374, %v4375, %v4366
        %v4377 = vsel %vm4370, %v4373, %v4376
        %v4378 = vsel %vm4367, nan, %v4377
        %v4379 = vand.u32 2147483647, %v3131
        %vm4380 = vcmp.le.f32.partialorder %v4379, 0.7853982
        %vm4381 = vcmp.lt.s32.totalorder %v3131, 0
        %v4382 = vand.u32 %v3131, 2139095040
        %v4383 = vshrl.u32 %v4382, 23
        %v4384 = vsub.s32 %v4383, 127
        %v4385 = vand.u32 2147483647, %v3131
        %v4386 = vand.u32 %v4385, 8388607
        %v4387 = vor.u32 %v4386, 8388608
        %v4388 = vsub.s32 0, %v4387
        %v4389 = vadd.s32 %v4384, 1
        %vm4390 = vcmp.gt.s32.totalorder %v4389, 0
        %v4391 = vsel %vm4390, %v4389, 0
        %v4392 = vshrl.u32 %v4391, 5
        %v4393 = vand.u32 %v4391, 31
        %v4394 = vsub.s32 32, %v4393
        %v4395 = vshrl.u32 683565275, %v4394
        %v4396 = vshll.u32 683565275, %v4393
        %v4397 = vshrl.u32 2475754826, %v4394
        %v4398 = vor.u32 %v4396, %v4397
        %v4399 = vshll.u32 2475754826, %v4393
        %v4400 = vshrl.u32 2131351028, %v4394
        %v4401 = vor.u32 %v4399, %v4400
        %v4402 = vshll.u32 2131351028, %v4393
        %v4403 = vshrl.u32 2102212464, %v4394
        %v4404 = vor.u32 %v4402, %v4403
        %v4405 = vshll.u32 2102212464, %v4393
        %v4406 = vshrl.u32 920167782, %v4394
        %v4407 = vor.u32 %v4405, %v4406
        %v4408 = vshll.u32 920167782, %v4393
        %v4409 = vshrl.u32 1326507024, %v4394
        %v4410 = vor.u32 %v4408, %v4409
        %vm4411 = vcmp.lt.s32.totalorder %v4392, 1
        %vm4412 = vcmp.lt.s32.totalorder %v4392, 2
        %vm4413 = vcmp.lt.s32.totalorder %v4392, 3
        %vm4414 = vcmp.lt.s32.totalorder %v4392, 4
        %v4415 = vsel %vm4411, %v4395, %v4398
        %v4416 = vsel %vm4414, %v4404, 2102212464
        %v4417 = vsel %vm4413, %v4401, %v4416
        %v4418 = vsel %vm4412, %v4415, %v4417
        %v4419 = vsel %vm4411, %v4398, %v4401
        %v4420 = vsel %vm4414, %v4407, 920167782
        %v4421 = vsel %vm4413, %v4404, %v4420
        %v4422 = vsel %vm4412, %v4419, %v4421
        %v4423 = vsel %vm4411, %v4401, %v4404
        %v4424 = vsel %vm4414, %v4410, 1326507024
        %v4425 = vsel %vm4413, %v4407, %v4424
        %v4426 = vsel %vm4412, %v4423, %v4425
        %v4427 = vshll.u32 %v4387, 8
        %v4428 = vand.u32 %v4427, 65535
        %v4429 = vshrl.u32 %v4427, 16
        %v4430 = vand.u32 %v4426, 65535
        %v4431 = vshrl.u32 %v4426, 16
        %v4432 = vmul.u32 %v4428, %v4430
        %v4433 = vmul.u32 %v4428, %v4431
        %v4434 = vmul.u32 %v4429, %v4430
        %v4435 = vmul.u32 %v4429, %v4431
        %v4436 = vshll.u32 %v4433, 16
        %v4437 = vshrl.u32 %v4433, 16
        %v4438 = vshll.u32 %v4434, 16
        %v4439 = vshrl.u32 %v4434, 16
        %vm4440 = vc.u32 %v4432, %v4436
        %v4441 = vsel %vm4440, 1, 0
        %v4442 = vadd.s32 %v4432, %v4436
        %v4443 = vadd.s32 %v4435, %v4441
        %vm4444 = vc.u32 %v4442, %v4438
        %v4445 = vsel %vm4444, 1, 0
        %v4446 = vadd.s32 %v4442, %v4438
        %v4447 = vadd.s32 %v4443, %v4445
        %v4448 = vadd.s32 %v4447, %v4437
        %v4449 = vadd.s32 %v4448, %v4439
        %v4450 = vand.u32 %v4427, 65535
        %v4451 = vshrl.u32 %v4427, 16
        %v4452 = vand.u32 %v4422, 65535
        %v4453 = vshrl.u32 %v4422, 16
        %v4454 = vmul.u32 %v4450, %v4452
        %v4455 = vmul.u32 %v4450, %v4453
        %v4456 = vmul.u32 %v4451, %v4452
        %v4457 = vmul.u32 %v4451, %v4453
        %v4458 = vshll.u32 %v4455, 16
        %v4459 = vshrl.u32 %v4455, 16
        %v4460 = vshll.u32 %v4456, 16
        %v4461 = vshrl.u32 %v4456, 16
        %vm4462 = vc.u32 %v4454, %v4458
        %v4463 = vsel %vm4462, 1, 0
        %v4464 = vadd.s32 %v4454, %v4458
        %v4465 = vadd.s32 %v4457, %v4463
        %vm4466 = vc.u32 %v4464, %v4460
        %v4467 = vsel %vm4466, 1, 0
        %v4468 = vadd.s32 %v4464, %v4460
        %v4469 = vadd.s32 %v4465, %v4467
        %v4470 = vadd.s32 %v4469, %v4459
        %v4471 = vadd.s32 %v4470, %v4461
        %v4472 = vmul.u32 %v4427, %v4418
        %v4473 = vadd.s32 %v4449, %v4468
        %vm4474 = vc.u32 %v4449, %v4468
        %v4475 = vadd.s32 %v4471, 1
        %v4476 = vsel %vm4474, %v4475, %v4471
        %v4477 = vadd.s32 %v4472, %v4476
        %v4478 = vadd.s32 %v4477, 536870912
        %v4479 = vshrl.u32 %v4478, 30
        %v4480 = vshll.u32 %v4479, 30
        %v4481 = vsub.s32 %v4477, %v4480
        %vm4482 = vcmp.lt.s32.totalorder %v4481, 0
        %v4483 = vsub.s32 0, %v4481
        %v4484 = vsel %vm4482, %v4483, %v4481
        %v4485 = vclz %v4484
        %v4486 = vsub.s32 %v4485, 2
        %vm4487 = vcmp.gt.s32.totalorder 0, %v4486
        %v4488 = vsel %vm4487, 0, %v4486
        %v4489 = vsub.s32 32, %v4488
        %v4490 = vshll.u32 %v4481, %v4488
        %v4491 = vshrl.u32 %v4473, %v4489
        %v4492 = vor.u32 %v4490, %v4491
        %v4493 = vsub.s32 4294967266, %v4488
        %v4494 = vadd.s32 %v4493, 127
        %v4495 = vshll.u32 %v4494, 23
        %v4496 = vor.u32 4788187, %v4495
        %v4497 = vand.u32 2147483647, %v4496
        %v4499 = vcvt.s32.f32 %v4492
        %v4500 = vmul.f32 %v4499, %v4497
        %v4501 = vxor.u32 %v4500, 2147483648
        %v4502 = vsel %vm4381, %v4501, %v4500
        %v4503 = vsub.s32 4, %v4479
        %v4504 = vsel %vm4381, %v4503, %v4479
        %v4505 = vsel %vm4380, %v3131, %v4502
        %v4506 = vsel %vm4380, 0, %v4504
        %v4507 = vmul.f32 %v4505, %v4505
        %v4508 = vmul.f32 %v4507, -0.001358992
        %v4509 = vadd.f32 %v4508, 0.041655596
        %v4510 = vmul.f32 %v4507, %v4509
        %v4511 = vadd.f32 %v4510, -0.4999988
        %v4512 = vmul.f32 %v4507, %v4511
        %v4513 = vadd.f32 1.0, %v4512
        %v4514 = vmul.f32 %v4505, %v4505
        %v4515 = vmul.f32 %v4514, -0.00019511016
        %v4516 = vadd.f32 %v4515, 0.008332121
        %v4517 = vmul.f32 %v4514, %v4516
        %v4518 = vadd.f32 %v4517, -0.16666654
        %v4519 = vmul.f32 %v4514, %v4518
        %v4520 = vadd.f32 %v4519, 1.0
        %v4521 = vmul.f32 %v4520, %v4505
        %vm4522 = vweird.f32 %v3131
        %v4523 = vadd.s32 %v4506, 3
        %v4524 = vand.u32 %v4523, 3
        %vm4525 = vcmp.lt.s32.totalorder %v4524, 2
        %vm4526 = vcmp.eq.s32.totalorder %v4524, 0
        %v4527 = vxor.u32 %v4521, 2147483648
        %v4528 = vsel %vm4526, %v4513, %v4527
        %vm4529 = vcmp.eq.s32.totalorder %v4524, 2
        %v4530 = vxor.u32 %v4513, 2147483648
        %v4531 = vsel %vm4529, %v4530, %v4521
        %v4532 = vsel %vm4525, %v4528, %v4531
        %v4533 = vsel %vm4522, nan, %v4532
        %v4534 = vand.u32 2147483647, %v3132
        %vm4535 = vcmp.le.f32.partialorder %v4534, 0.7853982
        %vm4536 = vcmp.lt.s32.totalorder %v3132, 0
        %v4537 = vand.u32 %v3132, 2139095040
        %v4538 = vshrl.u32 %v4537, 23
        %v4539 = vsub.s32 %v4538, 127
        %v4540 = vand.u32 2147483647, %v3132
        %v4541 = vand.u32 %v4540, 8388607
        %v4542 = vor.u32 %v4541, 8388608
        %v4543 = vsub.s32 0, %v4542
        %v4544 = vadd.s32 %v4539, 1
        %vm4545 = vcmp.gt.s32.totalorder %v4544, 0
        %v4546 = vsel %vm4545, %v4544, 0
        %v4547 = vshrl.u32 %v4546, 5
        %v4548 = vand.u32 %v4546, 31
        %v4549 = vsub.s32 32, %v4548
        %v4550 = vshrl.u32 683565275, %v4549
        %v4551 = vshll.u32 683565275, %v4548
        %v4552 = vshrl.u32 2475754826, %v4549
        %v4553 = vor.u32 %v4551, %v4552
        %v4554 = vshll.u32 2475754826, %v4548
        %v4555 = vshrl.u32 2131351028, %v4549
        %v4556 = vor.u32 %v4554, %v4555
        %v4557 = vshll.u32 2131351028, %v4548
        %v4558 = vshrl.u32 2102212464, %v4549
        %v4559 = vor.u32 %v4557, %v4558
        %v4560 = vshll.u32 2102212464, %v4548
        %v4561 = vshrl.u32 920167782, %v4549
        %v4562 = vor.u32 %v4560, %v4561
        %v4563 = vshll.u32 920167782, %v4548
        %v4564 = vshrl.u32 1326507024, %v4549
        %v4565 = vor.u32 %v4563, %v4564
        %vm4566 = vcmp.lt.s32.totalorder %v4547, 1
        %vm4567 = vcmp.lt.s32.totalorder %v4547, 2
        %vm4568 = vcmp.lt.s32.totalorder %v4547, 3
        %vm4569 = vcmp.lt.s32.totalorder %v4547, 4
        %v4570 = vsel %vm4566, %v4550, %v4553
        %v4571 = vsel %vm4569, %v4559, 2102212464
        %v4572 = vsel %vm4568, %v4556, %v4571
        %v4573 = vsel %vm4567, %v4570, %v4572
        %v4574 = vsel %vm4566, %v4553, %v4556
        %v4575 = vsel %vm4569, %v4562, 920167782
        %v4576 = vsel %vm4568, %v4559, %v4575
        %v4577 = vsel %vm4567, %v4574, %v4576
        %v4578 = vsel %vm4566, %v4556, %v4559
        %v4579 = vsel %vm4569, %v4565, 1326507024
        %v4580 = vsel %vm4568, %v4562, %v4579
        %v4581 = vsel %vm4567, %v4578, %v4580
        %v4582 = vshll.u32 %v4542, 8
        %v4583 = vand.u32 %v4582, 65535
        %v4584 = vshrl.u32 %v4582, 16
        %v4585 = vand.u32 %v4581, 65535
        %v4586 = vshrl.u32 %v4581, 16
        %v4587 = vmul.u32 %v4583, %v4585
        %v4588 = vmul.u32 %v4583, %v4586
        %v4589 = vmul.u32 %v4584, %v4585
        %v4590 = vmul.u32 %v4584, %v4586
        %v4591 = vshll.u32 %v4588, 16
        %v4592 = vshrl.u32 %v4588, 16
        %v4593 = vshll.u32 %v4589, 16
        %v4594 = vshrl.u32 %v4589, 16
        %vm4595 = vc.u32 %v4587, %v4591
        %v4596 = vsel %vm4595, 1, 0
        %v4597 = vadd.s32 %v4587, %v4591
        %v4598 = vadd.s32 %v4590, %v4596
        %vm4599 = vc.u32 %v4597, %v4593
        %v4600 = vsel %vm4599, 1, 0
        %v4601 = vadd.s32 %v4597, %v4593
        %v4602 = vadd.s32 %v4598, %v4600
        %v4603 = vadd.s32 %v4602, %v4592
        %v4604 = vadd.s32 %v4603, %v4594
        %v4605 = vand.u32 %v4582, 65535
        %v4606 = vshrl.u32 %v4582, 16
        %v4607 = vand.u32 %v4577, 65535
        %v4608 = vshrl.u32 %v4577, 16
        %v4609 = vmul.u32 %v4605, %v4607
        %v4610 = vmul.u32 %v4605, %v4608
        %v4611 = vmul.u32 %v4606, %v4607
        %v4612 = vmul.u32 %v4606, %v4608
        %v4613 = vshll.u32 %v4610, 16
        %v4614 = vshrl.u32 %v4610, 16
        %v4615 = vshll.u32 %v4611, 16
        %v4616 = vshrl.u32 %v4611, 16
        %vm4617 = vc.u32 %v4609, %v4613
        %v4618 = vsel %vm4617, 1, 0
        %v4619 = vadd.s32 %v4609, %v4613
        %v4620 = vadd.s32 %v4612, %v4618
        %vm4621 = vc.u32 %v4619, %v4615
        %v4622 = vsel %vm4621, 1, 0
        %v4623 = vadd.s32 %v4619, %v4615
        %v4624 = vadd.s32 %v4620, %v4622
        %v4625 = vadd.s32 %v4624, %v4614
        %v4626 = vadd.s32 %v4625, %v4616
        %v4627 = vmul.u32 %v4582, %v4573
        %v4628 = vadd.s32 %v4604, %v4623
        %vm4629 = vc.u32 %v4604, %v4623
        %v4630 = vadd.s32 %v4626, 1
        %v4631 = vsel %vm4629, %v4630, %v4626
        %v4632 = vadd.s32 %v4627, %v4631
        %v4633 = vadd.s32 %v4632, 536870912
        %v4634 = vshrl.u32 %v4633, 30
        %v4635 = vshll.u32 %v4634, 30
        %v4636 = vsub.s32 %v4632, %v4635
        %vm4637 = vcmp.lt.s32.totalorder %v4636, 0
        %v4638 = vsub.s32 0, %v4636
        %v4639 = vsel %vm4637, %v4638, %v4636
        %v4640 = vclz %v4639
        %v4641 = vsub.s32 %v4640, 2
        %vm4642 = vcmp.gt.s32.totalorder 0, %v4641
        %v4643 = vsel %vm4642, 0, %v4641
        %v4644 = vsub.s32 32, %v4643
        %v4645 = vshll.u32 %v4636, %v4643
        %v4646 = vshrl.u32 %v4628, %v4644
        %v4647 = vor.u32 %v4645, %v4646
        %v4648 = vsub.s32 4294967266, %v4643
        %v4649 = vadd.s32 %v4648, 127
        %v4650 = vshll.u32 %v4649, 23
        %v4651 = vor.u32 4788187, %v4650
        %v4652 = vand.u32 2147483647, %v4651
        %v4654 = vcvt.s32.f32 %v4647
        %v4655 = vmul.f32 %v4654, %v4652
        %v4656 = vxor.u32 %v4655, 2147483648
        %v4657 = vsel %vm4536, %v4656, %v4655
        %v4658 = vsub.s32 4, %v4634
        %v4659 = vsel %vm4536, %v4658, %v4634
        %v4660 = vsel %vm4535, %v3132, %v4657
        %v4661 = vsel %vm4535, 0, %v4659
        %v4662 = vmul.f32 %v4660, %v4660
        %v4663 = vmul.f32 %v4662, -0.001358992
        %v4664 = vadd.f32 %v4663, 0.041655596
        %v4665 = vmul.f32 %v4662, %v4664
        %v4666 = vadd.f32 %v4665, -0.4999988
        %v4667 = vmul.f32 %v4662, %v4666
        %v4668 = vadd.f32 1.0, %v4667
        %v4669 = vmul.f32 %v4660, %v4660
        %v4670 = vmul.f32 %v4669, -0.00019511016
        %v4671 = vadd.f32 %v4670, 0.008332121
        %v4672 = vmul.f32 %v4669, %v4671
        %v4673 = vadd.f32 %v4672, -0.16666654
        %v4674 = vmul.f32 %v4669, %v4673
        %v4675 = vadd.f32 %v4674, 1.0
        %v4676 = vmul.f32 %v4675, %v4660
        %vm4677 = vweird.f32 %v3132
        %v4678 = vadd.s32 %v4661, 3
        %v4679 = vand.u32 %v4678, 3
        %vm4680 = vcmp.lt.s32.totalorder %v4679, 2
        %vm4681 = vcmp.eq.s32.totalorder %v4679, 0
        %v4682 = vxor.u32 %v4676, 2147483648
        %v4683 = vsel %vm4681, %v4668, %v4682
        %vm4684 = vcmp.eq.s32.totalorder %v4679, 2
        %v4685 = vxor.u32 %v4668, 2147483648
        %v4686 = vsel %vm4684, %v4685, %v4676
        %v4687 = vsel %vm4680, %v4683, %v4686
        %v4688 = vsel %vm4677, nan, %v4687
        %v4689 = vand.u32 2147483647, %v3133
        %vm4690 = vcmp.le.f32.partialorder %v4689, 0.7853982
        %vm4691 = vcmp.lt.s32.totalorder %v3133, 0
        %v4692 = vand.u32 %v3133, 2139095040
        %v4693 = vshrl.u32 %v4692, 23
        %v4694 = vsub.s32 %v4693, 127
        %v4695 = vand.u32 2147483647, %v3133
        %v4696 = vand.u32 %v4695, 8388607
        %v4697 = vor.u32 %v4696, 8388608
        %v4698 = vsub.s32 0, %v4697
        %v4699 = vadd.s32 %v4694, 1
        %vm4700 = vcmp.gt.s32.totalorder %v4699, 0
        %v4701 = vsel %vm4700, %v4699, 0
        %v4702 = vshrl.u32 %v4701, 5
        %v4703 = vand.u32 %v4701, 31
        %v4704 = vsub.s32 32, %v4703
        %v4705 = vshrl.u32 683565275, %v4704
        %v4706 = vshll.u32 683565275, %v4703
        %v4707 = vshrl.u32 2475754826, %v4704
        %v4708 = vor.u32 %v4706, %v4707
        %v4709 = vshll.u32 2475754826, %v4703
        %v4710 = vshrl.u32 2131351028, %v4704
        %v4711 = vor.u32 %v4709, %v4710
        %v4712 = vshll.u32 2131351028, %v4703
        %v4713 = vshrl.u32 2102212464, %v4704
        %v4714 = vor.u32 %v4712, %v4713
        %v4715 = vshll.u32 2102212464, %v4703
        %v4716 = vshrl.u32 920167782, %v4704
        %v4717 = vor.u32 %v4715, %v4716
        %v4718 = vshll.u32 920167782, %v4703
        %v4719 = vshrl.u32 1326507024, %v4704
        %v4720 = vor.u32 %v4718, %v4719
        %vm4721 = vcmp.lt.s32.totalorder %v4702, 1
        %vm4722 = vcmp.lt.s32.totalorder %v4702, 2
        %vm4723 = vcmp.lt.s32.totalorder %v4702, 3
        %vm4724 = vcmp.lt.s32.totalorder %v4702, 4
        %v4725 = vsel %vm4721, %v4705, %v4708
        %v4726 = vsel %vm4724, %v4714, 2102212464
        %v4727 = vsel %vm4723, %v4711, %v4726
        %v4728 = vsel %vm4722, %v4725, %v4727
        %v4729 = vsel %vm4721, %v4708, %v4711
        %v4730 = vsel %vm4724, %v4717, 920167782
        %v4731 = vsel %vm4723, %v4714, %v4730
        %v4732 = vsel %vm4722, %v4729, %v4731
        %v4733 = vsel %vm4721, %v4711, %v4714
        %v4734 = vsel %vm4724, %v4720, 1326507024
        %v4735 = vsel %vm4723, %v4717, %v4734
        %v4736 = vsel %vm4722, %v4733, %v4735
        %v4737 = vshll.u32 %v4697, 8
        %v4738 = vand.u32 %v4737, 65535
        %v4739 = vshrl.u32 %v4737, 16
        %v4740 = vand.u32 %v4736, 65535
        %v4741 = vshrl.u32 %v4736, 16
        %v4742 = vmul.u32 %v4738, %v4740
        %v4743 = vmul.u32 %v4738, %v4741
        %v4744 = vmul.u32 %v4739, %v4740
        %v4745 = vmul.u32 %v4739, %v4741
        %v4746 = vshll.u32 %v4743, 16
        %v4747 = vshrl.u32 %v4743, 16
        %v4748 = vshll.u32 %v4744, 16
        %v4749 = vshrl.u32 %v4744, 16
        %vm4750 = vc.u32 %v4742, %v4746
        %v4751 = vsel %vm4750, 1, 0
        %v4752 = vadd.s32 %v4742, %v4746
        %v4753 = vadd.s32 %v4745, %v4751
        %vm4754 = vc.u32 %v4752, %v4748
        %v4755 = vsel %vm4754, 1, 0
        %v4756 = vadd.s32 %v4752, %v4748
        %v4757 = vadd.s32 %v4753, %v4755
        %v4758 = vadd.s32 %v4757, %v4747
        %v4759 = vadd.s32 %v4758, %v4749
        %v4760 = vand.u32 %v4737, 65535
        %v4761 = vshrl.u32 %v4737, 16
        %v4762 = vand.u32 %v4732, 65535
        %v4763 = vshrl.u32 %v4732, 16
        %v4764 = vmul.u32 %v4760, %v4762
        %v4765 = vmul.u32 %v4760, %v4763
        %v4766 = vmul.u32 %v4761, %v4762
        %v4767 = vmul.u32 %v4761, %v4763
        %v4768 = vshll.u32 %v4765, 16
        %v4769 = vshrl.u32 %v4765, 16
        %v4770 = vshll.u32 %v4766, 16
        %v4771 = vshrl.u32 %v4766, 16
        %vm4772 = vc.u32 %v4764, %v4768
        %v4773 = vsel %vm4772, 1, 0
        %v4774 = vadd.s32 %v4764, %v4768
        %v4775 = vadd.s32 %v4767, %v4773
        %vm4776 = vc.u32 %v4774, %v4770
        %v4777 = vsel %vm4776, 1, 0
        %v4778 = vadd.s32 %v4774, %v4770
        %v4779 = vadd.s32 %v4775, %v4777
        %v4780 = vadd.s32 %v4779, %v4769
        %v4781 = vadd.s32 %v4780, %v4771
        %v4782 = vmul.u32 %v4737, %v4728
        %v4783 = vadd.s32 %v4759, %v4778
        %vm4784 = vc.u32 %v4759, %v4778
        %v4785 = vadd.s32 %v4781, 1
        %v4786 = vsel %vm4784, %v4785, %v4781
        %v4787 = vadd.s32 %v4782, %v4786
        %v4788 = vadd.s32 %v4787, 536870912
        %v4789 = vshrl.u32 %v4788, 30
        %v4790 = vshll.u32 %v4789, 30
        %v4791 = vsub.s32 %v4787, %v4790
        %vm4792 = vcmp.lt.s32.totalorder %v4791, 0
        %v4793 = vsub.s32 0, %v4791
        %v4794 = vsel %vm4792, %v4793, %v4791
        %v4795 = vclz %v4794
        %v4796 = vsub.s32 %v4795, 2
        %vm4797 = vcmp.gt.s32.totalorder 0, %v4796
        %v4798 = vsel %vm4797, 0, %v4796
        %v4799 = vsub.s32 32, %v4798
        %v4800 = vshll.u32 %v4791, %v4798
        %v4801 = vshrl.u32 %v4783, %v4799
        %v4802 = vor.u32 %v4800, %v4801
        %v4803 = vsub.s32 4294967266, %v4798
        %v4804 = vadd.s32 %v4803, 127
        %v4805 = vshll.u32 %v4804, 23
        %v4806 = vor.u32 4788187, %v4805
        %v4807 = vand.u32 2147483647, %v4806
        %v4809 = vcvt.s32.f32 %v4802
        %v4810 = vmul.f32 %v4809, %v4807
        %v4811 = vxor.u32 %v4810, 2147483648
        %v4812 = vsel %vm4691, %v4811, %v4810
        %v4813 = vsub.s32 4, %v4789
        %v4814 = vsel %vm4691, %v4813, %v4789
        %v4815 = vsel %vm4690, %v3133, %v4812
        %v4816 = vsel %vm4690, 0, %v4814
        %v4817 = vmul.f32 %v4815, %v4815
        %v4818 = vmul.f32 %v4817, -0.001358992
        %v4819 = vadd.f32 %v4818, 0.041655596
        %v4820 = vmul.f32 %v4817, %v4819
        %v4821 = vadd.f32 %v4820, -0.4999988
        %v4822 = vmul.f32 %v4817, %v4821
        %v4823 = vadd.f32 1.0, %v4822
        %v4824 = vmul.f32 %v4815, %v4815
        %v4825 = vmul.f32 %v4824, -0.00019511016
        %v4826 = vadd.f32 %v4825, 0.008332121
        %v4827 = vmul.f32 %v4824, %v4826
        %v4828 = vadd.f32 %v4827, -0.16666654
        %v4829 = vmul.f32 %v4824, %v4828
        %v4830 = vadd.f32 %v4829, 1.0
        %v4831 = vmul.f32 %v4830, %v4815
        %vm4832 = vweird.f32 %v3133
        %v4833 = vadd.s32 %v4816, 3
        %v4834 = vand.u32 %v4833, 3
        %vm4835 = vcmp.lt.s32.totalorder %v4834, 2
        %vm4836 = vcmp.eq.s32.totalorder %v4834, 0
        %v4837 = vxor.u32 %v4831, 2147483648
        %v4838 = vsel %vm4836, %v4823, %v4837
        %vm4839 = vcmp.eq.s32.totalorder %v4834, 2
        %v4840 = vxor.u32 %v4823, 2147483648
        %v4841 = vsel %vm4839, %v4840, %v4831
        %v4842 = vsel %vm4835, %v4838, %v4841
        %v4843 = vsel %vm4832, nan, %v4842
        %v4844 = vand.u32 2147483647, %v3134
        %vm4845 = vcmp.le.f32.partialorder %v4844, 0.7853982
        %vm4846 = vcmp.lt.s32.totalorder %v3134, 0
        %v4847 = vand.u32 %v3134, 2139095040
        %v4848 = vshrl.u32 %v4847, 23
        %v4849 = vsub.s32 %v4848, 127
        %v4850 = vand.u32 2147483647, %v3134
        %v4851 = vand.u32 %v4850, 8388607
        %v4852 = vor.u32 %v4851, 8388608
        %v4853 = vsub.s32 0, %v4852
        %v4854 = vadd.s32 %v4849, 1
        %vm4855 = vcmp.gt.s32.totalorder %v4854, 0
        %v4856 = vsel %vm4855, %v4854, 0
        %v4857 = vshrl.u32 %v4856, 5
        %v4858 = vand.u32 %v4856, 31
        %v4859 = vsub.s32 32, %v4858
        %v4860 = vshrl.u32 683565275, %v4859
        %v4861 = vshll.u32 683565275, %v4858
        %v4862 = vshrl.u32 2475754826, %v4859
        %v4863 = vor.u32 %v4861, %v4862
        %v4864 = vshll.u32 2475754826, %v4858
        %v4865 = vshrl.u32 2131351028, %v4859
        %v4866 = vor.u32 %v4864, %v4865
        %v4867 = vshll.u32 2131351028, %v4858
        %v4868 = vshrl.u32 2102212464, %v4859
        %v4869 = vor.u32 %v4867, %v4868
        %v4870 = vshll.u32 2102212464, %v4858
        %v4871 = vshrl.u32 920167782, %v4859
        %v4872 = vor.u32 %v4870, %v4871
        %v4873 = vshll.u32 920167782, %v4858
        %v4874 = vshrl.u32 1326507024, %v4859
        %v4875 = vor.u32 %v4873, %v4874
        %vm4876 = vcmp.lt.s32.totalorder %v4857, 1
        %vm4877 = vcmp.lt.s32.totalorder %v4857, 2
        %vm4878 = vcmp.lt.s32.totalorder %v4857, 3
        %vm4879 = vcmp.lt.s32.totalorder %v4857, 4
        %v4880 = vsel %vm4876, %v4860, %v4863
        %v4881 = vsel %vm4879, %v4869, 2102212464
        %v4882 = vsel %vm4878, %v4866, %v4881
        %v4883 = vsel %vm4877, %v4880, %v4882
        %v4884 = vsel %vm4876, %v4863, %v4866
        %v4885 = vsel %vm4879, %v4872, 920167782
        %v4886 = vsel %vm4878, %v4869, %v4885
        %v4887 = vsel %vm4877, %v4884, %v4886
        %v4888 = vsel %vm4876, %v4866, %v4869
        %v4889 = vsel %vm4879, %v4875, 1326507024
        %v4890 = vsel %vm4878, %v4872, %v4889
        %v4891 = vsel %vm4877, %v4888, %v4890
        %v4892 = vshll.u32 %v4852, 8
        %v4893 = vand.u32 %v4892, 65535
        %v4894 = vshrl.u32 %v4892, 16
        %v4895 = vand.u32 %v4891, 65535
        %v4896 = vshrl.u32 %v4891, 16
        %v4897 = vmul.u32 %v4893, %v4895
        %v4898 = vmul.u32 %v4893, %v4896
        %v4899 = vmul.u32 %v4894, %v4895
        %v4900 = vmul.u32 %v4894, %v4896
        %v4901 = vshll.u32 %v4898, 16
        %v4902 = vshrl.u32 %v4898, 16
        %v4903 = vshll.u32 %v4899, 16
        %v4904 = vshrl.u32 %v4899, 16
        %vm4905 = vc.u32 %v4897, %v4901
        %v4906 = vsel %vm4905, 1, 0
        %v4907 = vadd.s32 %v4897, %v4901
        %v4908 = vadd.s32 %v4900, %v4906
        %vm4909 = vc.u32 %v4907, %v4903
        %v4910 = vsel %vm4909, 1, 0
        %v4911 = vadd.s32 %v4907, %v4903
        %v4912 = vadd.s32 %v4908, %v4910
        %v4913 = vadd.s32 %v4912, %v4902
        %v4914 = vadd.s32 %v4913, %v4904
        %v4915 = vand.u32 %v4892, 65535
        %v4916 = vshrl.u32 %v4892, 16
        %v4917 = vand.u32 %v4887, 65535
        %v4918 = vshrl.u32 %v4887, 16
        %v4919 = vmul.u32 %v4915, %v4917
        %v4920 = vmul.u32 %v4915, %v4918
        %v4921 = vmul.u32 %v4916, %v4917
        %v4922 = vmul.u32 %v4916, %v4918
        %v4923 = vshll.u32 %v4920, 16
        %v4924 = vshrl.u32 %v4920, 16
        %v4925 = vshll.u32 %v4921, 16
        %v4926 = vshrl.u32 %v4921, 16
        %vm4927 = vc.u32 %v4919, %v4923
        %v4928 = vsel %vm4927, 1, 0
        %v4929 = vadd.s32 %v4919, %v4923
        %v4930 = vadd.s32 %v4922, %v4928
        %vm4931 = vc.u32 %v4929, %v4925
        %v4932 = vsel %vm4931, 1, 0
        %v4933 = vadd.s32 %v4929, %v4925
        %v4934 = vadd.s32 %v4930, %v4932
        %v4935 = vadd.s32 %v4934, %v4924
        %v4936 = vadd.s32 %v4935, %v4926
        %v4937 = vmul.u32 %v4892, %v4883
        %v4938 = vadd.s32 %v4914, %v4933
        %vm4939 = vc.u32 %v4914, %v4933
        %v4940 = vadd.s32 %v4936, 1
        %v4941 = vsel %vm4939, %v4940, %v4936
        %v4942 = vadd.s32 %v4937, %v4941
        %v4943 = vadd.s32 %v4942, 536870912
        %v4944 = vshrl.u32 %v4943, 30
        %v4945 = vshll.u32 %v4944, 30
        %v4946 = vsub.s32 %v4942, %v4945
        %vm4947 = vcmp.lt.s32.totalorder %v4946, 0
        %v4948 = vsub.s32 0, %v4946
        %v4949 = vsel %vm4947, %v4948, %v4946
        %v4950 = vclz %v4949
        %v4951 = vsub.s32 %v4950, 2
        %vm4952 = vcmp.gt.s32.totalorder 0, %v4951
        %v4953 = vsel %vm4952, 0, %v4951
        %v4954 = vsub.s32 32, %v4953
        %v4955 = vshll.u32 %v4946, %v4953
        %v4956 = vshrl.u32 %v4938, %v4954
        %v4957 = vor.u32 %v4955, %v4956
        %v4958 = vsub.s32 4294967266, %v4953
        %v4959 = vadd.s32 %v4958, 127
        %v4960 = vshll.u32 %v4959, 23
        %v4961 = vor.u32 4788187, %v4960
        %v4962 = vand.u32 2147483647, %v4961
        %v4964 = vcvt.s32.f32 %v4957
        %v4965 = vmul.f32 %v4964, %v4962
        %v4966 = vxor.u32 %v4965, 2147483648
        %v4967 = vsel %vm4846, %v4966, %v4965
        %v4968 = vsub.s32 4, %v4944
        %v4969 = vsel %vm4846, %v4968, %v4944
        %v4970 = vsel %vm4845, %v3134, %v4967
        %v4971 = vsel %vm4845, 0, %v4969
        %v4972 = vmul.f32 %v4970, %v4970
        %v4973 = vmul.f32 %v4972, -0.001358992
        %v4974 = vadd.f32 %v4973, 0.041655596
        %v4975 = vmul.f32 %v4972, %v4974
        %v4976 = vadd.f32 %v4975, -0.4999988
        %v4977 = vmul.f32 %v4972, %v4976
        %v4978 = vadd.f32 1.0, %v4977
        %v4979 = vmul.f32 %v4970, %v4970
        %v4980 = vmul.f32 %v4979, -0.00019511016
        %v4981 = vadd.f32 %v4980, 0.008332121
        %v4982 = vmul.f32 %v4979, %v4981
        %v4983 = vadd.f32 %v4982, -0.16666654
        %v4984 = vmul.f32 %v4979, %v4983
        %v4985 = vadd.f32 %v4984, 1.0
        %v4986 = vmul.f32 %v4985, %v4970
        %vm4987 = vweird.f32 %v3134
        %v4988 = vadd.s32 %v4971, 3
        %v4989 = vand.u32 %v4988, 3
        %vm4990 = vcmp.lt.s32.totalorder %v4989, 2
        %vm4991 = vcmp.eq.s32.totalorder %v4989, 0
        %v4992 = vxor.u32 %v4986, 2147483648
        %v4993 = vsel %vm4991, %v4978, %v4992
        %vm4994 = vcmp.eq.s32.totalorder %v4989, 2
        %v4995 = vxor.u32 %v4978, 2147483648
        %v4996 = vsel %vm4994, %v4995, %v4986
        %v4997 = vsel %vm4990, %v4993, %v4996
        %v4998 = vsel %vm4987, nan, %v4997
        %v4999 = vand.u32 2147483647, %v3135
        %vm5000 = vcmp.le.f32.partialorder %v4999, 0.7853982
        %vm5001 = vcmp.lt.s32.totalorder %v3135, 0
        %v5002 = vand.u32 %v3135, 2139095040
        %v5003 = vshrl.u32 %v5002, 23
        %v5004 = vsub.s32 %v5003, 127
        %v5005 = vand.u32 2147483647, %v3135
        %v5006 = vand.u32 %v5005, 8388607
        %v5007 = vor.u32 %v5006, 8388608
        %v5008 = vsub.s32 0, %v5007
        %v5009 = vadd.s32 %v5004, 1
        %vm5010 = vcmp.gt.s32.totalorder %v5009, 0
        %v5011 = vsel %vm5010, %v5009, 0
        %v5012 = vshrl.u32 %v5011, 5
        %v5013 = vand.u32 %v5011, 31
        %v5014 = vsub.s32 32, %v5013
        %v5015 = vshrl.u32 683565275, %v5014
        %v5016 = vshll.u32 683565275, %v5013
        %v5017 = vshrl.u32 2475754826, %v5014
        %v5018 = vor.u32 %v5016, %v5017
        %v5019 = vshll.u32 2475754826, %v5013
        %v5020 = vshrl.u32 2131351028, %v5014
        %v5021 = vor.u32 %v5019, %v5020
        %v5022 = vshll.u32 2131351028, %v5013
        %v5023 = vshrl.u32 2102212464, %v5014
        %v5024 = vor.u32 %v5022, %v5023
        %v5025 = vshll.u32 2102212464, %v5013
        %v5026 = vshrl.u32 920167782, %v5014
        %v5027 = vor.u32 %v5025, %v5026
        %v5028 = vshll.u32 920167782, %v5013
        %v5029 = vshrl.u32 1326507024, %v5014
        %v5030 = vor.u32 %v5028, %v5029
        %vm5031 = vcmp.lt.s32.totalorder %v5012, 1
        %vm5032 = vcmp.lt.s32.totalorder %v5012, 2
        %vm5033 = vcmp.lt.s32.totalorder %v5012, 3
        %vm5034 = vcmp.lt.s32.totalorder %v5012, 4
        %v5035 = vsel %vm5031, %v5015, %v5018
        %v5036 = vsel %vm5034, %v5024, 2102212464
        %v5037 = vsel %vm5033, %v5021, %v5036
        %v5038 = vsel %vm5032, %v5035, %v5037
        %v5039 = vsel %vm5031, %v5018, %v5021
        %v5040 = vsel %vm5034, %v5027, 920167782
        %v5041 = vsel %vm5033, %v5024, %v5040
        %v5042 = vsel %vm5032, %v5039, %v5041
        %v5043 = vsel %vm5031, %v5021, %v5024
        %v5044 = vsel %vm5034, %v5030, 1326507024
        %v5045 = vsel %vm5033, %v5027, %v5044
        %v5046 = vsel %vm5032, %v5043, %v5045
        %v5047 = vshll.u32 %v5007, 8
        %v5048 = vand.u32 %v5047, 65535
        %v5049 = vshrl.u32 %v5047, 16
        %v5050 = vand.u32 %v5046, 65535
        %v5051 = vshrl.u32 %v5046, 16
        %v5052 = vmul.u32 %v5048, %v5050
        %v5053 = vmul.u32 %v5048, %v5051
        %v5054 = vmul.u32 %v5049, %v5050
        %v5055 = vmul.u32 %v5049, %v5051
        %v5056 = vshll.u32 %v5053, 16
        %v5057 = vshrl.u32 %v5053, 16
        %v5058 = vshll.u32 %v5054, 16
        %v5059 = vshrl.u32 %v5054, 16
        %vm5060 = vc.u32 %v5052, %v5056
        %v5061 = vsel %vm5060, 1, 0
        %v5062 = vadd.s32 %v5052, %v5056
        %v5063 = vadd.s32 %v5055, %v5061
        %vm5064 = vc.u32 %v5062, %v5058
        %v5065 = vsel %vm5064, 1, 0
        %v5066 = vadd.s32 %v5062, %v5058
        %v5067 = vadd.s32 %v5063, %v5065
        %v5068 = vadd.s32 %v5067, %v5057
        %v5069 = vadd.s32 %v5068, %v5059
        %v5070 = vand.u32 %v5047, 65535
        %v5071 = vshrl.u32 %v5047, 16
        %v5072 = vand.u32 %v5042, 65535
        %v5073 = vshrl.u32 %v5042, 16
        %v5074 = vmul.u32 %v5070, %v5072
        %v5075 = vmul.u32 %v5070, %v5073
        %v5076 = vmul.u32 %v5071, %v5072
        %v5077 = vmul.u32 %v5071, %v5073
        %v5078 = vshll.u32 %v5075, 16
        %v5079 = vshrl.u32 %v5075, 16
        %v5080 = vshll.u32 %v5076, 16
        %v5081 = vshrl.u32 %v5076, 16
        %vm5082 = vc.u32 %v5074, %v5078
        %v5083 = vsel %vm5082, 1, 0
        %v5084 = vadd.s32 %v5074, %v5078
        %v5085 = vadd.s32 %v5077, %v5083
        %vm5086 = vc.u32 %v5084, %v5080
        %v5087 = vsel %vm5086, 1, 0
        %v5088 = vadd.s32 %v5084, %v5080
        %v5089 = vadd.s32 %v5085, %v5087
        %v5090 = vadd.s32 %v5089, %v5079
        %v5091 = vadd.s32 %v5090, %v5081
        %v5092 = vmul.u32 %v5047, %v5038
        %v5093 = vadd.s32 %v5069, %v5088
        %vm5094 = vc.u32 %v5069, %v5088
        %v5095 = vadd.s32 %v5091, 1
        %v5096 = vsel %vm5094, %v5095, %v5091
        %v5097 = vadd.s32 %v5092, %v5096
        %v5098 = vadd.s32 %v5097, 536870912
        %v5099 = vshrl.u32 %v5098, 30
        %v5100 = vshll.u32 %v5099, 30
        %v5101 = vsub.s32 %v5097, %v5100
        %vm5102 = vcmp.lt.s32.totalorder %v5101, 0
        %v5103 = vsub.s32 0, %v5101
        %v5104 = vsel %vm5102, %v5103, %v5101
        %v5105 = vclz %v5104
        %v5106 = vsub.s32 %v5105, 2
        %vm5107 = vcmp.gt.s32.totalorder 0, %v5106
        %v5108 = vsel %vm5107, 0, %v5106
        %v5109 = vsub.s32 32, %v5108
        %v5110 = vshll.u32 %v5101, %v5108
        %v5111 = vshrl.u32 %v5093, %v5109
        %v5112 = vor.u32 %v5110, %v5111
        %v5113 = vsub.s32 4294967266, %v5108
        %v5114 = vadd.s32 %v5113, 127
        %v5115 = vshll.u32 %v5114, 23
        %v5116 = vor.u32 4788187, %v5115
        %v5117 = vand.u32 2147483647, %v5116
        %v5119 = vcvt.s32.f32 %v5112
        %v5120 = vmul.f32 %v5119, %v5117
        %v5121 = vxor.u32 %v5120, 2147483648
        %v5122 = vsel %vm5001, %v5121, %v5120
        %v5123 = vsub.s32 4, %v5099
        %v5124 = vsel %vm5001, %v5123, %v5099
        %v5125 = vsel %vm5000, %v3135, %v5122
        %v5126 = vsel %vm5000, 0, %v5124
        %v5127 = vmul.f32 %v5125, %v5125
        %v5128 = vmul.f32 %v5127, -0.001358992
        %v5129 = vadd.f32 %v5128, 0.041655596
        %v5130 = vmul.f32 %v5127, %v5129
        %v5131 = vadd.f32 %v5130, -0.4999988
        %v5132 = vmul.f32 %v5127, %v5131
        %v5133 = vadd.f32 1.0, %v5132
        %v5134 = vmul.f32 %v5125, %v5125
        %v5135 = vmul.f32 %v5134, -0.00019511016
        %v5136 = vadd.f32 %v5135, 0.008332121
        %v5137 = vmul.f32 %v5134, %v5136
        %v5138 = vadd.f32 %v5137, -0.16666654
        %v5139 = vmul.f32 %v5134, %v5138
        %v5140 = vadd.f32 %v5139, 1.0
        %v5141 = vmul.f32 %v5140, %v5125
        %vm5142 = vweird.f32 %v3135
        %v5143 = vadd.s32 %v5126, 3
        %v5144 = vand.u32 %v5143, 3
        %vm5145 = vcmp.lt.s32.totalorder %v5144, 2
        %vm5146 = vcmp.eq.s32.totalorder %v5144, 0
        %v5147 = vxor.u32 %v5141, 2147483648
        %v5148 = vsel %vm5146, %v5133, %v5147
        %vm5149 = vcmp.eq.s32.totalorder %v5144, 2
        %v5150 = vxor.u32 %v5133, 2147483648
        %v5151 = vsel %vm5149, %v5150, %v5141
        %v5152 = vsel %vm5145, %v5148, %v5151
        %v5153 = vsel %vm5142, nan, %v5152
        %v5154 = vand.u32 2147483647, %v3136
        %vm5155 = vcmp.le.f32.partialorder %v5154, 0.7853982
        %vm5156 = vcmp.lt.s32.totalorder %v3136, 0
        %v5157 = vand.u32 %v3136, 2139095040
        %v5158 = vshrl.u32 %v5157, 23
        %v5159 = vsub.s32 %v5158, 127
        %v5160 = vand.u32 2147483647, %v3136
        %v5161 = vand.u32 %v5160, 8388607
        %v5162 = vor.u32 %v5161, 8388608
        %v5163 = vsub.s32 0, %v5162
        %v5164 = vadd.s32 %v5159, 1
        %vm5165 = vcmp.gt.s32.totalorder %v5164, 0
        %v5166 = vsel %vm5165, %v5164, 0
        %v5167 = vshrl.u32 %v5166, 5
        %v5168 = vand.u32 %v5166, 31
        %v5169 = vsub.s32 32, %v5168
        %v5170 = vshrl.u32 683565275, %v5169
        %v5171 = vshll.u32 683565275, %v5168
        %v5172 = vshrl.u32 2475754826, %v5169
        %v5173 = vor.u32 %v5171, %v5172
        %v5174 = vshll.u32 2475754826, %v5168
        %v5175 = vshrl.u32 2131351028, %v5169
        %v5176 = vor.u32 %v5174, %v5175
        %v5177 = vshll.u32 2131351028, %v5168
        %v5178 = vshrl.u32 2102212464, %v5169
        %v5179 = vor.u32 %v5177, %v5178
        %v5180 = vshll.u32 2102212464, %v5168
        %v5181 = vshrl.u32 920167782, %v5169
        %v5182 = vor.u32 %v5180, %v5181
        %v5183 = vshll.u32 920167782, %v5168
        %v5184 = vshrl.u32 1326507024, %v5169
        %v5185 = vor.u32 %v5183, %v5184
        %vm5186 = vcmp.lt.s32.totalorder %v5167, 1
        %vm5187 = vcmp.lt.s32.totalorder %v5167, 2
        %vm5188 = vcmp.lt.s32.totalorder %v5167, 3
        %vm5189 = vcmp.lt.s32.totalorder %v5167, 4
        %v5190 = vsel %vm5186, %v5170, %v5173
        %v5191 = vsel %vm5189, %v5179, 2102212464
        %v5192 = vsel %vm5188, %v5176, %v5191
        %v5193 = vsel %vm5187, %v5190, %v5192
        %v5194 = vsel %vm5186, %v5173, %v5176
        %v5195 = vsel %vm5189, %v5182, 920167782
        %v5196 = vsel %vm5188, %v5179, %v5195
        %v5197 = vsel %vm5187, %v5194, %v5196
        %v5198 = vsel %vm5186, %v5176, %v5179
        %v5199 = vsel %vm5189, %v5185, 1326507024
        %v5200 = vsel %vm5188, %v5182, %v5199
        %v5201 = vsel %vm5187, %v5198, %v5200
        %v5202 = vshll.u32 %v5162, 8
        %v5203 = vand.u32 %v5202, 65535
        %v5204 = vshrl.u32 %v5202, 16
        %v5205 = vand.u32 %v5201, 65535
        %v5206 = vshrl.u32 %v5201, 16
        %v5207 = vmul.u32 %v5203, %v5205
        %v5208 = vmul.u32 %v5203, %v5206
        %v5209 = vmul.u32 %v5204, %v5205
        %v5210 = vmul.u32 %v5204, %v5206
        %v5211 = vshll.u32 %v5208, 16
        %v5212 = vshrl.u32 %v5208, 16
        %v5213 = vshll.u32 %v5209, 16
        %v5214 = vshrl.u32 %v5209, 16
        %vm5215 = vc.u32 %v5207, %v5211
        %v5216 = vsel %vm5215, 1, 0
        %v5217 = vadd.s32 %v5207, %v5211
        %v5218 = vadd.s32 %v5210, %v5216
        %vm5219 = vc.u32 %v5217, %v5213
        %v5220 = vsel %vm5219, 1, 0
        %v5221 = vadd.s32 %v5217, %v5213
        %v5222 = vadd.s32 %v5218, %v5220
        %v5223 = vadd.s32 %v5222, %v5212
        %v5224 = vadd.s32 %v5223, %v5214
        %v5225 = vand.u32 %v5202, 65535
        %v5226 = vshrl.u32 %v5202, 16
        %v5227 = vand.u32 %v5197, 65535
        %v5228 = vshrl.u32 %v5197, 16
        %v5229 = vmul.u32 %v5225, %v5227
        %v5230 = vmul.u32 %v5225, %v5228
        %v5231 = vmul.u32 %v5226, %v5227
        %v5232 = vmul.u32 %v5226, %v5228
        %v5233 = vshll.u32 %v5230, 16
        %v5234 = vshrl.u32 %v5230, 16
        %v5235 = vshll.u32 %v5231, 16
        %v5236 = vshrl.u32 %v5231, 16
        %vm5237 = vc.u32 %v5229, %v5233
        %v5238 = vsel %vm5237, 1, 0
        %v5239 = vadd.s32 %v5229, %v5233
        %v5240 = vadd.s32 %v5232, %v5238
        %vm5241 = vc.u32 %v5239, %v5235
        %v5242 = vsel %vm5241, 1, 0
        %v5243 = vadd.s32 %v5239, %v5235
        %v5244 = vadd.s32 %v5240, %v5242
        %v5245 = vadd.s32 %v5244, %v5234
        %v5246 = vadd.s32 %v5245, %v5236
        %v5247 = vmul.u32 %v5202, %v5193
        %v5248 = vadd.s32 %v5224, %v5243
        %vm5249 = vc.u32 %v5224, %v5243
        %v5250 = vadd.s32 %v5246, 1
        %v5251 = vsel %vm5249, %v5250, %v5246
        %v5252 = vadd.s32 %v5247, %v5251
        %v5253 = vadd.s32 %v5252, 536870912
        %v5254 = vshrl.u32 %v5253, 30
        %v5255 = vshll.u32 %v5254, 30
        %v5256 = vsub.s32 %v5252, %v5255
        %vm5257 = vcmp.lt.s32.totalorder %v5256, 0
        %v5258 = vsub.s32 0, %v5256
        %v5259 = vsel %vm5257, %v5258, %v5256
        %v5260 = vclz %v5259
        %v5261 = vsub.s32 %v5260, 2
        %vm5262 = vcmp.gt.s32.totalorder 0, %v5261
        %v5263 = vsel %vm5262, 0, %v5261
        %v5264 = vsub.s32 32, %v5263
        %v5265 = vshll.u32 %v5256, %v5263
        %v5266 = vshrl.u32 %v5248, %v5264
        %v5267 = vor.u32 %v5265, %v5266
        %v5268 = vsub.s32 4294967266, %v5263
        %v5269 = vadd.s32 %v5268, 127
        %v5270 = vshll.u32 %v5269, 23
        %v5271 = vor.u32 4788187, %v5270
        %v5272 = vand.u32 2147483647, %v5271
        %v5274 = vcvt.s32.f32 %v5267
        %v5275 = vmul.f32 %v5274, %v5272
        %v5276 = vxor.u32 %v5275, 2147483648
        %v5277 = vsel %vm5156, %v5276, %v5275
        %v5278 = vsub.s32 4, %v5254
        %v5279 = vsel %vm5156, %v5278, %v5254
        %v5280 = vsel %vm5155, %v3136, %v5277
        %v5281 = vsel %vm5155, 0, %v5279
        %v5282 = vmul.f32 %v5280, %v5280
        %v5283 = vmul.f32 %v5282, -0.001358992
        %v5284 = vadd.f32 %v5283, 0.041655596
        %v5285 = vmul.f32 %v5282, %v5284
        %v5286 = vadd.f32 %v5285, -0.4999988
        %v5287 = vmul.f32 %v5282, %v5286
        %v5288 = vadd.f32 1.0, %v5287
        %v5289 = vmul.f32 %v5280, %v5280
        %v5290 = vmul.f32 %v5289, -0.00019511016
        %v5291 = vadd.f32 %v5290, 0.008332121
        %v5292 = vmul.f32 %v5289, %v5291
        %v5293 = vadd.f32 %v5292, -0.16666654
        %v5294 = vmul.f32 %v5289, %v5293
        %v5295 = vadd.f32 %v5294, 1.0
        %v5296 = vmul.f32 %v5295, %v5280
        %vm5297 = vweird.f32 %v3136
        %v5298 = vadd.s32 %v5281, 3
        %v5299 = vand.u32 %v5298, 3
        %vm5300 = vcmp.lt.s32.totalorder %v5299, 2
        %vm5301 = vcmp.eq.s32.totalorder %v5299, 0
        %v5302 = vxor.u32 %v5296, 2147483648
        %v5303 = vsel %vm5301, %v5288, %v5302
        %vm5304 = vcmp.eq.s32.totalorder %v5299, 2
        %v5305 = vxor.u32 %v5288, 2147483648
        %v5306 = vsel %vm5304, %v5305, %v5296
        %v5307 = vsel %vm5300, %v5303, %v5306
        %v5308 = vsel %vm5297, nan, %v5307
        %v5309 = vand.u32 2147483647, %v3137
        %vm5310 = vcmp.le.f32.partialorder %v5309, 0.7853982
        %vm5311 = vcmp.lt.s32.totalorder %v3137, 0
        %v5312 = vand.u32 %v3137, 2139095040
        %v5313 = vshrl.u32 %v5312, 23
        %v5314 = vsub.s32 %v5313, 127
        %v5315 = vand.u32 2147483647, %v3137
        %v5316 = vand.u32 %v5315, 8388607
        %v5317 = vor.u32 %v5316, 8388608
        %v5318 = vsub.s32 0, %v5317
        %v5319 = vadd.s32 %v5314, 1
        %vm5320 = vcmp.gt.s32.totalorder %v5319, 0
        %v5321 = vsel %vm5320, %v5319, 0
        %v5322 = vshrl.u32 %v5321, 5
        %v5323 = vand.u32 %v5321, 31
        %v5324 = vsub.s32 32, %v5323
        %v5325 = vshrl.u32 683565275, %v5324
        %v5326 = vshll.u32 683565275, %v5323
        %v5327 = vshrl.u32 2475754826, %v5324
        %v5328 = vor.u32 %v5326, %v5327
        %v5329 = vshll.u32 2475754826, %v5323
        %v5330 = vshrl.u32 2131351028, %v5324
        %v5331 = vor.u32 %v5329, %v5330
        %v5332 = vshll.u32 2131351028, %v5323
        %v5333 = vshrl.u32 2102212464, %v5324
        %v5334 = vor.u32 %v5332, %v5333
        %v5335 = vshll.u32 2102212464, %v5323
        %v5336 = vshrl.u32 920167782, %v5324
        %v5337 = vor.u32 %v5335, %v5336
        %v5338 = vshll.u32 920167782, %v5323
        %v5339 = vshrl.u32 1326507024, %v5324
        %v5340 = vor.u32 %v5338, %v5339
        %vm5341 = vcmp.lt.s32.totalorder %v5322, 1
        %vm5342 = vcmp.lt.s32.totalorder %v5322, 2
        %vm5343 = vcmp.lt.s32.totalorder %v5322, 3
        %vm5344 = vcmp.lt.s32.totalorder %v5322, 4
        %v5345 = vsel %vm5341, %v5325, %v5328
        %v5346 = vsel %vm5344, %v5334, 2102212464
        %v5347 = vsel %vm5343, %v5331, %v5346
        %v5348 = vsel %vm5342, %v5345, %v5347
        %v5349 = vsel %vm5341, %v5328, %v5331
        %v5350 = vsel %vm5344, %v5337, 920167782
        %v5351 = vsel %vm5343, %v5334, %v5350
        %v5352 = vsel %vm5342, %v5349, %v5351
        %v5353 = vsel %vm5341, %v5331, %v5334
        %v5354 = vsel %vm5344, %v5340, 1326507024
        %v5355 = vsel %vm5343, %v5337, %v5354
        %v5356 = vsel %vm5342, %v5353, %v5355
        %v5357 = vshll.u32 %v5317, 8
        %v5358 = vand.u32 %v5357, 65535
        %v5359 = vshrl.u32 %v5357, 16
        %v5360 = vand.u32 %v5356, 65535
        %v5361 = vshrl.u32 %v5356, 16
        %v5362 = vmul.u32 %v5358, %v5360
        %v5363 = vmul.u32 %v5358, %v5361
        %v5364 = vmul.u32 %v5359, %v5360
        %v5365 = vmul.u32 %v5359, %v5361
        %v5366 = vshll.u32 %v5363, 16
        %v5367 = vshrl.u32 %v5363, 16
        %v5368 = vshll.u32 %v5364, 16
        %v5369 = vshrl.u32 %v5364, 16
        %vm5370 = vc.u32 %v5362, %v5366
        %v5371 = vsel %vm5370, 1, 0
        %v5372 = vadd.s32 %v5362, %v5366
        %v5373 = vadd.s32 %v5365, %v5371
        %vm5374 = vc.u32 %v5372, %v5368
        %v5375 = vsel %vm5374, 1, 0
        %v5376 = vadd.s32 %v5372, %v5368
        %v5377 = vadd.s32 %v5373, %v5375
        %v5378 = vadd.s32 %v5377, %v5367
        %v5379 = vadd.s32 %v5378, %v5369
        %v5380 = vand.u32 %v5357, 65535
        %v5381 = vshrl.u32 %v5357, 16
        %v5382 = vand.u32 %v5352, 65535
        %v5383 = vshrl.u32 %v5352, 16
        %v5384 = vmul.u32 %v5380, %v5382
        %v5385 = vmul.u32 %v5380, %v5383
        %v5386 = vmul.u32 %v5381, %v5382
        %v5387 = vmul.u32 %v5381, %v5383
        %v5388 = vshll.u32 %v5385, 16
        %v5389 = vshrl.u32 %v5385, 16
        %v5390 = vshll.u32 %v5386, 16
        %v5391 = vshrl.u32 %v5386, 16
        %vm5392 = vc.u32 %v5384, %v5388
        %v5393 = vsel %vm5392, 1, 0
        %v5394 = vadd.s32 %v5384, %v5388
        %v5395 = vadd.s32 %v5387, %v5393
        %vm5396 = vc.u32 %v5394, %v5390
        %v5397 = vsel %vm5396, 1, 0
        %v5398 = vadd.s32 %v5394, %v5390
        %v5399 = vadd.s32 %v5395, %v5397
        %v5400 = vadd.s32 %v5399, %v5389
        %v5401 = vadd.s32 %v5400, %v5391
        %v5402 = vmul.u32 %v5357, %v5348
        %v5403 = vadd.s32 %v5379, %v5398
        %vm5404 = vc.u32 %v5379, %v5398
        %v5405 = vadd.s32 %v5401, 1
        %v5406 = vsel %vm5404, %v5405, %v5401
        %v5407 = vadd.s32 %v5402, %v5406
        %v5408 = vadd.s32 %v5407, 536870912
        %v5409 = vshrl.u32 %v5408, 30
        %v5410 = vshll.u32 %v5409, 30
        %v5411 = vsub.s32 %v5407, %v5410
        %vm5412 = vcmp.lt.s32.totalorder %v5411, 0
        %v5413 = vsub.s32 0, %v5411
        %v5414 = vsel %vm5412, %v5413, %v5411
        %v5415 = vclz %v5414
        %v5416 = vsub.s32 %v5415, 2
        %vm5417 = vcmp.gt.s32.totalorder 0, %v5416
        %v5418 = vsel %vm5417, 0, %v5416
        %v5419 = vsub.s32 32, %v5418
        %v5420 = vshll.u32 %v5411, %v5418
        %v5421 = vshrl.u32 %v5403, %v5419
        %v5422 = vor.u32 %v5420, %v5421
        %v5423 = vsub.s32 4294967266, %v5418
        %v5424 = vadd.s32 %v5423, 127
        %v5425 = vshll.u32 %v5424, 23
        %v5426 = vor.u32 4788187, %v5425
        %v5427 = vand.u32 2147483647, %v5426
        %v5429 = vcvt.s32.f32 %v5422
        %v5430 = vmul.f32 %v5429, %v5427
        %v5431 = vxor.u32 %v5430, 2147483648
        %v5432 = vsel %vm5311, %v5431, %v5430
        %v5433 = vsub.s32 4, %v5409
        %v5434 = vsel %vm5311, %v5433, %v5409
        %v5435 = vsel %vm5310, %v3137, %v5432
        %v5436 = vsel %vm5310, 0, %v5434
        %v5437 = vmul.f32 %v5435, %v5435
        %v5438 = vmul.f32 %v5437, -0.001358992
        %v5439 = vadd.f32 %v5438, 0.041655596
        %v5440 = vmul.f32 %v5437, %v5439
        %v5441 = vadd.f32 %v5440, -0.4999988
        %v5442 = vmul.f32 %v5437, %v5441
        %v5443 = vadd.f32 1.0, %v5442
        %v5444 = vmul.f32 %v5435, %v5435
        %v5445 = vmul.f32 %v5444, -0.00019511016
        %v5446 = vadd.f32 %v5445, 0.008332121
        %v5447 = vmul.f32 %v5444, %v5446
        %v5448 = vadd.f32 %v5447, -0.16666654
        %v5449 = vmul.f32 %v5444, %v5448
        %v5450 = vadd.f32 %v5449, 1.0
        %v5451 = vmul.f32 %v5450, %v5435
        %vm5452 = vweird.f32 %v3137
        %v5453 = vadd.s32 %v5436, 3
        %v5454 = vand.u32 %v5453, 3
        %vm5455 = vcmp.lt.s32.totalorder %v5454, 2
        %vm5456 = vcmp.eq.s32.totalorder %v5454, 0
        %v5457 = vxor.u32 %v5451, 2147483648
        %v5458 = vsel %vm5456, %v5443, %v5457
        %vm5459 = vcmp.eq.s32.totalorder %v5454, 2
        %v5460 = vxor.u32 %v5443, 2147483648
        %v5461 = vsel %vm5459, %v5460, %v5451
        %v5462 = vsel %vm5455, %v5458, %v5461
        %v5463 = vsel %vm5452, nan, %v5462
        %v5464 = vand.u32 2147483647, %v3138
        %vm5465 = vcmp.le.f32.partialorder %v5464, 0.7853982
        %vm5466 = vcmp.lt.s32.totalorder %v3138, 0
        %v5467 = vand.u32 %v3138, 2139095040
        %v5468 = vshrl.u32 %v5467, 23
        %v5469 = vsub.s32 %v5468, 127
        %v5470 = vand.u32 2147483647, %v3138
        %v5471 = vand.u32 %v5470, 8388607
        %v5472 = vor.u32 %v5471, 8388608
        %v5473 = vsub.s32 0, %v5472
        %v5474 = vadd.s32 %v5469, 1
        %vm5475 = vcmp.gt.s32.totalorder %v5474, 0
        %v5476 = vsel %vm5475, %v5474, 0
        %v5477 = vshrl.u32 %v5476, 5
        %v5478 = vand.u32 %v5476, 31
        %v5479 = vsub.s32 32, %v5478
        %v5480 = vshrl.u32 683565275, %v5479
        %v5481 = vshll.u32 683565275, %v5478
        %v5482 = vshrl.u32 2475754826, %v5479
        %v5483 = vor.u32 %v5481, %v5482
        %v5484 = vshll.u32 2475754826, %v5478
        %v5485 = vshrl.u32 2131351028, %v5479
        %v5486 = vor.u32 %v5484, %v5485
        %v5487 = vshll.u32 2131351028, %v5478
        %v5488 = vshrl.u32 2102212464, %v5479
        %v5489 = vor.u32 %v5487, %v5488
        %v5490 = vshll.u32 2102212464, %v5478
        %v5491 = vshrl.u32 920167782, %v5479
        %v5492 = vor.u32 %v5490, %v5491
        %v5493 = vshll.u32 920167782, %v5478
        %v5494 = vshrl.u32 1326507024, %v5479
        %v5495 = vor.u32 %v5493, %v5494
        %vm5496 = vcmp.lt.s32.totalorder %v5477, 1
        %vm5497 = vcmp.lt.s32.totalorder %v5477, 2
        %vm5498 = vcmp.lt.s32.totalorder %v5477, 3
        %vm5499 = vcmp.lt.s32.totalorder %v5477, 4
        %v5500 = vsel %vm5496, %v5480, %v5483
        %v5501 = vsel %vm5499, %v5489, 2102212464
        %v5502 = vsel %vm5498, %v5486, %v5501
        %v5503 = vsel %vm5497, %v5500, %v5502
        %v5504 = vsel %vm5496, %v5483, %v5486
        %v5505 = vsel %vm5499, %v5492, 920167782
        %v5506 = vsel %vm5498, %v5489, %v5505
        %v5507 = vsel %vm5497, %v5504, %v5506
        %v5508 = vsel %vm5496, %v5486, %v5489
        %v5509 = vsel %vm5499, %v5495, 1326507024
        %v5510 = vsel %vm5498, %v5492, %v5509
        %v5511 = vsel %vm5497, %v5508, %v5510
        %v5512 = vshll.u32 %v5472, 8
        %v5513 = vand.u32 %v5512, 65535
        %v5514 = vshrl.u32 %v5512, 16
        %v5515 = vand.u32 %v5511, 65535
        %v5516 = vshrl.u32 %v5511, 16
        %v5517 = vmul.u32 %v5513, %v5515
        %v5518 = vmul.u32 %v5513, %v5516
        %v5519 = vmul.u32 %v5514, %v5515
        %v5520 = vmul.u32 %v5514, %v5516
        %v5521 = vshll.u32 %v5518, 16
        %v5522 = vshrl.u32 %v5518, 16
        %v5523 = vshll.u32 %v5519, 16
        %v5524 = vshrl.u32 %v5519, 16
        %vm5525 = vc.u32 %v5517, %v5521
        %v5526 = vsel %vm5525, 1, 0
        %v5527 = vadd.s32 %v5517, %v5521
        %v5528 = vadd.s32 %v5520, %v5526
        %vm5529 = vc.u32 %v5527, %v5523
        %v5530 = vsel %vm5529, 1, 0
        %v5531 = vadd.s32 %v5527, %v5523
        %v5532 = vadd.s32 %v5528, %v5530
        %v5533 = vadd.s32 %v5532, %v5522
        %v5534 = vadd.s32 %v5533, %v5524
        %v5535 = vand.u32 %v5512, 65535
        %v5536 = vshrl.u32 %v5512, 16
        %v5537 = vand.u32 %v5507, 65535
        %v5538 = vshrl.u32 %v5507, 16
        %v5539 = vmul.u32 %v5535, %v5537
        %v5540 = vmul.u32 %v5535, %v5538
        %v5541 = vmul.u32 %v5536, %v5537
        %v5542 = vmul.u32 %v5536, %v5538
        %v5543 = vshll.u32 %v5540, 16
        %v5544 = vshrl.u32 %v5540, 16
        %v5545 = vshll.u32 %v5541, 16
        %v5546 = vshrl.u32 %v5541, 16
        %vm5547 = vc.u32 %v5539, %v5543
        %v5548 = vsel %vm5547, 1, 0
        %v5549 = vadd.s32 %v5539, %v5543
        %v5550 = vadd.s32 %v5542, %v5548
        %vm5551 = vc.u32 %v5549, %v5545
        %v5552 = vsel %vm5551, 1, 0
        %v5553 = vadd.s32 %v5549, %v5545
        %v5554 = vadd.s32 %v5550, %v5552
        %v5555 = vadd.s32 %v5554, %v5544
        %v5556 = vadd.s32 %v5555, %v5546
        %v5557 = vmul.u32 %v5512, %v5503
        %v5558 = vadd.s32 %v5534, %v5553
        %vm5559 = vc.u32 %v5534, %v5553
        %v5560 = vadd.s32 %v5556, 1
        %v5561 = vsel %vm5559, %v5560, %v5556
        %v5562 = vadd.s32 %v5557, %v5561
        %v5563 = vadd.s32 %v5562, 536870912
        %v5564 = vshrl.u32 %v5563, 30
        %v5565 = vshll.u32 %v5564, 30
        %v5566 = vsub.s32 %v5562, %v5565
        %vm5567 = vcmp.lt.s32.totalorder %v5566, 0
        %v5568 = vsub.s32 0, %v5566
        %v5569 = vsel %vm5567, %v5568, %v5566
        %v5570 = vclz %v5569
        %v5571 = vsub.s32 %v5570, 2
        %vm5572 = vcmp.gt.s32.totalorder 0, %v5571
        %v5573 = vsel %vm5572, 0, %v5571
        %v5574 = vsub.s32 32, %v5573
        %v5575 = vshll.u32 %v5566, %v5573
        %v5576 = vshrl.u32 %v5558, %v5574
        %v5577 = vor.u32 %v5575, %v5576
        %v5578 = vsub.s32 4294967266, %v5573
        %v5579 = vadd.s32 %v5578, 127
        %v5580 = vshll.u32 %v5579, 23
        %v5581 = vor.u32 4788187, %v5580
        %v5582 = vand.u32 2147483647, %v5581
        %v5584 = vcvt.s32.f32 %v5577
        %v5585 = vmul.f32 %v5584, %v5582
        %v5586 = vxor.u32 %v5585, 2147483648
        %v5587 = vsel %vm5466, %v5586, %v5585
        %v5588 = vsub.s32 4, %v5564
        %v5589 = vsel %vm5466, %v5588, %v5564
        %v5590 = vsel %vm5465, %v3138, %v5587
        %v5591 = vsel %vm5465, 0, %v5589
        %v5592 = vmul.f32 %v5590, %v5590
        %v5593 = vmul.f32 %v5592, -0.001358992
        %v5594 = vadd.f32 %v5593, 0.041655596
        %v5595 = vmul.f32 %v5592, %v5594
        %v5596 = vadd.f32 %v5595, -0.4999988
        %v5597 = vmul.f32 %v5592, %v5596
        %v5598 = vadd.f32 1.0, %v5597
        %v5599 = vmul.f32 %v5590, %v5590
        %v5600 = vmul.f32 %v5599, -0.00019511016
        %v5601 = vadd.f32 %v5600, 0.008332121
        %v5602 = vmul.f32 %v5599, %v5601
        %v5603 = vadd.f32 %v5602, -0.16666654
        %v5604 = vmul.f32 %v5599, %v5603
        %v5605 = vadd.f32 %v5604, 1.0
        %v5606 = vmul.f32 %v5605, %v5590
        %vm5607 = vweird.f32 %v3138
        %v5608 = vadd.s32 %v5591, 3
        %v5609 = vand.u32 %v5608, 3
        %vm5610 = vcmp.lt.s32.totalorder %v5609, 2
        %vm5611 = vcmp.eq.s32.totalorder %v5609, 0
        %v5612 = vxor.u32 %v5606, 2147483648
        %v5613 = vsel %vm5611, %v5598, %v5612
        %vm5614 = vcmp.eq.s32.totalorder %v5609, 2
        %v5615 = vxor.u32 %v5598, 2147483648
        %v5616 = vsel %vm5614, %v5615, %v5606
        %v5617 = vsel %vm5610, %v5613, %v5616
        %v5618 = vsel %vm5607, nan, %v5617
        %5619 = vst [vmem:[%s244 + $0x80] sm:$0xff] %v3293
        %5620 = vst [vmem:[%s244 + $0x88] sm:$0xff] %v3448
        %5621 = vst [vmem:[%s244 + $0x90] sm:$0xff] %v3603
        %5622 = vst [vmem:[%s244 + $0x98] sm:$0xff] %v3758
        %5623 = vst [vmem:[%s244 + $0xa0] sm:$0xff] %v3913
        %5624 = vst [vmem:[%s244 + $0xa8] sm:$0xff] %v4068
        %5625 = vst [vmem:[%s244 + $0xb0] sm:$0xff] %v4223
        %5626 = vst [vmem:[%s244 + $0xb8] sm:$0xff] %v4378
        %5627 = vst [vmem:[%s244 + $0xc0] sm:$0xff] %v4533
        %5628 = vst [vmem:[%s244 + $0xc8] sm:$0xff] %v4688
        %5629 = vst [vmem:[%s244 + $0xd0] sm:$0xff] %v4843
        %5630 = vst [vmem:[%s244 + $0xd8] sm:$0xff] %v4998
        %5631 = vst [vmem:[%s244 + $0xe0] sm:$0xff] %v5153
        %5632 = vst [vmem:[%s244 + $0xe8] sm:$0xff] %v5308
        %5633 = vst [vmem:[%s244 + $0xf0] sm:$0xff] %v5463
        %5634 = vst [vmem:[%s244 + $0xf8] sm:$0xff] %v5618
        %s5635 = sand.u32 %s159, 1
        %s5636 = scalar_lea.sflag [#allocation3], %s5635
        %s5637 = sand.u32 %s159, 1
        %s5638 = smul.addr %s5637, 256
        %s5639 = scalar_lea.vmem [#allocation2], %s5638
        // Predicated region
        $region45: #{tpu_custom_call.1} parent=43 // pred_check
          %p5640 = pneg %p169
        $region46: #{tpu_custom_call.1} parent=43 // pred_check_branch
          %5642 = sbr.rel (%p5640) target = $region48
        $region47: #{tpu_custom_call.1} parent=43 // pred_region
          %5644 = vsyncadd %s5636, 0
          %s5645 = smul.addr %s20, 32
          %s5646 = smul.addr %s5645, 8
          %s5647 = scalar_lea.hbm %s6, %s5646
          %s5648 = sshll.u32 %s5639, 4
          %s5649 = int_to_ptr.vmem [resolvable:$true] %s5648
          %s5650 = sshll.u32 %s5647, 4
          %s5651 = int_to_ptr.hbm [resolvable:$true] %s5650
          %5656 = dma.vmem_to_hbm [thread:$0]  %s5649, 4096, %s5651, %s5636, 256, 256, 16
        $region48: #{tpu_custom_call.1} parent=43 // pred_fallthru
          _
      $region44: #{tpu_custom_call.1} parent=5 // pred_fallthru
        _
      %p5657 = scmp.le.s32.totalorder 2, %s15
      // Predicated region
      $region49: #{tpu_custom_call.1} parent=5 // pred_check
        %p5658 = pneg %p5657
      $region50: #{tpu_custom_call.1} parent=5 // pred_check_branch
        %5660 = sbr.rel (%p5658) target = $region52
      $region51: #{tpu_custom_call.1} parent=5 // pred_region
        %s5661 = ssub.s32 %s15, 2
        // Predicated region
        $region53: #{tpu_custom_call.1} parent=51 // pred_check
          %p5662 = pneg %p175
        $region54: #{tpu_custom_call.1} parent=51 // pred_check_branch
          %5664 = sbr.rel (%p5662) target = $region56
        $region55: #{tpu_custom_call.1} parent=51 // pred_region
          %s5665 = sand.u32 %s160, 1
          %s5666 = scalar_lea.sflag [#allocation3], %s5665
          %s5667 = sand.u32 %s160, 1
          %s5668 = smul.addr %s5667, 256
          %s5669 = scalar_lea.vmem [#allocation2], %s5668
          %5671 = dma.done %s5666, 4096
        $region56: #{tpu_custom_call.1} parent=51 // pred_fallthru
          _
      $region52: #{tpu_custom_call.1} parent=5 // pred_fallthru
        _
    $region6: #{tpu_custom_call.1} parent=1 // loop_footer
      %s19 = sadd.s32 1, %s15
    $region7: #{tpu_custom_call.1} parent=1 // loop_footer_branch
      %14 = sbr.rel target = $region3
    $region8: #{tpu_custom_call.1} parent=1 // loop_exit
      _
    %5672 = vsyncpa [#allocation3], 1
    %s5673 = scalar_lea.sflag [#allocation3], 1
    %5674 = vsyncpa %s5673, 1

</llo_original>
